<compile_context>
chip_gen: v5e
topology: v5e:2x2
jax: 0.10.0
libtpu: 0.0.40
codegen_flags: <defaults>
</compile_context>

<pallas_src>
import functools

import jax
import jax.numpy as jnp
from jax.experimental import pallas as pl
from jax.experimental.pallas import tpu as pltpu

_VMEM_LIMIT_BYTES = 32 * 1024 * 1024
_ROW_BUDGET = 6144  # max matmul rows per grid step (keeps VMEM tiles small)


def _round_up(n, m):
    return ((n + m - 1) // m) * m


# ----------------------------------------------------------------------------
# Pallas kernels
# ----------------------------------------------------------------------------
def _conv_s2d_kernel(zp_ref, w_ref, b_ref, o_ref, *, wz, rout):
    """3x3/stride-2 conv (+bias+ReLU) on a space-to-depth'd frame chunk.

    zp_ref: (1, 1, Rpad, K)    bf16  flattened, top/left-padded s2d rows
    w_ref : (4, K, Cout)       bf16  packed weights, one (K, Cout) per 2x2 tap
    b_ref : (1, Cout)          f32
    o_ref : (1, 1, Rout, Cout) bf16
    Output row t uses input rows t + a*wz + s for taps (a, s) in {0,1}^2.
    """
    cout = o_ref.shape[-1]
    acc = jnp.zeros((rout, cout), jnp.float32)
    for a in range(2):
        for s in range(2):
            off = a * wz + s
            acc += jnp.dot(
                zp_ref[0, 0, pl.ds(off, rout), :],
                w_ref[2 * a + s],
                preferred_element_type=jnp.float32,
            )
    y = jnp.maximum(acc + b_ref[...], 0.0)
    o_ref[0, 0, :, :] = y.astype(o_ref.dtype)


def _conv3_head_kernel(zp_ref, w_ref, b_ref, pool_ref, wfc_ref, bfc_ref, o_ref,
                       *, wz, rout):
    """conv3 (+bias+ReLU) fused with global mean pooling and the final Linear.

    zp_ref  : (1, Rpad, K) bf16
    w_ref   : (4, K, C)    bf16  (pre-scaled by 2: residual fold, dyreg==identity)
    b_ref   : (1, C)       f32
    pool_ref: (1, Rout)    f32   1/(T*Ho*Wo) at valid rows, 0 at garbage rows
    wfc_ref : (C, 10) f32 ; bfc_ref: (1, 10) f32 ; o_ref: (1, 1, 10) f32
    """
    c = w_ref.shape[-1]
    acc = jnp.zeros((rout, c), jnp.float32)
    for a in range(2):
        for s in range(2):
            off = a * wz + s
            acc += jnp.dot(
                zp_ref[0, pl.ds(off, rout), :],
                w_ref[2 * a + s],
                preferred_element_type=jnp.float32,
            )
    y = jnp.maximum(acc + b_ref[...], 0.0)                                   # (Rout, C)
    pooled = jnp.dot(pool_ref[...], y, preferred_element_type=jnp.float32)   # (1, C)
    logits = jnp.dot(pooled, wfc_ref[...],
                     preferred_element_type=jnp.float32) + bfc_ref[...]
    o_ref[0, :, :] = logits


# ----------------------------------------------------------------------------
# pallas_call wrappers
# ----------------------------------------------------------------------------
def _conv_s2d(zp, w4, bias, *, geom):
    bb, tc, rpad, k = zp.shape
    cout = w4.shape[-1]
    rout, wz = geom["Rout"], geom["Wz"]
    kern = functools.partial(_conv_s2d_kernel, wz=wz, rout=rout)
    return pl.pallas_call(
        kern,
        out_shape=jax.ShapeDtypeStruct((bb, tc, rout, cout), jnp.bfloat16),
        grid=(bb, tc),
        in_specs=[
            pl.BlockSpec((1, 1, rpad, k), lambda bi, ti: (bi, ti, 0, 0)),
            pl.BlockSpec((4, k, cout), lambda bi, ti: (0, 0, 0)),
            pl.BlockSpec((1, cout), lambda bi, ti: (0, 0)),
        ],
        out_specs=pl.BlockSpec((1, 1, rout, cout), lambda bi, ti: (bi, ti, 0, 0)),
        compiler_params=pltpu.CompilerParams(
            dimension_semantics=("parallel", "parallel"),
            vmem_limit_bytes=_VMEM_LIMIT_BYTES,
        ),
    )(zp, w4, bias)


def _conv3_head(zp, w4, bias, pool, wfc, bfc, *, wz):
    bb, rpad, k = zp.shape
    cout = w4.shape[-1]
    rout = pool.shape[1]
    nclass = wfc.shape[-1]
    kern = functools.partial(_conv3_head_kernel, wz=wz, rout=rout)
    out = pl.pallas_call(
        kern,
        out_shape=jax.ShapeDtypeStruct((bb, 1, nclass), jnp.float32),
        grid=(bb,),
        in_specs=[
            pl.BlockSpec((1, rpad, k), lambda bi: (bi, 0, 0)),
            pl.BlockSpec((4, k, cout), lambda bi: (0, 0, 0)),
            pl.BlockSpec((1, cout), lambda bi: (0, 0)),
            pl.BlockSpec((1, rout), lambda bi: (0, 0)),
            pl.BlockSpec((cout, nclass), lambda bi: (0, 0)),
            pl.BlockSpec((1, nclass), lambda bi: (0, 0)),
        ],
        out_specs=pl.BlockSpec((1, 1, nclass), lambda bi: (bi, 0, 0)),
        compiler_params=pltpu.CompilerParams(
            dimension_semantics=("parallel",),
            vmem_limit_bytes=_VMEM_LIMIT_BYTES,
        ),
    )(zp, w4, bias, pool, wfc, bfc)
    return out.reshape(bb, nclass)


# ----------------------------------------------------------------------------
# JAX glue: space-to-depth packing (1x traffic, replaces im2col) + geometry
# ----------------------------------------------------------------------------
def _pick_frames_per_block(t, rows_per_frame, row_budget=_ROW_BUDGET):
    f = 1
    for cand in range(1, t + 1):
        if t % cand == 0 and cand * rows_per_frame <= row_budget:
            f = cand
    return f


def _prep_conv_input(y, frames_per_block=None):
    """(B, T, H, W, C) frames -> (B, Tc, Rpad, 4C) bf16 padded s2d rows + geometry."""
    bb, t, h, w, c = y.shape
    ho, wo = h // 2, w // 2
    hz, wz = ho + 1, wo + 1
    rows_per_frame = hz * wz
    f = frames_per_block or _pick_frames_per_block(t, rows_per_frame)
    tc = t // f
    rout = f * rows_per_frame
    rpad = _round_up(rout + wz + 1, 8)
    # 2x2 space-to-depth: (dh, dw) -> channels, matching the packed weights.
    z = y.reshape(bb, t, ho, 2, wo, 2, c)
    z = z.transpose(0, 1, 2, 4, 3, 5, 6).reshape(bb, t, ho, wo, 4 * c)
    zp = jnp.pad(z, ((0, 0), (0, 0), (1, 0), (1, 0), (0, 0)))  # top/left pad only
    zp = zp.reshape(bb, tc, rout, 4 * c)
    zp = jnp.pad(zp, ((0, 0), (0, 0), (0, rpad - rout), (0, 0)))
    geom = dict(Ho=ho, Wo=wo, Hz=hz, Wz=wz, F=f, Tc=tc, Rout=rout, Rpad=rpad)
    return zp.astype(jnp.bfloat16), geom


def _unflatten_conv_output(y, geom):
    bb, c = y.shape[0], y.shape[-1]
    g = geom
    y = y.reshape(bb, g["Tc"] * g["F"], g["Hz"], g["Wz"], c)
    return y[:, :, : g["Ho"], : g["Wo"], :]


def _build_pool_vector(t, geom):
    g = geom
    m = jnp.zeros((t, g["Hz"], g["Wz"]), jnp.float32)
    m = m.at[:, : g["Ho"], : g["Wo"]].set(1.0 / (t * g["Ho"] * g["Wo"]))
    return m.reshape(1, t * g["Hz"] * g["Wz"])


# ----------------------------------------------------------------------------
# Parameters
# ----------------------------------------------------------------------------
def _pack_s2d_weights(w, scale=1.0):
    """Torch (Cout, Cin, 1, 3, 3) -> (4, 4*Cin, Cout) packed for the 2x2-over-s2d
    formulation of a 3x3/stride-2/pad-1 conv.  Taps outside the 3x3 stay zero."""
    cout, cin = w.shape[0], w.shape[1]
    w = w[:, :, 0]  # (Cout, Cin, 3, 3)
    packed = jnp.zeros((2, 2, 2, 2, cin, cout), jnp.float32)
    for a in range(2):
        for s in range(2):
            for dh in range(2):
                for dw in range(2):
                    kh, kw = 2 * a + dh - 1, 2 * s + dw - 1
                    if 0 <= kh < 3 and 0 <= kw < 3:
                        packed = packed.at[a, s, dh, dw].set(
                            scale * jnp.transpose(w[:, :, kh, kw]))
    return packed.reshape(4, 4 * cin, cout)


def init_params(key):
    ks = jax.random.split(key, 8)
    raw = {
        "w1": 0.1 * jax.random.normal(ks[0], (32, 3, 1, 3, 3), jnp.float32),
        "b1": 0.1 * jax.random.normal(ks[1], (32,), jnp.float32),
        "w2": 0.1 * jax.random.normal(ks[2], (32, 32, 1, 3, 3), jnp.float32),
        "b2": 0.1 * jax.random.normal(ks[3], (32,), jnp.float32),
        "w3": 0.1 * jax.random.normal(ks[4], (32, 32, 1, 3, 3), jnp.float32),
        "b3": 0.1 * jax.random.normal(ks[5], (32,), jnp.float32),
        "fc_w": 0.1 * jax.random.normal(ks[6], (10, 32), jnp.float32),
        "fc_b": 0.1 * jax.random.normal(ks[7], (10,), jnp.float32),
    }
    params = {
        "w1p": _pack_s2d_weights(raw["w1"]).astype(jnp.bfloat16),
        "b1": raw["b1"].reshape(1, -1),
        "w2p": _pack_s2d_weights(raw["w2"]).astype(jnp.bfloat16),
        "b2": raw["b2"].reshape(1, -1),
        # TODO(synk): dyreg (DynamicGraph) is external/undefined -> identity, so the
        # residual x + dx == 2*x; the factor 2 is folded into conv3's weights here.
        "w3p": _pack_s2d_weights(raw["w3"], scale=2.0).astype(jnp.bfloat16),
        "b3": raw["b3"].reshape(1, -1),
        "fc_w": raw["fc_w"].T,                 # (32, 10)
        "fc_b": raw["fc_b"].reshape(1, -1),    # (1, 10)
    }
    return params, raw


# ----------------------------------------------------------------------------
# Model forward
# ----------------------------------------------------------------------------
def conv_space_time_forward(x, params):
    """x: (B, C, T, H, W) float32 -> (B, 10) float32."""
    b, c, t, h, w = x.shape
    assert h % 8 == 0 and w % 8 == 0, "H and W must be divisible by 8"

    xf = jnp.transpose(x, (0, 2, 3, 4, 1))            # (B, T, H, W, C)

    zp1, g1 = _prep_conv_input(xf)
    y1 = _conv_s2d(zp1, params["w1p"], params["b1"], geom=g1)
    y1 = _unflatten_conv_output(y1, g1)               # (B, T, H/2, W/2, 32)

    zp2, g2 = _prep_conv_input(y1)
    y2 = _conv_s2d(zp2, params["w2p"], params["b2"], geom=g2)
    y2 = _unflatten_conv_output(y2, g2)               # (B, T, H/4, W/4, 32)

    # conv3 (+ folded residual) + global mean + fc, all in one kernel.
    zp3, g3 = _prep_conv_input(y2, frames_per_block=t)
    zp3 = zp3.reshape(b, g3["Rpad"], zp3.shape[-1])
    pool = _build_pool_vector(t, g3)
    return _conv3_head(zp3, params["w3p"], params["b3"], pool,
                       params["fc_w"], params["fc_b"], wz=g3["Wz"])


def _reference_forward(x, raw):
    """Pure-JAX f32 reference of the PyTorch forward (dyreg == identity)."""
    b, c, t, h, w = x.shape
    xf = jnp.transpose(x, (0, 2, 3, 4, 1)).reshape(b * t, h, w, c)

    def conv(inp, wt, bias):
        k = jnp.transpose(wt[:, :, 0], (2, 3, 1, 0))  # (3, 3, Cin, Cout)
        y = jax.lax.conv_general_dilated(
            inp, k, window_strides=(2, 2), padding=((1, 1), (1, 1)),
            dimension_numbers=("NHWC", "HWIO", "NHWC"))
        return jax.nn.relu(y + bias)

    h1 = conv(xf, raw["w1"], raw["b1"])
    h2 = conv(h1, raw["w2"], raw["b2"])
    h3 = conv(2.0 * h2, raw["w3"], raw["b3"])
    pooled = h3.reshape(b, t, -1, h3.shape[-1]).mean(axis=(1, 2))
    return pooled @ raw["fc_w"].T + raw["fc_b"]


if __name__ == "__main__":
    key = jax.random.PRNGKey(0)
    k_in, k_par = jax.random.split(key)

    # Small shapes consistent with the module's (B, C, T, H, W) convention.
    B, C, T, H, W = 2, 3, 4, 16, 16
    x = jax.random.normal(k_in, (B, C, T, H, W), jnp.float32)
    params, raw = init_params(k_par)

    fwd = jax.jit(conv_space_time_forward)
    out = jax.block_until_ready(fwd(x, params))

    assert out.shape == (B, 10), out.shape
    assert bool(jnp.all(jnp.isfinite(out)))

    # Numerics vs. a pure-JAX f32 reference (bf16 MXU operands -> loose tol).
    ref = _reference_forward(x, raw)
    assert float(jnp.max(jnp.abs(out - ref))) < 8e-2

    print("KERNEL_OK")
</pallas_src>

<mosaic_0001>
module attributes {stable_mosaic.version = 11 : i64} {
  func.func @_conv_s2d_kernel(%arg0: i32, %arg1: i32, %arg2: memref<1x1x336x12xbf16, #tpu.memory_space<vmem>>, %arg3: memref<4x12x32xbf16, #tpu.memory_space<vmem>>, %arg4: memref<1x32xf32, #tpu.memory_space<vmem>>, %arg5: memref<1x1x324x32xbf16, #tpu.memory_space<vmem>>) attributes {dimension_semantics = [#tpu.dimension_semantics<parallel>, #tpu.dimension_semantics<parallel>], iteration_bounds = array<i64: 2, 1>, scalar_prefetch = 0 : i64, scratch_operands = 0 : i64, tpu.core_type = #tpu.core_type<tc>, window_params = [{transform_indices = @transform_0, window_bounds = array<i64: 1, 1, 336, 12>}, {pipeline_mode = #tpu.pipeline_mode<synchronous>, transform_indices = @transform_1, window_bounds = array<i64: 4, 12, 32>}, {pipeline_mode = #tpu.pipeline_mode<synchronous>, transform_indices = @transform_2, window_bounds = array<i64: 1, 32>}, {transform_indices = @transform_3, window_bounds = array<i64: 1, 1, 324, 32>}]} {
    %cst = arith.constant 0.000000e+00 : f32
    %0 = vector.broadcast %cst : f32 to vector<324x32xf32>
    %c0 = arith.constant 0 : index
    %c0_0 = arith.constant 0 : index
    %c0_1 = arith.constant 0 : index
    %c0_2 = arith.constant 0 : index
    %1 = vector.load %arg2[%c0, %c0_0, %c0_1, %c0_2] : memref<1x1x336x12xbf16, #tpu.memory_space<vmem>>, vector<1x1x324x12xbf16>
    %2 = vector.shape_cast %1 : vector<1x1x324x12xbf16> to vector<324x12xbf16>
    %c0_3 = arith.constant 0 : index
    %c0_4 = arith.constant 0 : index
    %c0_5 = arith.constant 0 : index
    %3 = vector.load %arg3[%c0_3, %c0_4, %c0_5] : memref<4x12x32xbf16, #tpu.memory_space<vmem>>, vector<1x12x32xbf16>
    %4 = vector.shape_cast %3 : vector<1x12x32xbf16> to vector<12x32xbf16>
    %cst_6 = arith.constant dense<0.000000e+00> : vector<324x32xf32>
    %5 = tpu.matmul %2, %4, %cst_6 {dimension_numbers = #tpu.dot_dimension_numbers<[1], [0], [0], [1], [0, 0, 1, 1], [], []>} : vector<324x12xbf16>, vector<12x32xbf16>, vector<324x32xf32> -> vector<324x32xf32>
    %6 = arith.addf %0, %5 : vector<324x32xf32>
    %c0_7 = arith.constant 0 : index
    %c0_8 = arith.constant 0 : index
    %c1 = arith.constant 1 : index
    %c0_9 = arith.constant 0 : index
    %7 = vector.load %arg2[%c0_7, %c0_8, %c1, %c0_9] : memref<1x1x336x12xbf16, #tpu.memory_space<vmem>>, vector<1x1x324x12xbf16>
    %8 = vector.shape_cast %7 : vector<1x1x324x12xbf16> to vector<324x12xbf16>
    %c1_10 = arith.constant 1 : index
    %c0_11 = arith.constant 0 : index
    %c0_12 = arith.constant 0 : index
    %9 = vector.load %arg3[%c1_10, %c0_11, %c0_12] : memref<4x12x32xbf16, #tpu.memory_space<vmem>>, vector<1x12x32xbf16>
    %10 = vector.shape_cast %9 : vector<1x12x32xbf16> to vector<12x32xbf16>
    %cst_13 = arith.constant dense<0.000000e+00> : vector<324x32xf32>
    %11 = tpu.matmul %8, %10, %cst_13 {dimension_numbers = #tpu.dot_dimension_numbers<[1], [0], [0], [1], [0, 0, 1, 1], [], []>} : vector<324x12xbf16>, vector<12x32xbf16>, vector<324x32xf32> -> vector<324x32xf32>
    %12 = arith.addf %6, %11 : vector<324x32xf32>
    %c0_14 = arith.constant 0 : index
    %c0_15 = arith.constant 0 : index
    %c9 = arith.constant 9 : index
    %c0_16 = arith.constant 0 : index
    %13 = vector.load %arg2[%c0_14, %c0_15, %c9, %c0_16] : memref<1x1x336x12xbf16, #tpu.memory_space<vmem>>, vector<1x1x324x12xbf16>
    %14 = vector.shape_cast %13 : vector<1x1x324x12xbf16> to vector<324x12xbf16>
    %c2 = arith.constant 2 : index
    %c0_17 = arith.constant 0 : index
    %c0_18 = arith.constant 0 : index
    %15 = vector.load %arg3[%c2, %c0_17, %c0_18] : memref<4x12x32xbf16, #tpu.memory_space<vmem>>, vector<1x12x32xbf16>
    %16 = vector.shape_cast %15 : vector<1x12x32xbf16> to vector<12x32xbf16>
    %cst_19 = arith.constant dense<0.000000e+00> : vector<324x32xf32>
    %17 = tpu.matmul %14, %16, %cst_19 {dimension_numbers = #tpu.dot_dimension_numbers<[1], [0], [0], [1], [0, 0, 1, 1], [], []>} : vector<324x12xbf16>, vector<12x32xbf16>, vector<324x32xf32> -> vector<324x32xf32>
    %18 = arith.addf %12, %17 : vector<324x32xf32>
    %c0_20 = arith.constant 0 : index
    %c0_21 = arith.constant 0 : index
    %c10 = arith.constant 10 : index
    %c0_22 = arith.constant 0 : index
    %19 = vector.load %arg2[%c0_20, %c0_21, %c10, %c0_22] : memref<1x1x336x12xbf16, #tpu.memory_space<vmem>>, vector<1x1x324x12xbf16>
    %20 = vector.shape_cast %19 : vector<1x1x324x12xbf16> to vector<324x12xbf16>
    %c3 = arith.constant 3 : index
    %c0_23 = arith.constant 0 : index
    %c0_24 = arith.constant 0 : index
    %21 = vector.load %arg3[%c3, %c0_23, %c0_24] : memref<4x12x32xbf16, #tpu.memory_space<vmem>>, vector<1x12x32xbf16>
    %22 = vector.shape_cast %21 : vector<1x12x32xbf16> to vector<12x32xbf16>
    %cst_25 = arith.constant dense<0.000000e+00> : vector<324x32xf32>
    %23 = tpu.matmul %20, %22, %cst_25 {dimension_numbers = #tpu.dot_dimension_numbers<[1], [0], [0], [1], [0, 0, 1, 1], [], []>} : vector<324x12xbf16>, vector<12x32xbf16>, vector<324x32xf32> -> vector<324x32xf32>
    %24 = arith.addf %18, %23 : vector<324x32xf32>
    %c0_26 = arith.constant 0 : index
    %c0_27 = arith.constant 0 : index
    %25 = vector.load %arg4[%c0_26, %c0_27] : memref<1x32xf32, #tpu.memory_space<vmem>>, vector<1x32xf32>
    %26 = vector.broadcast %25 : vector<1x32xf32> to vector<324x32xf32>
    %27 = arith.addf %24, %26 : vector<324x32xf32>
    %cst_28 = arith.constant 0.000000e+00 : f32
    %28 = vector.broadcast %cst_28 : f32 to vector<324x32xf32>
    %29 = arith.maximumf %27, %28 : vector<324x32xf32>
    %30 = arith.truncf %29 : vector<324x32xf32> to vector<324x32xbf16>
    %c0_29 = arith.constant 0 : index
    %c0_30 = arith.constant 0 : index
    %c0_31 = arith.constant 0 : index
    %c0_32 = arith.constant 0 : index
    %31 = vector.load %arg5[%c0_29, %c0_30, %c0_31, %c0_32] : memref<1x1x324x32xbf16, #tpu.memory_space<vmem>>, vector<1x1x324x32xbf16>
    %32 = vector.shape_cast %31 : vector<1x1x324x32xbf16> to vector<324x32xbf16>
    %33 = vector.shape_cast %30 : vector<324x32xbf16> to vector<1x1x324x32xbf16>
    tpu.vector_store %arg5[%c0_29, %c0_30, %c0_31, %c0_32], %33 {strides = array<i32>} : memref<1x1x324x32xbf16, #tpu.memory_space<vmem>>, vector<1x1x324x32xbf16>,
    return
  }
  func.func @transform_0(%arg0: i32, %arg1: i32) -> (i32, i32, i32, i32) {
    %c0_i32 = arith.constant 0 : i32
    %c0_i32_0 = arith.constant 0 : i32
    %c0_i32_1 = arith.constant 0 : i32
    return %arg0, %arg1, %c0_i32, %c0_i32_0 : i32, i32, i32, i32
  }
  func.func @transform_1(%arg0: i32, %arg1: i32) -> (i32, i32, i32) {
    %c0_i32 = arith.constant 0 : i32
    %c0_i32_0 = arith.constant 0 : i32
    %c0_i32_1 = arith.constant 0 : i32
    %c0_i32_2 = arith.constant 0 : i32
    return %c0_i32, %c0_i32_0, %c0_i32_1 : i32, i32, i32
  }
  func.func @transform_2(%arg0: i32, %arg1: i32) -> (i32, i32) {
    %c0_i32 = arith.constant 0 : i32
    %c0_i32_0 = arith.constant 0 : i32
    %c0_i32_1 = arith.constant 0 : i32
    return %c0_i32, %c0_i32_0 : i32, i32
  }
  func.func @transform_3(%arg0: i32, %arg1: i32) -> (i32, i32, i32, i32) {
    %c0_i32 = arith.constant 0 : i32
    %c0_i32_0 = arith.constant 0 : i32
    %c0_i32_1 = arith.constant 0 : i32
    return %arg0, %arg1, %c0_i32, %c0_i32_0 : i32, i32, i32, i32
  }
}

module attributes {stable_mosaic.version = 11 : i64} {
  func.func @_conv_s2d_kernel(%arg0: i32, %arg1: i32, %arg2: memref<1x1x112x128xbf16, #tpu.memory_space<vmem>>, %arg3: memref<4x128x32xbf16, #tpu.memory_space<vmem>>, %arg4: memref<1x32xf32, #tpu.memory_space<vmem>>, %arg5: memref<1x1x100x32xbf16, #tpu.memory_space<vmem>>) attributes {dimension_semantics = [#tpu.dimension_semantics<parallel>, #tpu.dimension_semantics<parallel>], iteration_bounds = array<i64: 2, 1>, scalar_prefetch = 0 : i64, scratch_operands = 0 : i64, tpu.core_type = #tpu.core_type<tc>, window_params = [{transform_indices = @transform_0, window_bounds = array<i64: 1, 1, 112, 128>}, {pipeline_mode = #tpu.pipeline_mode<synchronous>, transform_indices = @transform_1, window_bounds = array<i64: 4, 128, 32>}, {pipeline_mode = #tpu.pipeline_mode<synchronous>, transform_indices = @transform_2, window_bounds = array<i64: 1, 32>}, {transform_indices = @transform_3, window_bounds = array<i64: 1, 1, 100, 32>}]} {
    %cst = arith.constant 0.000000e+00 : f32
    %0 = vector.broadcast %cst : f32 to vector<100x32xf32>
    %c0 = arith.constant 0 : index
    %c0_0 = arith.constant 0 : index
    %c0_1 = arith.constant 0 : index
    %c0_2 = arith.constant 0 : index
    %1 = vector.load %arg2[%c0, %c0_0, %c0_1, %c0_2] : memref<1x1x112x128xbf16, #tpu.memory_space<vmem>>, vector<1x1x100x128xbf16>
    %2 = vector.shape_cast %1 : vector<1x1x100x128xbf16> to vector<100x128xbf16>
    %c0_3 = arith.constant 0 : index
    %c0_4 = arith.constant 0 : index
    %c0_5 = arith.constant 0 : index
    %3 = vector.load %arg3[%c0_3, %c0_4, %c0_5] : memref<4x128x32xbf16, #tpu.memory_space<vmem>>, vector<1x128x32xbf16>
    %4 = vector.shape_cast %3 : vector<1x128x32xbf16> to vector<128x32xbf16>
    %cst_6 = arith.constant dense<0.000000e+00> : vector<100x32xf32>
    %5 = tpu.matmul %2, %4, %cst_6 {dimension_numbers = #tpu.dot_dimension_numbers<[1], [0], [0], [1], [0, 0, 1, 1], [], []>} : vector<100x128xbf16>, vector<128x32xbf16>, vector<100x32xf32> -> vector<100x32xf32>
    %6 = arith.addf %0, %5 : vector<100x32xf32>
    %c0_7 = arith.constant 0 : index
    %c0_8 = arith.constant 0 : index
    %c1 = arith.constant 1 : index
    %c0_9 = arith.constant 0 : index
    %7 = vector.load %arg2[%c0_7, %c0_8, %c1, %c0_9] : memref<1x1x112x128xbf16, #tpu.memory_space<vmem>>, vector<1x1x100x128xbf16>
    %8 = vector.shape_cast %7 : vector<1x1x100x128xbf16> to vector<100x128xbf16>
    %c1_10 = arith.constant 1 : index
    %c0_11 = arith.constant 0 : index
    %c0_12 = arith.constant 0 : index
    %9 = vector.load %arg3[%c1_10, %c0_11, %c0_12] : memref<4x128x32xbf16, #tpu.memory_space<vmem>>, vector<1x128x32xbf16>
    %10 = vector.shape_cast %9 : vector<1x128x32xbf16> to vector<128x32xbf16>
    %cst_13 = arith.constant dense<0.000000e+00> : vector<100x32xf32>
    %11 = tpu.matmul %8, %10, %cst_13 {dimension_numbers = #tpu.dot_dimension_numbers<[1], [0], [0], [1], [0, 0, 1, 1], [], []>} : vector<100x128xbf16>, vector<128x32xbf16>, vector<100x32xf32> -> vector<100x32xf32>
    %12 = arith.addf %6, %11 : vector<100x32xf32>
    %c0_14 = arith.constant 0 : index
    %c0_15 = arith.constant 0 : index
    %c5 = arith.constant 5 : index
    %c0_16 = arith.constant 0 : index
    %13 = vector.load %arg2[%c0_14, %c0_15, %c5, %c0_16] : memref<1x1x112x128xbf16, #tpu.memory_space<vmem>>, vector<1x1x100x128xbf16>
    %14 = vector.shape_cast %13 : vector<1x1x100x128xbf16> to vector<100x128xbf16>
    %c2 = arith.constant 2 : index
    %c0_17 = arith.constant 0 : index
    %c0_18 = arith.constant 0 : index
    %15 = vector.load %arg3[%c2, %c0_17, %c0_18] : memref<4x128x32xbf16, #tpu.memory_space<vmem>>, vector<1x128x32xbf16>
    %16 = vector.shape_cast %15 : vector<1x128x32xbf16> to vector<128x32xbf16>
    %cst_19 = arith.constant dense<0.000000e+00> : vector<100x32xf32>
    %17 = tpu.matmul %14, %16, %cst_19 {dimension_numbers = #tpu.dot_dimension_numbers<[1], [0], [0], [1], [0, 0, 1, 1], [], []>} : vector<100x128xbf16>, vector<128x32xbf16>, vector<100x32xf32> -> vector<100x32xf32>
    %18 = arith.addf %12, %17 : vector<100x32xf32>
    %c0_20 = arith.constant 0 : index
    %c0_21 = arith.constant 0 : index
    %c6 = arith.constant 6 : index
    %c0_22 = arith.constant 0 : index
    %19 = vector.load %arg2[%c0_20, %c0_21, %c6, %c0_22] : memref<1x1x112x128xbf16, #tpu.memory_space<vmem>>, vector<1x1x100x128xbf16>
    %20 = vector.shape_cast %19 : vector<1x1x100x128xbf16> to vector<100x128xbf16>
    %c3 = arith.constant 3 : index
    %c0_23 = arith.constant 0 : index
    %c0_24 = arith.constant 0 : index
    %21 = vector.load %arg3[%c3, %c0_23, %c0_24] : memref<4x128x32xbf16, #tpu.memory_space<vmem>>, vector<1x128x32xbf16>
    %22 = vector.shape_cast %21 : vector<1x128x32xbf16> to vector<128x32xbf16>
    %cst_25 = arith.constant dense<0.000000e+00> : vector<100x32xf32>
    %23 = tpu.matmul %20, %22, %cst_25 {dimension_numbers = #tpu.dot_dimension_numbers<[1], [0], [0], [1], [0, 0, 1, 1], [], []>} : vector<100x128xbf16>, vector<128x32xbf16>, vector<100x32xf32> -> vector<100x32xf32>
    %24 = arith.addf %18, %23 : vector<100x32xf32>
    %c0_26 = arith.constant 0 : index
    %c0_27 = arith.constant 0 : index
    %25 = vector.load %arg4[%c0_26, %c0_27] : memref<1x32xf32, #tpu.memory_space<vmem>>, vector<1x32xf32>
    %26 = vector.broadcast %25 : vector<1x32xf32> to vector<100x32xf32>
    %27 = arith.addf %24, %26 : vector<100x32xf32>
    %cst_28 = arith.constant 0.000000e+00 : f32
    %28 = vector.broadcast %cst_28 : f32 to vector<100x32xf32>
    %29 = arith.maximumf %27, %28 : vector<100x32xf32>
    %30 = arith.truncf %29 : vector<100x32xf32> to vector<100x32xbf16>
    %c0_29 = arith.constant 0 : index
    %c0_30 = arith.constant 0 : index
    %c0_31 = arith.constant 0 : index
    %c0_32 = arith.constant 0 : index
    %31 = vector.load %arg5[%c0_29, %c0_30, %c0_31, %c0_32] : memref<1x1x100x32xbf16, #tpu.memory_space<vmem>>, vector<1x1x100x32xbf16>
    %32 = vector.shape_cast %31 : vector<1x1x100x32xbf16> to vector<100x32xbf16>
    %33 = vector.shape_cast %30 : vector<100x32xbf16> to vector<1x1x100x32xbf16>
    tpu.vector_store %arg5[%c0_29, %c0_30, %c0_31, %c0_32], %33 {strides = array<i32>} : memref<1x1x100x32xbf16, #tpu.memory_space<vmem>>, vector<1x1x100x32xbf16>,
    return
  }
  func.func @transform_0(%arg0: i32, %arg1: i32) -> (i32, i32, i32, i32) {
    %c0_i32 = arith.constant 0 : i32
    %c0_i32_0 = arith.constant 0 : i32
    %c0_i32_1 = arith.constant 0 : i32
    return %arg0, %arg1, %c0_i32, %c0_i32_0 : i32, i32, i32, i32
  }
  func.func @transform_1(%arg0: i32, %arg1: i32) -> (i32, i32, i32) {
    %c0_i32 = arith.constant 0 : i32
    %c0_i32_0 = arith.constant 0 : i32
    %c0_i32_1 = arith.constant 0 : i32
    %c0_i32_2 = arith.constant 0 : i32
    return %c0_i32, %c0_i32_0, %c0_i32_1 : i32, i32, i32
  }
  func.func @transform_2(%arg0: i32, %arg1: i32) -> (i32, i32) {
    %c0_i32 = arith.constant 0 : i32
    %c0_i32_0 = arith.constant 0 : i32
    %c0_i32_1 = arith.constant 0 : i32
    return %c0_i32, %c0_i32_0 : i32, i32
  }
  func.func @transform_3(%arg0: i32, %arg1: i32) -> (i32, i32, i32, i32) {
    %c0_i32 = arith.constant 0 : i32
    %c0_i32_0 = arith.constant 0 : i32
    %c0_i32_1 = arith.constant 0 : i32
    return %arg0, %arg1, %c0_i32, %c0_i32_0 : i32, i32, i32, i32
  }
}

module attributes {stable_mosaic.version = 11 : i64} {
  func.func @_conv3_head_kernel(%arg0: i32, %arg1: memref<1x40x128xbf16, #tpu.memory_space<vmem>>, %arg2: memref<4x128x32xbf16, #tpu.memory_space<vmem>>, %arg3: memref<1x32xf32, #tpu.memory_space<vmem>>, %arg4: memref<1x36xf32, #tpu.memory_space<vmem>>, %arg5: memref<32x10xf32, #tpu.memory_space<vmem>>, %arg6: memref<1x10xf32, #tpu.memory_space<vmem>>, %arg7: memref<1x1x10xf32, #tpu.memory_space<vmem>>) attributes {dimension_semantics = [#tpu.dimension_semantics<parallel>], iteration_bounds = array<i64: 2>, scalar_prefetch = 0 : i64, scratch_operands = 0 : i64, tpu.core_type = #tpu.core_type<tc>, window_params = [{transform_indices = @transform_0, window_bounds = array<i64: 1, 40, 128>}, {pipeline_mode = #tpu.pipeline_mode<synchronous>, transform_indices = @transform_1, window_bounds = array<i64: 4, 128, 32>}, {pipeline_mode = #tpu.pipeline_mode<synchronous>, transform_indices = @transform_2, window_bounds = array<i64: 1, 32>}, {pipeline_mode = #tpu.pipeline_mode<synchronous>, transform_indices = @transform_3, window_bounds = array<i64: 1, 36>}, {pipeline_mode = #tpu.pipeline_mode<synchronous>, transform_indices = @transform_4, window_bounds = array<i64: 32, 10>}, {pipeline_mode = #tpu.pipeline_mode<synchronous>, transform_indices = @transform_5, window_bounds = array<i64: 1, 10>}, {transform_indices = @transform_6, window_bounds = array<i64: 1, 1, 10>}]} {
    %cst = arith.constant 0.000000e+00 : f32
    %0 = vector.broadcast %cst : f32 to vector<36x32xf32>
    %c0 = arith.constant 0 : index
    %c0_0 = arith.constant 0 : index
    %c0_1 = arith.constant 0 : index
    %1 = vector.load %arg1[%c0, %c0_0, %c0_1] : memref<1x40x128xbf16, #tpu.memory_space<vmem>>, vector<1x36x128xbf16>
    %2 = vector.shape_cast %1 : vector<1x36x128xbf16> to vector<36x128xbf16>
    %c0_2 = arith.constant 0 : index
    %c0_3 = arith.constant 0 : index
    %c0_4 = arith.constant 0 : index
    %3 = vector.load %arg2[%c0_2, %c0_3, %c0_4] : memref<4x128x32xbf16, #tpu.memory_space<vmem>>, vector<1x128x32xbf16>
    %4 = vector.shape_cast %3 : vector<1x128x32xbf16> to vector<128x32xbf16>
    %cst_5 = arith.constant dense<0.000000e+00> : vector<36x32xf32>
    %5 = tpu.matmul %2, %4, %cst_5 {dimension_numbers = #tpu.dot_dimension_numbers<[1], [0], [0], [1], [0, 0, 1, 1], [], []>} : vector<36x128xbf16>, vector<128x32xbf16>, vector<36x32xf32> -> vector<36x32xf32>
    %6 = arith.addf %0, %5 : vector<36x32xf32>
    %c0_6 = arith.constant 0 : index
    %c1 = arith.constant 1 : index
    %c0_7 = arith.constant 0 : index
    %7 = vector.load %arg1[%c0_6, %c1, %c0_7] : memref<1x40x128xbf16, #tpu.memory_space<vmem>>, vector<1x36x128xbf16>
    %8 = vector.shape_cast %7 : vector<1x36x128xbf16> to vector<36x128xbf16>
    %c1_8 = arith.constant 1 : index
    %c0_9 = arith.constant 0 : index
    %c0_10 = arith.constant 0 : index
    %9 = vector.load %arg2[%c1_8, %c0_9, %c0_10] : memref<4x128x32xbf16, #tpu.memory_space<vmem>>, vector<1x128x32xbf16>
    %10 = vector.shape_cast %9 : vector<1x128x32xbf16> to vector<128x32xbf16>
    %cst_11 = arith.constant dense<0.000000e+00> : vector<36x32xf32>
    %11 = tpu.matmul %8, %10, %cst_11 {dimension_numbers = #tpu.dot_dimension_numbers<[1], [0], [0], [1], [0, 0, 1, 1], [], []>} : vector<36x128xbf16>, vector<128x32xbf16>, vector<36x32xf32> -> vector<36x32xf32>
    %12 = arith.addf %6, %11 : vector<36x32xf32>
    %c0_12 = arith.constant 0 : index
    %c3 = arith.constant 3 : index
    %c0_13 = arith.constant 0 : index
    %13 = vector.load %arg1[%c0_12, %c3, %c0_13] : memref<1x40x128xbf16, #tpu.memory_space<vmem>>, vector<1x36x128xbf16>
    %14 = vector.shape_cast %13 : vector<1x36x128xbf16> to vector<36x128xbf16>
    %c2 = arith.constant 2 : index
    %c0_14 = arith.constant 0 : index
    %c0_15 = arith.constant 0 : index
    %15 = vector.load %arg2[%c2, %c0_14, %c0_15] : memref<4x128x32xbf16, #tpu.memory_space<vmem>>, vector<1x128x32xbf16>
    %16 = vector.shape_cast %15 : vector<1x128x32xbf16> to vector<128x32xbf16>
    %cst_16 = arith.constant dense<0.000000e+00> : vector<36x32xf32>
    %17 = tpu.matmul %14, %16, %cst_16 {dimension_numbers = #tpu.dot_dimension_numbers<[1], [0], [0], [1], [0, 0, 1, 1], [], []>} : vector<36x128xbf16>, vector<128x32xbf16>, vector<36x32xf32> -> vector<36x32xf32>
    %18 = arith.addf %12, %17 : vector<36x32xf32>
    %c0_17 = arith.constant 0 : index
    %c4 = arith.constant 4 : index
    %c0_18 = arith.constant 0 : index
    %19 = vector.load %arg1[%c0_17, %c4, %c0_18] : memref<1x40x128xbf16, #tpu.memory_space<vmem>>, vector<1x36x128xbf16>
    %20 = vector.shape_cast %19 : vector<1x36x128xbf16> to vector<36x128xbf16>
    %c3_19 = arith.constant 3 : index
    %c0_20 = arith.constant 0 : index
    %c0_21 = arith.constant 0 : index
    %21 = vector.load %arg2[%c3_19, %c0_20, %c0_21] : memref<4x128x32xbf16, #tpu.memory_space<vmem>>, vector<1x128x32xbf16>
    %22 = vector.shape_cast %21 : vector<1x128x32xbf16> to vector<128x32xbf16>
    %cst_22 = arith.constant dense<0.000000e+00> : vector<36x32xf32>
    %23 = tpu.matmul %20, %22, %cst_22 {dimension_numbers = #tpu.dot_dimension_numbers<[1], [0], [0], [1], [0, 0, 1, 1], [], []>} : vector<36x128xbf16>, vector<128x32xbf16>, vector<36x32xf32> -> vector<36x32xf32>
    %24 = arith.addf %18, %23 : vector<36x32xf32>
    %c0_23 = arith.constant 0 : index
    %c0_24 = arith.constant 0 : index
    %25 = vector.load %arg3[%c0_23, %c0_24] : memref<1x32xf32, #tpu.memory_space<vmem>>, vector<1x32xf32>
    %26 = vector.broadcast %25 : vector<1x32xf32> to vector<36x32xf32>
    %27 = arith.addf %24, %26 : vector<36x32xf32>
    %cst_25 = arith.constant 0.000000e+00 : f32
    %28 = vector.broadcast %cst_25 : f32 to vector<36x32xf32>
    %29 = arith.maximumf %27, %28 : vector<36x32xf32>
    %c0_26 = arith.constant 0 : index
    %c0_27 = arith.constant 0 : index
    %30 = vector.load %arg4[%c0_26, %c0_27] : memref<1x36xf32, #tpu.memory_space<vmem>>, vector<1x36xf32>
    %cst_28 = arith.constant dense<0.000000e+00> : vector<1x32xf32>
    %31 = tpu.matmul %30, %29, %cst_28 {dimension_numbers = #tpu.dot_dimension_numbers<[1], [0], [0], [1], [0, 0, 1, 1], [], []>} : vector<1x36xf32>, vector<36x32xf32>, vector<1x32xf32> -> vector<1x32xf32>
    %c0_29 = arith.constant 0 : index
    %c0_30 = arith.constant 0 : index
    %32 = vector.load %arg5[%c0_29, %c0_30] : memref<32x10xf32, #tpu.memory_space<vmem>>, vector<32x10xf32>
    %cst_31 = arith.constant dense<0.000000e+00> : vector<1x10xf32>
    %33 = tpu.matmul %31, %32, %cst_31 {dimension_numbers = #tpu.dot_dimension_numbers<[1], [0], [0], [1], [0, 0, 1, 1], [], []>} : vector<1x32xf32>, vector<32x10xf32>, vector<1x10xf32> -> vector<1x10xf32>
    %c0_32 = arith.constant 0 : index
    %c0_33 = arith.constant 0 : index
    %34 = vector.load %arg6[%c0_32, %c0_33] : memref<1x10xf32, #tpu.memory_space<vmem>>, vector<1x10xf32>
    %35 = arith.addf %33, %34 : vector<1x10xf32>
    %c0_34 = arith.constant 0 : index
    %c0_35 = arith.constant 0 : index
    %c0_36 = arith.constant 0 : index
    %36 = vector.load %arg7[%c0_34, %c0_35, %c0_36] : memref<1x1x10xf32, #tpu.memory_space<vmem>>, vector<1x1x10xf32>
    %37 = vector.shape_cast %36 : vector<1x1x10xf32> to vector<1x10xf32>
    %38 = vector.shape_cast %35 : vector<1x10xf32> to vector<1x1x10xf32>
    tpu.vector_store %arg7[%c0_34, %c0_35, %c0_36], %38 {strides = array<i32>} : memref<1x1x10xf32, #tpu.memory_space<vmem>>, vector<1x1x10xf32>,
    return
  }
  func.func @transform_0(%arg0: i32) -> (i32, i32, i32) {
    %c0_i32 = arith.constant 0 : i32
    %c0_i32_0 = arith.constant 0 : i32
    %c0_i32_1 = arith.constant 0 : i32
    return %arg0, %c0_i32, %c0_i32_0 : i32, i32, i32
  }
  func.func @transform_1(%arg0: i32) -> (i32, i32, i32) {
    %c0_i32 = arith.constant 0 : i32
    %c0_i32_0 = arith.constant 0 : i32
    %c0_i32_1 = arith.constant 0 : i32
    %c0_i32_2 = arith.constant 0 : i32
    return %c0_i32, %c0_i32_0, %c0_i32_1 : i32, i32, i32
  }
  func.func @transform_2(%arg0: i32) -> (i32, i32) {
    %c0_i32 = arith.constant 0 : i32
    %c0_i32_0 = arith.constant 0 : i32
    %c0_i32_1 = arith.constant 0 : i32
    return %c0_i32, %c0_i32_0 : i32, i32
  }
  func.func @transform_3(%arg0: i32) -> (i32, i32) {
    %c0_i32 = arith.constant 0 : i32
    %c0_i32_0 = arith.constant 0 : i32
    %c0_i32_1 = arith.constant 0 : i32
    return %c0_i32, %c0_i32_0 : i32, i32
  }
  func.func @transform_4(%arg0: i32) -> (i32, i32) {
    %c0_i32 = arith.constant 0 : i32
    %c0_i32_0 = arith.constant 0 : i32
    %c0_i32_1 = arith.constant 0 : i32
    return %c0_i32, %c0_i32_0 : i32, i32
  }
  func.func @transform_5(%arg0: i32) -> (i32, i32) {
    %c0_i32 = arith.constant 0 : i32
    %c0_i32_0 = arith.constant 0 : i32
    %c0_i32_1 = arith.constant 0 : i32
    return %c0_i32, %c0_i32_0 : i32, i32
  }
  func.func @transform_6(%arg0: i32) -> (i32, i32, i32) {
    %c0_i32 = arith.constant 0 : i32
    %c0_i32_0 = arith.constant 0 : i32
    %c0_i32_1 = arith.constant 0 : i32
    return %arg0, %c0_i32, %c0_i32_0 : i32, i32, i32
  }
}

</mosaic_0001>

<llo_original>
// kernel: conv_space_time_forward.3
$region0: #{conv_space_time_forward.3}
  #allocation0 [shape = 'u32[]', space=smem, size = 0x4, offset = 0x4, fixed_abs, tag = 'smem constant byte address 0x4 - core index']
  #allocation1 [shape = 'u32[72,128]{1,0:T(1,128)}', space=vmem, size = 0x9000, scoped, tag = 'internal scratch']
  %s0 = inlined_call_operand.vmem [shape: bf16[2,1,336,12], index: 0, kind: input, shape index: {}]
  %s1 = inlined_call_operand.vmem [shape: bf16[4,12,32], index: 1, kind: input, shape index: {}]
  %s2 = inlined_call_operand.vmem [shape: f32[1,32], index: 2, kind: input, shape index: {}]
  %s3 = inlined_call_operand.vmem [shape: bf16[2,1,324,32], index: 3, kind: output, shape index: {}]
  %s4 = sld [smem:[#allocation0]]
  $region45: #{conv_space_time_forward.3} parent=0
    _
  %s6 = ssub.s32 1, %s4
  %s7 = scalar_select 0, %s6, %s4
  loop: start=0, step=1, limit=4
  $region2: #{conv_space_time_forward.3} parent=0 // loop_pre_header
    _
  $region3: #{conv_space_time_forward.3} parent=0 // loop_header
    %s9 = sphi 0, %s13
    %p10 = scmp.ge.s32.totalorder %s9, 4
    %s16 = sphi 0, %s28
    %s17 = sphi 0, %s24
    %s18 = sphi 0, %s16
    %s19 = sphi 0, %s17
    %s20 = sphi 0, %s18
    %s21 = sphi 0, %s19
    %s33 = sphi 0, %s35
    %s36 = sphi 0, %s33
    %s37 = sphi 0, %s36
    %s53 = sphi 0, %s37
    %s57 = sphi 0, %s57
    %s59 = sphi 0, %s57
    %s60 = sphi 0, %s59
    %s74 = sphi 0, %s60
    %s78 = sphi 0, %s78
    %s80 = sphi 0, %s78
    %s81 = sphi 0, %s80
    %s95 = sphi 0, %s81
    %s103 = sphi 0, %s105
    %s106 = sphi 0, %s103
    %s107 = sphi 0, %s106
    %s123 = sphi 0, %s107
  $region4: #{conv_space_time_forward.3} parent=0 // loop_header_branch
    %12 = sbr.rel (%p10) target = $region8
  $region5: #{conv_space_time_forward.3} parent=0 // loop_body
    %s14 = ssub.s32 %s9, 1
    %s15 = ssub.s32 %s9, 2
    %s22 = sadd.s32 1, %s17
    %p23 = scmp.ge.s32.totalorder %s22, 1
    %s24 = scalar_select %p23, 0, %s22
    %s25 = sadd.s32 1, %s16
    %s26 = scalar_select %p23, %s25, %s16
    %p27 = scmp.ge.s32.totalorder %s26, 2
    %s28 = scalar_select %p27, 0, %s26
    %s29 = ssub.s32 %s16, %s28
    %s30 = ssub.s32 %s17, %s24
    %s31 = sor.u32 %s29, %s30
    %p32 = scmp.eq.s32.totalorder %s31, 0
    %s34 = sadd.s32 %s33, 1
    %s35 = scalar_select %p32, %s33, %s34
    %p38 = pneg %p32
    %p39 = scmp.eq.s32.totalorder %s9, 1
    %p40 = por %p38, %p39
    %p41 = scmp.ne.s32.totalorder %s33, %s36
    %p42 = scmp.eq.s32.totalorder %s9, 0
    %p43 = por %p41, %p42
    %p44 = scmp.ne.s32.totalorder %s33, %s36
    %p45 = scmp.eq.s32.totalorder %s14, 1
    %p46 = por %p44, %p45
    %p47 = scmp.ne.s32.totalorder %s36, %s37
    %p48 = scmp.eq.s32.totalorder %s14, 0
    %p49 = por %p47, %p48
    %p50 = scmp.ne.s32.totalorder %s36, %s37
    %p51 = scmp.eq.s32.totalorder %s15, 1
    %p52 = por %p50, %p51
    %p54 = scmp.ne.s32.totalorder %s37, %s53
    %p55 = scmp.eq.s32.totalorder %s15, 0
    %p56 = por %p54, %p55
    %s58 = sadd.s32 %s57, 1
    %p61 = scmp.eq.s32.totalorder %s9, 1
    %p62 = scmp.ne.s32.totalorder %s57, %s59
    %p63 = scmp.eq.s32.totalorder %s9, 0
    %p64 = por %p62, %p63
    %p65 = scmp.ne.s32.totalorder %s57, %s59
    %p66 = scmp.eq.s32.totalorder %s14, 1
    %p67 = por %p65, %p66
    %p68 = scmp.ne.s32.totalorder %s59, %s60
    %p69 = scmp.eq.s32.totalorder %s14, 0
    %p70 = por %p68, %p69
    %p71 = scmp.ne.s32.totalorder %s59, %s60
    %p72 = scmp.eq.s32.totalorder %s15, 1
    %p73 = por %p71, %p72
    %p75 = scmp.ne.s32.totalorder %s60, %s74
    %p76 = scmp.eq.s32.totalorder %s15, 0
    %p77 = por %p75, %p76
    %s79 = sadd.s32 %s78, 1
    %p82 = scmp.eq.s32.totalorder %s9, 1
    %p83 = scmp.ne.s32.totalorder %s78, %s80
    %p84 = scmp.eq.s32.totalorder %s9, 0
    %p85 = por %p83, %p84
    %p86 = scmp.ne.s32.totalorder %s78, %s80
    %p87 = scmp.eq.s32.totalorder %s14, 1
    %p88 = por %p86, %p87
    %p89 = scmp.ne.s32.totalorder %s80, %s81
    %p90 = scmp.eq.s32.totalorder %s14, 0
    %p91 = por %p89, %p90
    %p92 = scmp.ne.s32.totalorder %s80, %s81
    %p93 = scmp.eq.s32.totalorder %s15, 1
    %p94 = por %p92, %p93
    %p96 = scmp.ne.s32.totalorder %s81, %s95
    %p97 = scmp.eq.s32.totalorder %s15, 0
    %p98 = por %p96, %p97
    %s99 = ssub.s32 %s16, %s28
    %s100 = ssub.s32 %s17, %s24
    %s101 = sor.u32 %s99, %s100
    %p102 = scmp.eq.s32.totalorder %s101, 0
    %s104 = sadd.s32 %s103, 1
    %s105 = scalar_select %p102, %s103, %s104
    %p108 = pneg %p102
    %p109 = scmp.eq.s32.totalorder %s9, 1
    %p110 = por %p108, %p109
    %p111 = scmp.ne.s32.totalorder %s103, %s106
    %p112 = scmp.eq.s32.totalorder %s9, 0
    %p113 = por %p111, %p112
    %p114 = scmp.ne.s32.totalorder %s103, %s106
    %p115 = scmp.eq.s32.totalorder %s14, 1
    %p116 = por %p114, %p115
    %p117 = scmp.ne.s32.totalorder %s106, %s107
    %p118 = scmp.eq.s32.totalorder %s14, 0
    %p119 = por %p117, %p118
    %p120 = scmp.ne.s32.totalorder %s106, %s107
    %p121 = scmp.eq.s32.totalorder %s15, 1
    %p122 = por %p120, %p121
    %p124 = scmp.ne.s32.totalorder %s107, %s123
    %p125 = scmp.eq.s32.totalorder %s15, 0
    %p126 = por %p124, %p125
    %p127 = scmp.le.s32.totalorder 1, %s9
    %p128 = scmp.lt.s32.totalorder %s9, 3
    %p129 = pnand %p127, %p128
    %p130 = pneg %p129
    // Predicated region
    $region9: #{conv_space_time_forward.3} parent=5 // pred_check
      _
    $region10: #{conv_space_time_forward.3} parent=5 // pred_check_branch
      %132 = sbr.rel (%p129) target = $region12
    $region11: #{conv_space_time_forward.3} parent=5 // pred_region
      %s133 = ssub.s32 %s9, 1
      // Predicated region
      $region13: #{conv_space_time_forward.3} parent=11 // pred_check
        %p134 = pneg %p70
      $region14: #{conv_space_time_forward.3} parent=11 // pred_check_branch
        %136 = sbr.rel (%p134) target = $region16
      $region15: #{conv_space_time_forward.3} parent=11 // pred_region
        _
      $region16: #{conv_space_time_forward.3} parent=11 // pred_fallthru
        _
      // Predicated region
      $region17: #{conv_space_time_forward.3} parent=11 // pred_check
        %p137 = pneg %p91
      $region18: #{conv_space_time_forward.3} parent=11 // pred_check_branch
        %139 = sbr.rel (%p137) target = $region20
      $region19: #{conv_space_time_forward.3} parent=11 // pred_region
        _
      $region20: #{conv_space_time_forward.3} parent=11 // pred_fallthru
        _
    $region12: #{conv_space_time_forward.3} parent=5 // pred_fallthru
      _
    %p140 = scmp.lt.s32.totalorder %s9, 2
    // Predicated region
    $region21: #{conv_space_time_forward.3} parent=5 // pred_check
      %p141 = pneg %p140
    $region22: #{conv_space_time_forward.3} parent=5 // pred_check_branch
      %143 = sbr.rel (%p141) target = $region24
    $region23: #{conv_space_time_forward.3} parent=5 // pred_region
      // Predicated region
      $region25: #{conv_space_time_forward.3} parent=23 // pred_check
        %p144 = pneg %p43
      $region26: #{conv_space_time_forward.3} parent=23 // pred_check_branch
        %146 = sbr.rel (%p144) target = $region28
      $region27: #{conv_space_time_forward.3} parent=23 // pred_region
        %p147 = scmp.lt.s32.totalorder %s16, 1
        %s148 = scalar_select %p147, %s16, 1
        %p149 = scmp.lt.s32.totalorder %s17, 0
        %s150 = scalar_select %p149, %s17, 0
        %s151 = smul.addr %s150, 42
        %s152 = smul.addr %s148, 42
        %s153 = sadd.s32 %s151, %s152
        %s154 = smul.addr %s153, 4
        %s155 = scalar_lea.vmem %s0, %s154
      $region28: #{conv_space_time_forward.3} parent=23 // pred_fallthru
        _
    $region24: #{conv_space_time_forward.3} parent=5 // pred_fallthru
      _
    %p156 = scmp.le.s32.totalorder 1, %s9
    %p157 = scmp.lt.s32.totalorder %s9, 3
    %p158 = pnand %p156, %p157
    %p159 = pneg %p158
    // Predicated region
    $region29: #{conv_space_time_forward.3} parent=5 // pred_check
      _
    $region30: #{conv_space_time_forward.3} parent=5 // pred_check_branch
      %161 = sbr.rel (%p158) target = $region32
    $region31: #{conv_space_time_forward.3} parent=5 // pred_region
      %s162 = ssub.s32 %s9, 1
      %p163 = scmp.lt.s32.totalorder %s18, 1
      %s164 = scalar_select %p163, %s18, 1
      %p165 = scmp.lt.s32.totalorder %s19, 0
      %s166 = scalar_select %p165, %s19, 0
      %s167 = smul.addr %s166, 42
      %s168 = smul.addr %s164, 42
      %s169 = sadd.s32 %s167, %s168
      %s170 = smul.addr %s169, 4
      %s171 = scalar_lea.vmem %s0, %s170
      %p172 = pneg %p49
      %p173 = pneg %p46
      %p174 = pneg %p70
      %p175 = pneg %p67
      %p176 = pneg %p91
      %p177 = pneg %p88
      %p178 = pneg %p119
      %p179 = pneg %p116
      %p180 = scmp.lt.s32.totalorder %s18, 1
      %s181 = scalar_select %p180, %s18, 1
      %p182 = scmp.lt.s32.totalorder %s19, 0
      %s183 = scalar_select %p182, %s19, 0
      %s184 = smul.addr %s183, 41
      %s185 = smul.addr %s181, 41
      %s186 = sadd.s32 %s184, %s185
      %s187 = smul.addr %s186, 4
      %s188 = scalar_lea.vmem %s3, %s187
      %p189 = scmp.lt.s32.totalorder %s18, 1
      %s190 = scalar_select %p189, %s18, 1
      %p191 = scmp.lt.s32.totalorder %s19, 0
      %s192 = scalar_select %p191, %s19, 0
      %s193 = smul.addr %s192, 42
      %s194 = smul.addr %s190, 42
      %s195 = sadd.s32 %s193, %s194
      %s196 = smul.addr %s195, 4
      %s197 = scalar_lea.vmem %s0, %s196
      %p198 = scmp.lt.s32.totalorder %s18, 1
      %s199 = scalar_select %p198, %s18, 1
      %p200 = scmp.lt.s32.totalorder %s19, 0
      %s201 = scalar_select %p200, %s19, 0
      %s202 = smul.addr %s201, 41
      %s203 = smul.addr %s199, 41
      %s204 = sadd.s32 %s202, %s203
      %s205 = smul.addr %s204, 4
      %s206 = scalar_lea.vmem %s3, %s205
      %v208 = vld [vmem:[%s197] sm:$0xf]
      %v209 = vld [vmem:[%s197 + $0x4] sm:$0xf]
      %v210 = vld [vmem:[%s197 + $0x8] sm:$0xf]
      %v211 = vld [vmem:[%s197 + $0xc] sm:$0xf]
      %v212 = vld [vmem:[%s197 + $0x10] sm:$0xf]
      %v213 = vld [vmem:[%s197 + $0x14] sm:$0xf]
      %v214 = vld [vmem:[%s197 + $0x18] sm:$0xf]
      %v215 = vld [vmem:[%s197 + $0x1c] sm:$0xf]
      %v216 = vld [vmem:[%s197 + $0x20] sm:$0xf]
      %v217 = vld [vmem:[%s197 + $0x24] sm:$0xf]
      %v218 = vld [vmem:[%s197 + $0x28] sm:$0xf]
      %v219 = vld [vmem:[%s197 + $0x2c] sm:$0xf]
      %v220 = vld [vmem:[%s197 + $0x30] sm:$0xf]
      %v221 = vld [vmem:[%s197 + $0x34] sm:$0xf]
      %v222 = vld [vmem:[%s197 + $0x38] sm:$0xf]
      %v223 = vld [vmem:[%s197 + $0x3c] sm:$0xf]
      %v224 = vld [vmem:[%s197 + $0x40] sm:$0xf]
      %v225 = vld [vmem:[%s197 + $0x44] sm:$0xf]
      %v226 = vld [vmem:[%s197 + $0x48] sm:$0xf]
      %v227 = vld [vmem:[%s197 + $0x4c] sm:$0xf]
      %v228 = vld [vmem:[%s197 + $0x50] sm:$0xf]
      %v229 = vld [vmem:[%s197 + $0x54] sm:$0xf]
      %v230 = vld [vmem:[%s197 + $0x58] sm:$0xf]
      %v231 = vld [vmem:[%s197 + $0x5c] sm:$0xf]
      %v232 = vld [vmem:[%s197 + $0x60] sm:$0xf]
      %v233 = vld [vmem:[%s197 + $0x64] sm:$0xf]
      %v234 = vld [vmem:[%s197 + $0x68] sm:$0xf]
      %v235 = vld [vmem:[%s197 + $0x6c] sm:$0xf]
      %v236 = vld [vmem:[%s197 + $0x70] sm:$0xf]
      %v237 = vld [vmem:[%s197 + $0x74] sm:$0xf]
      %v238 = vld [vmem:[%s197 + $0x78] sm:$0xf]
      %v239 = vld [vmem:[%s197 + $0x7c] sm:$0xf]
      %v240 = vld [vmem:[%s197 + $0x80] sm:$0xf]
      %v241 = vld [vmem:[%s197 + $0x84] sm:$0xf]
      %v242 = vld [vmem:[%s197 + $0x88] sm:$0xf]
      %v243 = vld [vmem:[%s197 + $0x8c] sm:$0xf]
      %v244 = vld [vmem:[%s197 + $0x90] sm:$0xf]
      %v245 = vld [vmem:[%s197 + $0x94] sm:$0xf]
      %v246 = vld [vmem:[%s197 + $0x98] sm:$0xf]
      %v247 = vld [vmem:[%s197 + $0x9c] sm:$0xf]
      %v248 = vld [vmem:[%s197 + $0xa0] sm:$0x3]
      %v249 = vld [vmem:[%s1] sm:$0xf]
      %v250 = vld [vmem:[%s1 + $0x4] sm:$0x3]
      %v251 = vld [vmem:[%s197 + $0xa0] sm:$0x7]
      %s252 = scalar_lea.vmem %s1, 8
      %v253 = vld [vmem:[%s252] sm:$0xf]
      %v254 = vld [vmem:[%s252 + $0x4] sm:$0x3]
      %v296 = vunpack.c.l.b16 %v208
      %v297 = vunpack.c.l.b16 %v209
      %v298 = vunpack.c.l.b16 %v210
      %v299 = vunpack.c.l.b16 %v211
      %v300 = vunpack.c.l.b16 %v212
      %v301 = vunpack.c.l.b16 %v213
      %v302 = vunpack.c.l.b16 %v214
      %v303 = vunpack.c.l.b16 %v215
      %v304 = vunpack.c.l.b16 %v216
      %v305 = vunpack.c.l.b16 %v217
      %v306 = vunpack.c.l.b16 %v218
      %v307 = vunpack.c.l.b16 %v219
      %v308 = vunpack.c.l.b16 %v220
      %v309 = vunpack.c.l.b16 %v221
      %v310 = vunpack.c.l.b16 %v222
      %v311 = vunpack.c.l.b16 %v223
      %v312 = vunpack.c.l.b16 %v224
      %v313 = vunpack.c.l.b16 %v225
      %v314 = vunpack.c.l.b16 %v226
      %v315 = vunpack.c.l.b16 %v227
      %v316 = vunpack.c.l.b16 %v228
      %v317 = vunpack.c.l.b16 %v229
      %v318 = vunpack.c.l.b16 %v230
      %v319 = vunpack.c.l.b16 %v231
      %v320 = vunpack.c.l.b16 %v232
      %v321 = vunpack.c.l.b16 %v233
      %v322 = vunpack.c.l.b16 %v234
      %v323 = vunpack.c.l.b16 %v235
      %v324 = vunpack.c.l.b16 %v236
      %v325 = vunpack.c.l.b16 %v237
      %v326 = vunpack.c.l.b16 %v238
      %v327 = vunpack.c.l.b16 %v239
      %v328 = vunpack.c.l.b16 %v240
      %v329 = vunpack.c.l.b16 %v241
      %v330 = vunpack.c.l.b16 %v242
      %v331 = vunpack.c.l.b16 %v243
      %v332 = vunpack.c.l.b16 %v244
      %v333 = vunpack.c.l.b16 %v245
      %v334 = vunpack.c.l.b16 %v246
      %v335 = vunpack.c.l.b16 %v247
      %v336 = vunpack.c.l.b16 %v251
      %v337 = vpack.c.b16 %v297, %v296
      %v338 = vpack.c.b16 %v299, %v298
      %v339 = vpack.c.b16 %v301, %v300
      %v340 = vpack.c.b16 %v303, %v302
      %v341 = vpack.c.b16 %v305, %v304
      %v342 = vpack.c.b16 %v307, %v306
      %v343 = vpack.c.b16 %v309, %v308
      %v344 = vpack.c.b16 %v311, %v310
      %v345 = vpack.c.b16 %v313, %v312
      %v346 = vpack.c.b16 %v315, %v314
      %v347 = vpack.c.b16 %v317, %v316
      %v348 = vpack.c.b16 %v319, %v318
      %v349 = vpack.c.b16 %v321, %v320
      %v350 = vpack.c.b16 %v323, %v322
      %v351 = vpack.c.b16 %v325, %v324
      %v352 = vpack.c.b16 %v327, %v326
      %v353 = vpack.c.b16 %v329, %v328
      %v354 = vpack.c.b16 %v331, %v330
      %v355 = vpack.c.b16 %v333, %v332
      %v356 = vpack.c.b16 %v335, %v334
      %v357 = vpack.c.b16 %v336, %v336
      %vm358 = vsmask.f32 7424
      %v360 = vshrl.u32 %v337, 16
      %v362 = vshll.u32 %v337, 16
      %v364 = vrot.slane %v362, 1
      %v365 = vor.u32 %v360, %v364
      %v367 = vshll.u32 %v338, 16
      %v369 = vrot.slane %v367, 1
      %v370 = vsel %vm358, %v365, %v369
      %v371 = vshrl.u32 %v338, 16
      %v373 = vor.u32 %v371, %v369
      %v375 = vshll.u32 %v339, 16
      %v377 = vrot.slane %v375, 1
      %v378 = vsel %vm358, %v373, %v377
      %v379 = vshrl.u32 %v339, 16
      %v381 = vor.u32 %v379, %v377
      %v383 = vshll.u32 %v340, 16
      %v385 = vrot.slane %v383, 1
      %v386 = vsel %vm358, %v381, %v385
      %v387 = vshrl.u32 %v340, 16
      %v389 = vor.u32 %v387, %v385
      %v391 = vshll.u32 %v341, 16
      %v393 = vrot.slane %v391, 1
      %v394 = vsel %vm358, %v389, %v393
      %v395 = vshrl.u32 %v341, 16
      %v397 = vor.u32 %v395, %v393
      %v399 = vshll.u32 %v342, 16
      %v401 = vrot.slane %v399, 1
      %v402 = vsel %vm358, %v397, %v401
      %v403 = vshrl.u32 %v342, 16
      %v405 = vor.u32 %v403, %v401
      %v407 = vshll.u32 %v343, 16
      %v409 = vrot.slane %v407, 1
      %v410 = vsel %vm358, %v405, %v409
      %v411 = vshrl.u32 %v343, 16
      %v413 = vor.u32 %v411, %v409
      %v415 = vshll.u32 %v344, 16
      %v417 = vrot.slane %v415, 1
      %v418 = vsel %vm358, %v413, %v417
      %v419 = vshrl.u32 %v344, 16
      %v421 = vor.u32 %v419, %v417
      %v423 = vshll.u32 %v345, 16
      %v425 = vrot.slane %v423, 1
      %v426 = vsel %vm358, %v421, %v425
      %v427 = vshrl.u32 %v345, 16
      %v429 = vor.u32 %v427, %v425
      %v431 = vshll.u32 %v346, 16
      %v433 = vrot.slane %v431, 1
      %v434 = vsel %vm358, %v429, %v433
      %v435 = vshrl.u32 %v346, 16
      %v437 = vor.u32 %v435, %v433
      %v439 = vshll.u32 %v347, 16
      %v441 = vrot.slane %v439, 1
      %v442 = vsel %vm358, %v437, %v441
      %v443 = vshrl.u32 %v347, 16
      %v445 = vor.u32 %v443, %v441
      %v447 = vshll.u32 %v348, 16
      %v449 = vrot.slane %v447, 1
      %v450 = vsel %vm358, %v445, %v449
      %v451 = vshrl.u32 %v348, 16
      %v453 = vor.u32 %v451, %v449
      %v455 = vshll.u32 %v349, 16
      %v457 = vrot.slane %v455, 1
      %v458 = vsel %vm358, %v453, %v457
      %v459 = vshrl.u32 %v349, 16
      %v461 = vor.u32 %v459, %v457
      %v463 = vshll.u32 %v350, 16
      %v465 = vrot.slane %v463, 1
      %v466 = vsel %vm358, %v461, %v465
      %v467 = vshrl.u32 %v350, 16
      %v469 = vor.u32 %v467, %v465
      %v471 = vshll.u32 %v351, 16
      %v473 = vrot.slane %v471, 1
      %v474 = vsel %vm358, %v469, %v473
      %v475 = vshrl.u32 %v351, 16
      %v477 = vor.u32 %v475, %v473
      %v479 = vshll.u32 %v352, 16
      %v481 = vrot.slane %v479, 1
      %v482 = vsel %vm358, %v477, %v481
      %v483 = vshrl.u32 %v352, 16
      %v485 = vor.u32 %v483, %v481
      %v487 = vshll.u32 %v353, 16
      %v489 = vrot.slane %v487, 1
      %v490 = vsel %vm358, %v485, %v489
      %v491 = vshrl.u32 %v353, 16
      %v493 = vor.u32 %v491, %v489
      %v495 = vshll.u32 %v354, 16
      %v497 = vrot.slane %v495, 1
      %v498 = vsel %vm358, %v493, %v497
      %v499 = vshrl.u32 %v354, 16
      %v501 = vor.u32 %v499, %v497
      %v503 = vshll.u32 %v355, 16
      %v505 = vrot.slane %v503, 1
      %v506 = vsel %vm358, %v501, %v505
      %v507 = vshrl.u32 %v355, 16
      %v509 = vor.u32 %v507, %v505
      %v511 = vshll.u32 %v356, 16
      %v513 = vrot.slane %v511, 1
      %v514 = vsel %vm358, %v509, %v513
      %v515 = vshrl.u32 %v356, 16
      %v517 = vor.u32 %v515, %v513
      %v519 = vshll.u32 %v357, 16
      %v521 = vrot.slane %v519, 1
      %v522 = vsel %vm358, %v517, %v521
      %v523 = vshrl.u32 %v357, 16
      %v525 = vor.u32 %v523, %v521
      %v528 = vunpack.c.l.b16 %v253
      %v529 = vunpack.c.l.b16 %v254
      %v530 = vpack.c.b16 %v529, %v528
      %vm531 = vcmask 97280
      %v533 = vsel %vm531, %v370, 0
      %v536 = vsel %vm531, %v378, 0
      %v539 = vsel %vm531, %v386, 0
      %v542 = vsel %vm531, %v394, 0
      %v545 = vsel %vm531, %v402, 0
      %v548 = vsel %vm531, %v410, 0
      %v551 = vsel %vm531, %v418, 0
      %v554 = vsel %vm531, %v426, 0
      %v557 = vsel %vm531, %v434, 0
      %v560 = vsel %vm531, %v442, 0
      %v563 = vsel %vm531, %v450, 0
      %v566 = vsel %vm531, %v458, 0
      %v569 = vsel %vm531, %v466, 0
      %v572 = vsel %vm531, %v474, 0
      %v575 = vsel %vm531, %v482, 0
      %v578 = vsel %vm531, %v490, 0
      %v581 = vsel %vm531, %v498, 0
      %v584 = vsel %vm531, %v506, 0
      %v587 = vsel %vm531, %v514, 0
      %v590 = vsel %vm531, %v522, 0
      %v593 = vsel %vm531, %v525, 0
      %vm595 = vcmask 1045504
      %v597 = vsel %vm595, %v530, 0
      %599 = vmatpush.bf16.msra.mxu0 0
      %600 = vmatpush.bf16.msra.mxu0 0
      %601 = vmatpush.bf16.msra.mxu0 0
      %602 = vmatpush.bf16.msra.mxu0 0
      %603 = vmatpush.bf16.msra.mxu0 0
      %604 = vmatpush.bf16.msra.mxu0 0
      %605 = vmatpush.bf16.msra.mxu0 0
      %606 = vmatpush.bf16.msra.mxu0 %v597
      %607 = vmatmul.bf16.gmra.mxu0 %v533
      %v608 = vpop.f32.mrf.mxu0
      %v609 = vadd.f32 0.0, %v608
      %v610 = vpop.f32.mrf.mxu0
      %v611 = vadd.f32 0.0, %v610
      %612 = vmatmul.bf16.gmra.mxu0 %v536
      %v613 = vpop.f32.mrf.mxu0
      %v614 = vadd.f32 0.0, %v613
      %v615 = vpop.f32.mrf.mxu0
      %v616 = vadd.f32 0.0, %v615
      %617 = vmatmul.bf16.gmra.mxu0 %v539
      %v618 = vpop.f32.mrf.mxu0
      %v619 = vadd.f32 0.0, %v618
      %v620 = vpop.f32.mrf.mxu0
      %v621 = vadd.f32 0.0, %v620
      %622 = vmatmul.bf16.gmra.mxu0 %v542
      %v623 = vpop.f32.mrf.mxu0
      %v624 = vadd.f32 0.0, %v623
      %v625 = vpop.f32.mrf.mxu0
      %v626 = vadd.f32 0.0, %v625
      %627 = vmatmul.bf16.gmra.mxu0 %v545
      %v628 = vpop.f32.mrf.mxu0
      %v629 = vadd.f32 0.0, %v628
      %v630 = vpop.f32.mrf.mxu0
      %v631 = vadd.f32 0.0, %v630
      %632 = vmatmul.bf16.gmra.mxu0 %v548
      %v633 = vpop.f32.mrf.mxu0
      %v634 = vadd.f32 0.0, %v633
      %v635 = vpop.f32.mrf.mxu0
      %v636 = vadd.f32 0.0, %v635
      %637 = vmatmul.bf16.gmra.mxu0 %v551
      %v638 = vpop.f32.mrf.mxu0
      %v639 = vadd.f32 0.0, %v638
      %v640 = vpop.f32.mrf.mxu0
      %v641 = vadd.f32 0.0, %v640
      %642 = vmatmul.bf16.gmra.mxu0 %v554
      %v643 = vpop.f32.mrf.mxu0
      %v644 = vadd.f32 0.0, %v643
      %v645 = vpop.f32.mrf.mxu0
      %v646 = vadd.f32 0.0, %v645
      %647 = vmatmul.bf16.gmra.mxu0 %v557
      %v648 = vpop.f32.mrf.mxu0
      %v649 = vadd.f32 0.0, %v648
      %v650 = vpop.f32.mrf.mxu0
      %v651 = vadd.f32 0.0, %v650
      %652 = vmatmul.bf16.gmra.mxu0 %v560
      %v653 = vpop.f32.mrf.mxu0
      %v654 = vadd.f32 0.0, %v653
      %v655 = vpop.f32.mrf.mxu0
      %v656 = vadd.f32 0.0, %v655
      %657 = vmatmul.bf16.gmra.mxu0 %v563
      %v658 = vpop.f32.mrf.mxu0
      %v659 = vadd.f32 0.0, %v658
      %v660 = vpop.f32.mrf.mxu0
      %v661 = vadd.f32 0.0, %v660
      %662 = vmatmul.bf16.gmra.mxu0 %v566
      %v663 = vpop.f32.mrf.mxu0
      %v664 = vadd.f32 0.0, %v663
      %v665 = vpop.f32.mrf.mxu0
      %v666 = vadd.f32 0.0, %v665
      %667 = vmatmul.bf16.gmra.mxu0 %v569
      %v668 = vpop.f32.mrf.mxu0
      %v669 = vadd.f32 0.0, %v668
      %v670 = vpop.f32.mrf.mxu0
      %v671 = vadd.f32 0.0, %v670
      %672 = vmatmul.bf16.gmra.mxu0 %v572
      %v673 = vpop.f32.mrf.mxu0
      %v674 = vadd.f32 0.0, %v673
      %v675 = vpop.f32.mrf.mxu0
      %v676 = vadd.f32 0.0, %v675
      %677 = vmatmul.bf16.gmra.mxu0 %v575
      %v678 = vpop.f32.mrf.mxu0
      %v679 = vadd.f32 0.0, %v678
      %v680 = vpop.f32.mrf.mxu0
      %v681 = vadd.f32 0.0, %v680
      %682 = vmatmul.bf16.gmra.mxu0 %v578
      %v683 = vpop.f32.mrf.mxu0
      %v684 = vadd.f32 0.0, %v683
      %v685 = vpop.f32.mrf.mxu0
      %v686 = vadd.f32 0.0, %v685
      %687 = vmatmul.bf16.gmra.mxu0 %v581
      %v688 = vpop.f32.mrf.mxu0
      %v689 = vadd.f32 0.0, %v688
      %v690 = vpop.f32.mrf.mxu0
      %v691 = vadd.f32 0.0, %v690
      %692 = vmatmul.bf16.gmra.mxu0 %v584
      %v693 = vpop.f32.mrf.mxu0
      %v694 = vadd.f32 0.0, %v693
      %v695 = vpop.f32.mrf.mxu0
      %v696 = vadd.f32 0.0, %v695
      %697 = vmatmul.bf16.gmra.mxu0 %v587
      %v698 = vpop.f32.mrf.mxu0
      %v699 = vadd.f32 0.0, %v698
      %v700 = vpop.f32.mrf.mxu0
      %v701 = vadd.f32 0.0, %v700
      %702 = vmatmul.bf16.gmra.mxu0 %v590
      %v703 = vpop.f32.mrf.mxu0
      %v704 = vadd.f32 0.0, %v703
      %v705 = vpop.f32.mrf.mxu0
      %v706 = vadd.f32 0.0, %v705
      %707 = vmatmul.bf16.gmra.mxu0 %v593
      %v708 = vpop.f32.mrf.mxu0
      %v709 = vadd.f32 0.0, %v708
      %v710 = vpop.f32.mrf.mxu0
      %711 = vdwg.mxu0
      %v713 = vunpack.c.l.b16 %v248
      %v714 = vpack.c.b16 %v713, %v713
      %v717 = vunpack.c.l.b16 %v249
      %v718 = vunpack.c.l.b16 %v250
      %v719 = vpack.c.b16 %v718, %v717
      %v720 = vsel %vm531, %v337, 0
      %v722 = vsel %vm531, %v338, 0
      %v724 = vsel %vm531, %v339, 0
      %v726 = vsel %vm531, %v340, 0
      %v728 = vsel %vm531, %v341, 0
      %v730 = vsel %vm531, %v342, 0
      %v732 = vsel %vm531, %v343, 0
      %v734 = vsel %vm531, %v344, 0
      %v736 = vsel %vm531, %v345, 0
      %v738 = vsel %vm531, %v346, 0
      %v740 = vsel %vm531, %v347, 0
      %v742 = vsel %vm531, %v348, 0
      %v744 = vsel %vm531, %v349, 0
      %v746 = vsel %vm531, %v350, 0
      %v748 = vsel %vm531, %v351, 0
      %v750 = vsel %vm531, %v352, 0
      %v752 = vsel %vm531, %v353, 0
      %v754 = vsel %vm531, %v354, 0
      %v756 = vsel %vm531, %v355, 0
      %v758 = vsel %vm531, %v356, 0
      %v761 = vsel %vm531, %v714, 0
      %v764 = vsel %vm595, %v719, 0
      %766 = vmatpush.bf16.msra.mxu0 0
      %767 = vmatpush.bf16.msra.mxu0 0
      %768 = vmatpush.bf16.msra.mxu0 0
      %769 = vmatpush.bf16.msra.mxu0 0
      %770 = vmatpush.bf16.msra.mxu0 0
      %771 = vmatpush.bf16.msra.mxu0 0
      %772 = vmatpush.bf16.msra.mxu0 0
      %773 = vmatpush.bf16.msra.mxu0 %v764
      %774 = vmatmul.bf16.gmra.mxu0 %v720
      %v775 = vpop.f32.mrf.mxu0
      %v776 = vadd.f32 %v609, %v775
      %v777 = vpop.f32.mrf.mxu0
      %v778 = vadd.f32 %v611, %v777
      %779 = vmatmul.bf16.gmra.mxu0 %v722
      %v780 = vpop.f32.mrf.mxu0
      %v781 = vadd.f32 %v614, %v780
      %v782 = vpop.f32.mrf.mxu0
      %v783 = vadd.f32 %v616, %v782
      %784 = vmatmul.bf16.gmra.mxu0 %v724
      %v785 = vpop.f32.mrf.mxu0
      %v786 = vadd.f32 %v619, %v785
      %v787 = vpop.f32.mrf.mxu0
      %v788 = vadd.f32 %v621, %v787
      %789 = vmatmul.bf16.gmra.mxu0 %v726
      %v790 = vpop.f32.mrf.mxu0
      %v791 = vadd.f32 %v624, %v790
      %v792 = vpop.f32.mrf.mxu0
      %v793 = vadd.f32 %v626, %v792
      %794 = vmatmul.bf16.gmra.mxu0 %v728
      %v795 = vpop.f32.mrf.mxu0
      %v796 = vadd.f32 %v629, %v795
      %v797 = vpop.f32.mrf.mxu0
      %v798 = vadd.f32 %v631, %v797
      %799 = vmatmul.bf16.gmra.mxu0 %v730
      %v800 = vpop.f32.mrf.mxu0
      %v801 = vadd.f32 %v634, %v800
      %v802 = vpop.f32.mrf.mxu0
      %v803 = vadd.f32 %v636, %v802
      %804 = vmatmul.bf16.gmra.mxu0 %v732
      %v805 = vpop.f32.mrf.mxu0
      %v806 = vadd.f32 %v639, %v805
      %v807 = vpop.f32.mrf.mxu0
      %v808 = vadd.f32 %v641, %v807
      %809 = vmatmul.bf16.gmra.mxu0 %v734
      %v810 = vpop.f32.mrf.mxu0
      %v811 = vadd.f32 %v644, %v810
      %v812 = vpop.f32.mrf.mxu0
      %v813 = vadd.f32 %v646, %v812
      %814 = vmatmul.bf16.gmra.mxu0 %v736
      %v815 = vpop.f32.mrf.mxu0
      %v816 = vadd.f32 %v649, %v815
      %v817 = vpop.f32.mrf.mxu0
      %v818 = vadd.f32 %v651, %v817
      %819 = vmatmul.bf16.gmra.mxu0 %v738
      %v820 = vpop.f32.mrf.mxu0
      %v821 = vadd.f32 %v654, %v820
      %v822 = vpop.f32.mrf.mxu0
      %v823 = vadd.f32 %v656, %v822
      %824 = vmatmul.bf16.gmra.mxu0 %v740
      %v825 = vpop.f32.mrf.mxu0
      %v826 = vadd.f32 %v659, %v825
      %v827 = vpop.f32.mrf.mxu0
      %v828 = vadd.f32 %v661, %v827
      %829 = vmatmul.bf16.gmra.mxu0 %v742
      %v830 = vpop.f32.mrf.mxu0
      %v831 = vadd.f32 %v664, %v830
      %v832 = vpop.f32.mrf.mxu0
      %v833 = vadd.f32 %v666, %v832
      %834 = vmatmul.bf16.gmra.mxu0 %v744
      %v835 = vpop.f32.mrf.mxu0
      %v836 = vadd.f32 %v669, %v835
      %v837 = vpop.f32.mrf.mxu0
      %v838 = vadd.f32 %v671, %v837
      %839 = vmatmul.bf16.gmra.mxu0 %v746
      %v840 = vpop.f32.mrf.mxu0
      %v841 = vadd.f32 %v674, %v840
      %v842 = vpop.f32.mrf.mxu0
      %v843 = vadd.f32 %v676, %v842
      %844 = vmatmul.bf16.gmra.mxu0 %v748
      %v845 = vpop.f32.mrf.mxu0
      %v846 = vadd.f32 %v679, %v845
      %v847 = vpop.f32.mrf.mxu0
      %v848 = vadd.f32 %v681, %v847
      %849 = vmatmul.bf16.gmra.mxu0 %v750
      %v850 = vpop.f32.mrf.mxu0
      %v851 = vadd.f32 %v684, %v850
      %v852 = vpop.f32.mrf.mxu0
      %v853 = vadd.f32 %v686, %v852
      %854 = vmatmul.bf16.gmra.mxu0 %v752
      %v855 = vpop.f32.mrf.mxu0
      %v856 = vadd.f32 %v689, %v855
      %v857 = vpop.f32.mrf.mxu0
      %v858 = vadd.f32 %v691, %v857
      %859 = vmatmul.bf16.gmra.mxu0 %v754
      %v860 = vpop.f32.mrf.mxu0
      %v861 = vadd.f32 %v694, %v860
      %v862 = vpop.f32.mrf.mxu0
      %v863 = vadd.f32 %v696, %v862
      %864 = vmatmul.bf16.gmra.mxu0 %v756
      %v865 = vpop.f32.mrf.mxu0
      %v866 = vadd.f32 %v699, %v865
      %v867 = vpop.f32.mrf.mxu0
      %v868 = vadd.f32 %v701, %v867
      %869 = vmatmul.bf16.gmra.mxu0 %v758
      %v870 = vpop.f32.mrf.mxu0
      %v871 = vadd.f32 %v704, %v870
      %v872 = vpop.f32.mrf.mxu0
      %v873 = vadd.f32 %v706, %v872
      %874 = vmatmul.bf16.gmra.mxu0 %v761
      %v875 = vpop.f32.mrf.mxu0
      %v876 = vadd.f32 %v709, %v875
      %v877 = vpop.f32.mrf.mxu0
      %878 = vdwg.mxu0
      %v879 = vld [vmem:[%s197 + $0x4] sm:$0xf]
      %v880 = vld [vmem:[%s197 + $0x8] sm:$0xf]
      %v881 = vld [vmem:[%s197 + $0xc] sm:$0xf]
      %v882 = vld [vmem:[%s197 + $0x10] sm:$0xf]
      %v883 = vld [vmem:[%s197 + $0x14] sm:$0xf]
      %v884 = vld [vmem:[%s197 + $0x18] sm:$0xf]
      %v885 = vld [vmem:[%s197 + $0x1c] sm:$0xf]
      %v886 = vld [vmem:[%s197 + $0x20] sm:$0xf]
      %v887 = vld [vmem:[%s197 + $0x24] sm:$0xf]
      %v888 = vld [vmem:[%s197 + $0x28] sm:$0xf]
      %v889 = vld [vmem:[%s197 + $0x2c] sm:$0xf]
      %v890 = vld [vmem:[%s197 + $0x30] sm:$0xf]
      %v891 = vld [vmem:[%s197 + $0x34] sm:$0xf]
      %v892 = vld [vmem:[%s197 + $0x38] sm:$0xf]
      %v893 = vld [vmem:[%s197 + $0x3c] sm:$0xf]
      %v894 = vld [vmem:[%s197 + $0x40] sm:$0xf]
      %v895 = vld [vmem:[%s197 + $0x44] sm:$0xf]
      %v896 = vld [vmem:[%s197 + $0x48] sm:$0xf]
      %v897 = vld [vmem:[%s197 + $0x4c] sm:$0xf]
      %v898 = vld [vmem:[%s197 + $0x50] sm:$0xf]
      %v899 = vld [vmem:[%s197 + $0x54] sm:$0xf]
      %v900 = vld [vmem:[%s197 + $0x58] sm:$0xf]
      %v901 = vld [vmem:[%s197 + $0x5c] sm:$0xf]
      %v902 = vld [vmem:[%s197 + $0x60] sm:$0xf]
      %v903 = vld [vmem:[%s197 + $0x64] sm:$0xf]
      %v904 = vld [vmem:[%s197 + $0x68] sm:$0xf]
      %v905 = vld [vmem:[%s197 + $0x6c] sm:$0xf]
      %v906 = vld [vmem:[%s197 + $0x70] sm:$0xf]
      %v907 = vld [vmem:[%s197 + $0x74] sm:$0xf]
      %v908 = vld [vmem:[%s197 + $0x78] sm:$0xf]
      %v909 = vld [vmem:[%s197 + $0x7c] sm:$0xf]
      %v910 = vld [vmem:[%s197 + $0x80] sm:$0xf]
      %v911 = vld [vmem:[%s197 + $0x84] sm:$0xf]
      %v912 = vld [vmem:[%s197 + $0x88] sm:$0xf]
      %v913 = vld [vmem:[%s197 + $0x8c] sm:$0xf]
      %v914 = vld [vmem:[%s197 + $0x90] sm:$0xf]
      %v915 = vld [vmem:[%s197 + $0x94] sm:$0xf]
      %v916 = vld [vmem:[%s197 + $0x98] sm:$0xf]
      %v917 = vld [vmem:[%s197 + $0x9c] sm:$0xf]
      %v918 = vld [vmem:[%s197 + $0xa0] sm:$0xf]
      %v919 = vld [vmem:[%s197 + $0xa4] sm:$0x7]
      %s920 = scalar_lea.vmem %s1, 16
      %v921 = vld [vmem:[%s920] sm:$0xf]
      %v922 = vld [vmem:[%s920 + $0x4] sm:$0x3]
      %v964 = vunpack.c.l.b16 %v879
      %v965 = vunpack.c.l.b16 %v880
      %v966 = vunpack.c.l.b16 %v881
      %v967 = vunpack.c.l.b16 %v882
      %v968 = vunpack.c.l.b16 %v883
      %v969 = vunpack.c.l.b16 %v884
      %v970 = vunpack.c.l.b16 %v885
      %v971 = vunpack.c.l.b16 %v886
      %v972 = vunpack.c.l.b16 %v887
      %v973 = vunpack.c.l.b16 %v888
      %v974 = vunpack.c.l.b16 %v889
      %v975 = vunpack.c.l.b16 %v890
      %v976 = vunpack.c.l.b16 %v891
      %v977 = vunpack.c.l.b16 %v892
      %v978 = vunpack.c.l.b16 %v893
      %v979 = vunpack.c.l.b16 %v894
      %v980 = vunpack.c.l.b16 %v895
      %v981 = vunpack.c.l.b16 %v896
      %v982 = vunpack.c.l.b16 %v897
      %v983 = vunpack.c.l.b16 %v898
      %v984 = vunpack.c.l.b16 %v899
      %v985 = vunpack.c.l.b16 %v900
      %v986 = vunpack.c.l.b16 %v901
      %v987 = vunpack.c.l.b16 %v902
      %v988 = vunpack.c.l.b16 %v903
      %v989 = vunpack.c.l.b16 %v904
      %v990 = vunpack.c.l.b16 %v905
      %v991 = vunpack.c.l.b16 %v906
      %v992 = vunpack.c.l.b16 %v907
      %v993 = vunpack.c.l.b16 %v908
      %v994 = vunpack.c.l.b16 %v909
      %v995 = vunpack.c.l.b16 %v910
      %v996 = vunpack.c.l.b16 %v911
      %v997 = vunpack.c.l.b16 %v912
      %v998 = vunpack.c.l.b16 %v913
      %v999 = vunpack.c.l.b16 %v914
      %v1000 = vunpack.c.l.b16 %v915
      %v1001 = vunpack.c.l.b16 %v916
      %v1002 = vunpack.c.l.b16 %v917
      %v1003 = vunpack.c.l.b16 %v918
      %v1004 = vunpack.c.l.b16 %v919
      %v1005 = vpack.c.b16 %v965, %v964
      %v1006 = vpack.c.b16 %v967, %v966
      %v1007 = vpack.c.b16 %v969, %v968
      %v1008 = vpack.c.b16 %v971, %v970
      %v1009 = vpack.c.b16 %v973, %v972
      %v1010 = vpack.c.b16 %v975, %v974
      %v1011 = vpack.c.b16 %v977, %v976
      %v1012 = vpack.c.b16 %v979, %v978
      %v1013 = vpack.c.b16 %v981, %v980
      %v1014 = vpack.c.b16 %v983, %v982
      %v1015 = vpack.c.b16 %v985, %v984
      %v1016 = vpack.c.b16 %v987, %v986
      %v1017 = vpack.c.b16 %v989, %v988
      %v1018 = vpack.c.b16 %v991, %v990
      %v1019 = vpack.c.b16 %v993, %v992
      %v1020 = vpack.c.b16 %v995, %v994
      %v1021 = vpack.c.b16 %v997, %v996
      %v1022 = vpack.c.b16 %v999, %v998
      %v1023 = vpack.c.b16 %v1001, %v1000
      %v1024 = vpack.c.b16 %v1003, %v1002
      %v1025 = vpack.c.b16 %v1004, %v1004
      %v1027 = vshrl.u32 %v1005, 16
      %v1029 = vshll.u32 %v1005, 16
      %v1031 = vrot.slane %v1029, 1
      %v1032 = vor.u32 %v1027, %v1031
      %v1034 = vshll.u32 %v1006, 16
      %v1036 = vrot.slane %v1034, 1
      %v1037 = vsel %vm358, %v1032, %v1036
      %v1038 = vshrl.u32 %v1006, 16
      %v1040 = vor.u32 %v1038, %v1036
      %v1042 = vshll.u32 %v1007, 16
      %v1044 = vrot.slane %v1042, 1
      %v1045 = vsel %vm358, %v1040, %v1044
      %v1046 = vshrl.u32 %v1007, 16
      %v1048 = vor.u32 %v1046, %v1044
      %v1050 = vshll.u32 %v1008, 16
      %v1052 = vrot.slane %v1050, 1
      %v1053 = vsel %vm358, %v1048, %v1052
      %v1054 = vshrl.u32 %v1008, 16
      %v1056 = vor.u32 %v1054, %v1052
      %v1058 = vshll.u32 %v1009, 16
      %v1060 = vrot.slane %v1058, 1
      %v1061 = vsel %vm358, %v1056, %v1060
      %v1062 = vshrl.u32 %v1009, 16
      %v1064 = vor.u32 %v1062, %v1060
      %v1066 = vshll.u32 %v1010, 16
      %v1068 = vrot.slane %v1066, 1
      %v1069 = vsel %vm358, %v1064, %v1068
      %v1070 = vshrl.u32 %v1010, 16
      %v1072 = vor.u32 %v1070, %v1068
      %v1074 = vshll.u32 %v1011, 16
      %v1076 = vrot.slane %v1074, 1
      %v1077 = vsel %vm358, %v1072, %v1076
      %v1078 = vshrl.u32 %v1011, 16
      %v1080 = vor.u32 %v1078, %v1076
      %v1082 = vshll.u32 %v1012, 16
      %v1084 = vrot.slane %v1082, 1
      %v1085 = vsel %vm358, %v1080, %v1084
      %v1086 = vshrl.u32 %v1012, 16
      %v1088 = vor.u32 %v1086, %v1084
      %v1090 = vshll.u32 %v1013, 16
      %v1092 = vrot.slane %v1090, 1
      %v1093 = vsel %vm358, %v1088, %v1092
      %v1094 = vshrl.u32 %v1013, 16
      %v1096 = vor.u32 %v1094, %v1092
      %v1098 = vshll.u32 %v1014, 16
      %v1100 = vrot.slane %v1098, 1
      %v1101 = vsel %vm358, %v1096, %v1100
      %v1102 = vshrl.u32 %v1014, 16
      %v1104 = vor.u32 %v1102, %v1100
      %v1106 = vshll.u32 %v1015, 16
      %v1108 = vrot.slane %v1106, 1
      %v1109 = vsel %vm358, %v1104, %v1108
      %v1110 = vshrl.u32 %v1015, 16
      %v1112 = vor.u32 %v1110, %v1108
      %v1114 = vshll.u32 %v1016, 16
      %v1116 = vrot.slane %v1114, 1
      %v1117 = vsel %vm358, %v1112, %v1116
      %v1118 = vshrl.u32 %v1016, 16
      %v1120 = vor.u32 %v1118, %v1116
      %v1122 = vshll.u32 %v1017, 16
      %v1124 = vrot.slane %v1122, 1
      %v1125 = vsel %vm358, %v1120, %v1124
      %v1126 = vshrl.u32 %v1017, 16
      %v1128 = vor.u32 %v1126, %v1124
      %v1130 = vshll.u32 %v1018, 16
      %v1132 = vrot.slane %v1130, 1
      %v1133 = vsel %vm358, %v1128, %v1132
      %v1134 = vshrl.u32 %v1018, 16
      %v1136 = vor.u32 %v1134, %v1132
      %v1138 = vshll.u32 %v1019, 16
      %v1140 = vrot.slane %v1138, 1
      %v1141 = vsel %vm358, %v1136, %v1140
      %v1142 = vshrl.u32 %v1019, 16
      %v1144 = vor.u32 %v1142, %v1140
      %v1146 = vshll.u32 %v1020, 16
      %v1148 = vrot.slane %v1146, 1
      %v1149 = vsel %vm358, %v1144, %v1148
      %v1150 = vshrl.u32 %v1020, 16
      %v1152 = vor.u32 %v1150, %v1148
      %v1154 = vshll.u32 %v1021, 16
      %v1156 = vrot.slane %v1154, 1
      %v1157 = vsel %vm358, %v1152, %v1156
      %v1158 = vshrl.u32 %v1021, 16
      %v1160 = vor.u32 %v1158, %v1156
      %v1162 = vshll.u32 %v1022, 16
      %v1164 = vrot.slane %v1162, 1
      %v1165 = vsel %vm358, %v1160, %v1164
      %v1166 = vshrl.u32 %v1022, 16
      %v1168 = vor.u32 %v1166, %v1164
      %v1170 = vshll.u32 %v1023, 16
      %v1172 = vrot.slane %v1170, 1
      %v1173 = vsel %vm358, %v1168, %v1172
      %v1174 = vshrl.u32 %v1023, 16
      %v1176 = vor.u32 %v1174, %v1172
      %v1178 = vshll.u32 %v1024, 16
      %v1180 = vrot.slane %v1178, 1
      %v1181 = vsel %vm358, %v1176, %v1180
      %v1182 = vshrl.u32 %v1024, 16
      %v1184 = vor.u32 %v1182, %v1180
      %v1186 = vshll.u32 %v1025, 16
      %v1188 = vrot.slane %v1186, 1
      %v1189 = vsel %vm358, %v1184, %v1188
      %v1190 = vshrl.u32 %v1025, 16
      %v1192 = vor.u32 %v1190, %v1188
      %v1195 = vunpack.c.l.b16 %v921
      %v1196 = vunpack.c.l.b16 %v922
      %v1197 = vpack.c.b16 %v1196, %v1195
      %v1199 = vsel %vm531, %v1037, 0
      %v1202 = vsel %vm531, %v1045, 0
      %v1205 = vsel %vm531, %v1053, 0
      %v1208 = vsel %vm531, %v1061, 0
      %v1211 = vsel %vm531, %v1069, 0
      %v1214 = vsel %vm531, %v1077, 0
      %v1217 = vsel %vm531, %v1085, 0
      %v1220 = vsel %vm531, %v1093, 0
      %v1223 = vsel %vm531, %v1101, 0
      %v1226 = vsel %vm531, %v1109, 0
      %v1229 = vsel %vm531, %v1117, 0
      %v1232 = vsel %vm531, %v1125, 0
      %v1235 = vsel %vm531, %v1133, 0
      %v1238 = vsel %vm531, %v1141, 0
      %v1241 = vsel %vm531, %v1149, 0
      %v1244 = vsel %vm531, %v1157, 0
      %v1247 = vsel %vm531, %v1165, 0
      %v1250 = vsel %vm531, %v1173, 0
      %v1253 = vsel %vm531, %v1181, 0
      %v1256 = vsel %vm531, %v1189, 0
      %v1259 = vsel %vm531, %v1192, 0
      %v1262 = vsel %vm595, %v1197, 0
      %1264 = vmatpush.bf16.msra.mxu0 0
      %1265 = vmatpush.bf16.msra.mxu0 0
      %1266 = vmatpush.bf16.msra.mxu0 0
      %1267 = vmatpush.bf16.msra.mxu0 0
      %1268 = vmatpush.bf16.msra.mxu0 0
      %1269 = vmatpush.bf16.msra.mxu0 0
      %1270 = vmatpush.bf16.msra.mxu0 0
      %1271 = vmatpush.bf16.msra.mxu0 %v1262
      %1272 = vmatmul.bf16.gmra.mxu0 %v1199
      %v1273 = vpop.f32.mrf.mxu0
      %v1274 = vadd.f32 0.0, %v1273
      %v1275 = vpop.f32.mrf.mxu0
      %v1276 = vadd.f32 0.0, %v1275
      %1277 = vmatmul.bf16.gmra.mxu0 %v1202
      %v1278 = vpop.f32.mrf.mxu0
      %v1279 = vadd.f32 0.0, %v1278
      %v1280 = vpop.f32.mrf.mxu0
      %v1281 = vadd.f32 0.0, %v1280
      %1282 = vmatmul.bf16.gmra.mxu0 %v1205
      %v1283 = vpop.f32.mrf.mxu0
      %v1284 = vadd.f32 0.0, %v1283
      %v1285 = vpop.f32.mrf.mxu0
      %v1286 = vadd.f32 0.0, %v1285
      %1287 = vmatmul.bf16.gmra.mxu0 %v1208
      %v1288 = vpop.f32.mrf.mxu0
      %v1289 = vadd.f32 0.0, %v1288
      %v1290 = vpop.f32.mrf.mxu0
      %v1291 = vadd.f32 0.0, %v1290
      %1292 = vmatmul.bf16.gmra.mxu0 %v1211
      %v1293 = vpop.f32.mrf.mxu0
      %v1294 = vadd.f32 0.0, %v1293
      %v1295 = vpop.f32.mrf.mxu0
      %v1296 = vadd.f32 0.0, %v1295
      %1297 = vmatmul.bf16.gmra.mxu0 %v1214
      %v1298 = vpop.f32.mrf.mxu0
      %v1299 = vadd.f32 0.0, %v1298
      %v1300 = vpop.f32.mrf.mxu0
      %v1301 = vadd.f32 0.0, %v1300
      %1302 = vmatmul.bf16.gmra.mxu0 %v1217
      %v1303 = vpop.f32.mrf.mxu0
      %v1304 = vadd.f32 0.0, %v1303
      %v1305 = vpop.f32.mrf.mxu0
      %v1306 = vadd.f32 0.0, %v1305
      %1307 = vmatmul.bf16.gmra.mxu0 %v1220
      %v1308 = vpop.f32.mrf.mxu0
      %v1309 = vadd.f32 0.0, %v1308
      %v1310 = vpop.f32.mrf.mxu0
      %v1311 = vadd.f32 0.0, %v1310
      %1312 = vmatmul.bf16.gmra.mxu0 %v1223
      %v1313 = vpop.f32.mrf.mxu0
      %v1314 = vadd.f32 0.0, %v1313
      %v1315 = vpop.f32.mrf.mxu0
      %v1316 = vadd.f32 0.0, %v1315
      %1317 = vmatmul.bf16.gmra.mxu0 %v1226
      %v1318 = vpop.f32.mrf.mxu0
      %v1319 = vadd.f32 0.0, %v1318
      %v1320 = vpop.f32.mrf.mxu0
      %v1321 = vadd.f32 0.0, %v1320
      %1322 = vmatmul.bf16.gmra.mxu0 %v1229
      %v1323 = vpop.f32.mrf.mxu0
      %v1324 = vadd.f32 0.0, %v1323
      %v1325 = vpop.f32.mrf.mxu0
      %v1326 = vadd.f32 0.0, %v1325
      %1327 = vmatmul.bf16.gmra.mxu0 %v1232
      %v1328 = vpop.f32.mrf.mxu0
      %v1329 = vadd.f32 0.0, %v1328
      %v1330 = vpop.f32.mrf.mxu0
      %v1331 = vadd.f32 0.0, %v1330
      %1332 = vmatmul.bf16.gmra.mxu0 %v1235
      %v1333 = vpop.f32.mrf.mxu0
      %v1334 = vadd.f32 0.0, %v1333
      %v1335 = vpop.f32.mrf.mxu0
      %v1336 = vadd.f32 0.0, %v1335
      %1337 = vmatmul.bf16.gmra.mxu0 %v1238
      %v1338 = vpop.f32.mrf.mxu0
      %v1339 = vadd.f32 0.0, %v1338
      %v1340 = vpop.f32.mrf.mxu0
      %v1341 = vadd.f32 0.0, %v1340
      %1342 = vmatmul.bf16.gmra.mxu0 %v1241
      %v1343 = vpop.f32.mrf.mxu0
      %v1344 = vadd.f32 0.0, %v1343
      %v1345 = vpop.f32.mrf.mxu0
      %v1346 = vadd.f32 0.0, %v1345
      %1347 = vmatmul.bf16.gmra.mxu0 %v1244
      %v1348 = vpop.f32.mrf.mxu0
      %v1349 = vadd.f32 0.0, %v1348
      %v1350 = vpop.f32.mrf.mxu0
      %v1351 = vadd.f32 0.0, %v1350
      %1352 = vmatmul.bf16.gmra.mxu0 %v1247
      %v1353 = vpop.f32.mrf.mxu0
      %v1354 = vadd.f32 0.0, %v1353
      %v1355 = vpop.f32.mrf.mxu0
      %v1356 = vadd.f32 0.0, %v1355
      %1357 = vmatmul.bf16.gmra.mxu0 %v1250
      %v1358 = vpop.f32.mrf.mxu0
      %v1359 = vadd.f32 0.0, %v1358
      %v1360 = vpop.f32.mrf.mxu0
      %v1361 = vadd.f32 0.0, %v1360
      %1362 = vmatmul.bf16.gmra.mxu0 %v1253
      %v1363 = vpop.f32.mrf.mxu0
      %v1364 = vadd.f32 0.0, %v1363
      %v1365 = vpop.f32.mrf.mxu0
      %v1366 = vadd.f32 0.0, %v1365
      %1367 = vmatmul.bf16.gmra.mxu0 %v1256
      %v1368 = vpop.f32.mrf.mxu0
      %v1369 = vadd.f32 0.0, %v1368
      %v1370 = vpop.f32.mrf.mxu0
      %v1371 = vadd.f32 0.0, %v1370
      %1372 = vmatmul.bf16.gmra.mxu0 %v1259
      %v1373 = vpop.f32.mrf.mxu0
      %v1374 = vadd.f32 0.0, %v1373
      %v1375 = vpop.f32.mrf.mxu0
      %1376 = vdwg.mxu0
      %v1377 = vadd.f32 %v776, %v1274
      %v1378 = vadd.f32 %v778, %v1276
      %v1379 = vadd.f32 %v781, %v1279
      %v1380 = vadd.f32 %v783, %v1281
      %v1381 = vadd.f32 %v786, %v1284
      %v1382 = vadd.f32 %v788, %v1286
      %v1383 = vadd.f32 %v791, %v1289
      %v1384 = vadd.f32 %v793, %v1291
      %v1385 = vadd.f32 %v796, %v1294
      %v1386 = vadd.f32 %v798, %v1296
      %v1387 = vadd.f32 %v801, %v1299
      %v1388 = vadd.f32 %v803, %v1301
      %v1389 = vadd.f32 %v806, %v1304
      %v1390 = vadd.f32 %v808, %v1306
      %v1391 = vadd.f32 %v811, %v1309
      %v1392 = vadd.f32 %v813, %v1311
      %v1393 = vadd.f32 %v816, %v1314
      %v1394 = vadd.f32 %v818, %v1316
      %v1395 = vadd.f32 %v821, %v1319
      %v1396 = vadd.f32 %v823, %v1321
      %v1397 = vadd.f32 %v826, %v1324
      %v1398 = vadd.f32 %v828, %v1326
      %v1399 = vadd.f32 %v831, %v1329
      %v1400 = vadd.f32 %v833, %v1331
      %v1401 = vadd.f32 %v836, %v1334
      %v1402 = vadd.f32 %v838, %v1336
      %v1403 = vadd.f32 %v841, %v1339
      %v1404 = vadd.f32 %v843, %v1341
      %v1405 = vadd.f32 %v846, %v1344
      %v1406 = vadd.f32 %v848, %v1346
      %v1407 = vadd.f32 %v851, %v1349
      %v1408 = vadd.f32 %v853, %v1351
      %v1409 = vadd.f32 %v856, %v1354
      %v1410 = vadd.f32 %v858, %v1356
      %v1411 = vadd.f32 %v861, %v1359
      %v1412 = vadd.f32 %v863, %v1361
      %v1413 = vadd.f32 %v866, %v1364
      %v1414 = vadd.f32 %v868, %v1366
      %v1415 = vadd.f32 %v871, %v1369
      %v1416 = vadd.f32 %v873, %v1371
      %v1417 = vadd.f32 %v876, %v1374
      %v1418 = vld [vmem:[%s197 + $0x4] sm:$0xe]
      %s1419 = scalar_lea.vmem %s1, 24
      %v1420 = vld [vmem:[%s1419] sm:$0xf]
      %v1421 = vld [vmem:[%s1419 + $0x4] sm:$0x3]
      %v1423 = vunpack.c.l.b16 %v1418
      %v1424 = vpack.c.b16 %v965, %v1423
      %vm1425 = vcmask 1046528
      %v1426 = vrot.slane %v1424, 1
      %v1427 = vrot.slane %v1006, 1
      %v1428 = vsel %vm1425, %v1426, %v1427
      %v1429 = vrot.slane %v1007, 1
      %v1430 = vsel %vm1425, %v1427, %v1429
      %v1431 = vrot.slane %v1008, 1
      %v1432 = vsel %vm1425, %v1429, %v1431
      %v1433 = vrot.slane %v1009, 1
      %v1434 = vsel %vm1425, %v1431, %v1433
      %v1435 = vrot.slane %v1010, 1
      %v1436 = vsel %vm1425, %v1433, %v1435
      %v1437 = vrot.slane %v1011, 1
      %v1438 = vsel %vm1425, %v1435, %v1437
      %v1439 = vrot.slane %v1012, 1
      %v1440 = vsel %vm1425, %v1437, %v1439
      %v1441 = vrot.slane %v1013, 1
      %v1442 = vsel %vm1425, %v1439, %v1441
      %v1443 = vrot.slane %v1014, 1
      %v1444 = vsel %vm1425, %v1441, %v1443
      %v1445 = vrot.slane %v1015, 1
      %v1446 = vsel %vm1425, %v1443, %v1445
      %v1447 = vrot.slane %v1016, 1
      %v1448 = vsel %vm1425, %v1445, %v1447
      %v1449 = vrot.slane %v1017, 1
      %v1450 = vsel %vm1425, %v1447, %v1449
      %v1451 = vrot.slane %v1018, 1
      %v1452 = vsel %vm1425, %v1449, %v1451
      %v1453 = vrot.slane %v1019, 1
      %v1454 = vsel %vm1425, %v1451, %v1453
      %v1455 = vrot.slane %v1020, 1
      %v1456 = vsel %vm1425, %v1453, %v1455
      %v1457 = vrot.slane %v1021, 1
      %v1458 = vsel %vm1425, %v1455, %v1457
      %v1459 = vrot.slane %v1022, 1
      %v1460 = vsel %vm1425, %v1457, %v1459
      %v1461 = vrot.slane %v1023, 1
      %v1462 = vsel %vm1425, %v1459, %v1461
      %v1463 = vrot.slane %v1024, 1
      %v1464 = vsel %vm1425, %v1461, %v1463
      %v1465 = vrot.slane %v1025, 1
      %v1466 = vsel %vm1425, %v1463, %v1465
      %v1469 = vunpack.c.l.b16 %v1420
      %v1470 = vunpack.c.l.b16 %v1421
      %v1471 = vpack.c.b16 %v1470, %v1469
      %v1473 = vsel %vm531, %v1428, 0
      %v1476 = vsel %vm531, %v1430, 0
      %v1479 = vsel %vm531, %v1432, 0
      %v1482 = vsel %vm531, %v1434, 0
      %v1485 = vsel %vm531, %v1436, 0
      %v1488 = vsel %vm531, %v1438, 0
      %v1491 = vsel %vm531, %v1440, 0
      %v1494 = vsel %vm531, %v1442, 0
      %v1497 = vsel %vm531, %v1444, 0
      %v1500 = vsel %vm531, %v1446, 0
      %v1503 = vsel %vm531, %v1448, 0
      %v1506 = vsel %vm531, %v1450, 0
      %v1509 = vsel %vm531, %v1452, 0
      %v1512 = vsel %vm531, %v1454, 0
      %v1515 = vsel %vm531, %v1456, 0
      %v1518 = vsel %vm531, %v1458, 0
      %v1521 = vsel %vm531, %v1460, 0
      %v1524 = vsel %vm531, %v1462, 0
      %v1527 = vsel %vm531, %v1464, 0
      %v1530 = vsel %vm531, %v1466, 0
      %v1533 = vsel %vm531, %v1465, 0
      %v1536 = vsel %vm595, %v1471, 0
      %1538 = vmatpush.bf16.msra.mxu0 0
      %1539 = vmatpush.bf16.msra.mxu0 0
      %1540 = vmatpush.bf16.msra.mxu0 0
      %1541 = vmatpush.bf16.msra.mxu0 0
      %1542 = vmatpush.bf16.msra.mxu0 0
      %1543 = vmatpush.bf16.msra.mxu0 0
      %1544 = vmatpush.bf16.msra.mxu0 0
      %1545 = vmatpush.bf16.msra.mxu0 %v1536
      %1546 = vmatmul.bf16.gmra.mxu0 %v1473
      %v1547 = vpop.f32.mrf.mxu0
      %v1548 = vadd.f32 0.0, %v1547
      %v1549 = vpop.f32.mrf.mxu0
      %v1550 = vadd.f32 0.0, %v1549
      %1551 = vmatmul.bf16.gmra.mxu0 %v1476
      %v1552 = vpop.f32.mrf.mxu0
      %v1553 = vadd.f32 0.0, %v1552
      %v1554 = vpop.f32.mrf.mxu0
      %v1555 = vadd.f32 0.0, %v1554
      %1556 = vmatmul.bf16.gmra.mxu0 %v1479
      %v1557 = vpop.f32.mrf.mxu0
      %v1558 = vadd.f32 0.0, %v1557
      %v1559 = vpop.f32.mrf.mxu0
      %v1560 = vadd.f32 0.0, %v1559
      %1561 = vmatmul.bf16.gmra.mxu0 %v1482
      %v1562 = vpop.f32.mrf.mxu0
      %v1563 = vadd.f32 0.0, %v1562
      %v1564 = vpop.f32.mrf.mxu0
      %v1565 = vadd.f32 0.0, %v1564
      %1566 = vmatmul.bf16.gmra.mxu0 %v1485
      %v1567 = vpop.f32.mrf.mxu0
      %v1568 = vadd.f32 0.0, %v1567
      %v1569 = vpop.f32.mrf.mxu0
      %v1570 = vadd.f32 0.0, %v1569
      %1571 = vmatmul.bf16.gmra.mxu0 %v1488
      %v1572 = vpop.f32.mrf.mxu0
      %v1573 = vadd.f32 0.0, %v1572
      %v1574 = vpop.f32.mrf.mxu0
      %v1575 = vadd.f32 0.0, %v1574
      %1576 = vmatmul.bf16.gmra.mxu0 %v1491
      %v1577 = vpop.f32.mrf.mxu0
      %v1578 = vadd.f32 0.0, %v1577
      %v1579 = vpop.f32.mrf.mxu0
      %v1580 = vadd.f32 0.0, %v1579
      %1581 = vmatmul.bf16.gmra.mxu0 %v1494
      %v1582 = vpop.f32.mrf.mxu0
      %v1583 = vadd.f32 0.0, %v1582
      %v1584 = vpop.f32.mrf.mxu0
      %v1585 = vadd.f32 0.0, %v1584
      %1586 = vmatmul.bf16.gmra.mxu0 %v1497
      %v1587 = vpop.f32.mrf.mxu0
      %v1588 = vadd.f32 0.0, %v1587
      %v1589 = vpop.f32.mrf.mxu0
      %v1590 = vadd.f32 0.0, %v1589
      %1591 = vmatmul.bf16.gmra.mxu0 %v1500
      %v1592 = vpop.f32.mrf.mxu0
      %v1593 = vadd.f32 0.0, %v1592
      %v1594 = vpop.f32.mrf.mxu0
      %v1595 = vadd.f32 0.0, %v1594
      %1596 = vmatmul.bf16.gmra.mxu0 %v1503
      %v1597 = vpop.f32.mrf.mxu0
      %v1598 = vadd.f32 0.0, %v1597
      %v1599 = vpop.f32.mrf.mxu0
      %v1600 = vadd.f32 0.0, %v1599
      %1601 = vmatmul.bf16.gmra.mxu0 %v1506
      %v1602 = vpop.f32.mrf.mxu0
      %v1603 = vadd.f32 0.0, %v1602
      %v1604 = vpop.f32.mrf.mxu0
      %v1605 = vadd.f32 0.0, %v1604
      %1606 = vmatmul.bf16.gmra.mxu0 %v1509
      %v1607 = vpop.f32.mrf.mxu0
      %v1608 = vadd.f32 0.0, %v1607
      %v1609 = vpop.f32.mrf.mxu0
      %v1610 = vadd.f32 0.0, %v1609
      %1611 = vmatmul.bf16.gmra.mxu0 %v1512
      %v1612 = vpop.f32.mrf.mxu0
      %v1613 = vadd.f32 0.0, %v1612
      %v1614 = vpop.f32.mrf.mxu0
      %v1615 = vadd.f32 0.0, %v1614
      %1616 = vmatmul.bf16.gmra.mxu0 %v1515
      %v1617 = vpop.f32.mrf.mxu0
      %v1618 = vadd.f32 0.0, %v1617
      %v1619 = vpop.f32.mrf.mxu0
      %v1620 = vadd.f32 0.0, %v1619
      %1621 = vmatmul.bf16.gmra.mxu0 %v1518
      %v1622 = vpop.f32.mrf.mxu0
      %v1623 = vadd.f32 0.0, %v1622
      %v1624 = vpop.f32.mrf.mxu0
      %v1625 = vadd.f32 0.0, %v1624
      %1626 = vmatmul.bf16.gmra.mxu0 %v1521
      %v1627 = vpop.f32.mrf.mxu0
      %v1628 = vadd.f32 0.0, %v1627
      %v1629 = vpop.f32.mrf.mxu0
      %v1630 = vadd.f32 0.0, %v1629
      %1631 = vmatmul.bf16.gmra.mxu0 %v1524
      %v1632 = vpop.f32.mrf.mxu0
      %v1633 = vadd.f32 0.0, %v1632
      %v1634 = vpop.f32.mrf.mxu0
      %v1635 = vadd.f32 0.0, %v1634
      %1636 = vmatmul.bf16.gmra.mxu0 %v1527
      %v1637 = vpop.f32.mrf.mxu0
      %v1638 = vadd.f32 0.0, %v1637
      %v1639 = vpop.f32.mrf.mxu0
      %v1640 = vadd.f32 0.0, %v1639
      %1641 = vmatmul.bf16.gmra.mxu0 %v1530
      %v1642 = vpop.f32.mrf.mxu0
      %v1643 = vadd.f32 0.0, %v1642
      %v1644 = vpop.f32.mrf.mxu0
      %v1645 = vadd.f32 0.0, %v1644
      %1646 = vmatmul.bf16.gmra.mxu0 %v1533
      %v1647 = vpop.f32.mrf.mxu0
      %v1648 = vadd.f32 0.0, %v1647
      %v1649 = vpop.f32.mrf.mxu0
      %1650 = vdwg.mxu0
      %v1651 = vadd.f32 %v1377, %v1548
      %v1652 = vadd.f32 %v1378, %v1550
      %v1653 = vadd.f32 %v1379, %v1553
      %v1654 = vadd.f32 %v1380, %v1555
      %v1655 = vadd.f32 %v1381, %v1558
      %v1656 = vadd.f32 %v1382, %v1560
      %v1657 = vadd.f32 %v1383, %v1563
      %v1658 = vadd.f32 %v1384, %v1565
      %v1659 = vadd.f32 %v1385, %v1568
      %v1660 = vadd.f32 %v1386, %v1570
      %v1661 = vadd.f32 %v1387, %v1573
      %v1662 = vadd.f32 %v1388, %v1575
      %v1663 = vadd.f32 %v1389, %v1578
      %v1664 = vadd.f32 %v1390, %v1580
      %v1665 = vadd.f32 %v1391, %v1583
      %v1666 = vadd.f32 %v1392, %v1585
      %v1667 = vadd.f32 %v1393, %v1588
      %v1668 = vadd.f32 %v1394, %v1590
      %v1669 = vadd.f32 %v1395, %v1593
      %v1670 = vadd.f32 %v1396, %v1595
      %v1671 = vadd.f32 %v1397, %v1598
      %v1672 = vadd.f32 %v1398, %v1600
      %v1673 = vadd.f32 %v1399, %v1603
      %v1674 = vadd.f32 %v1400, %v1605
      %v1675 = vadd.f32 %v1401, %v1608
      %v1676 = vadd.f32 %v1402, %v1610
      %v1677 = vadd.f32 %v1403, %v1613
      %v1678 = vadd.f32 %v1404, %v1615
      %v1679 = vadd.f32 %v1405, %v1618
      %v1680 = vadd.f32 %v1406, %v1620
      %v1681 = vadd.f32 %v1407, %v1623
      %v1682 = vadd.f32 %v1408, %v1625
      %v1683 = vadd.f32 %v1409, %v1628
      %v1684 = vadd.f32 %v1410, %v1630
      %v1685 = vadd.f32 %v1411, %v1633
      %v1686 = vadd.f32 %v1412, %v1635
      %v1687 = vadd.f32 %v1413, %v1638
      %v1688 = vadd.f32 %v1414, %v1640
      %v1689 = vadd.f32 %v1415, %v1643
      %v1690 = vadd.f32 %v1416, %v1645
      %v1691 = vadd.f32 %v1417, %v1648
      %v1692 = vld [vmem:[%s2] sm:$0x1]
      %v1694 = vperm.slane %v1692, 0
      %v1696 = vadd.f32 %v1651, %v1694
      %v1697 = vadd.f32 %v1652, %v1694
      %v1698 = vadd.f32 %v1653, %v1694
      %v1699 = vadd.f32 %v1654, %v1694
      %v1700 = vadd.f32 %v1655, %v1694
      %v1701 = vadd.f32 %v1656, %v1694
      %v1702 = vadd.f32 %v1657, %v1694
      %v1703 = vadd.f32 %v1658, %v1694
      %v1704 = vadd.f32 %v1659, %v1694
      %v1705 = vadd.f32 %v1660, %v1694
      %v1706 = vadd.f32 %v1661, %v1694
      %v1707 = vadd.f32 %v1662, %v1694
      %v1708 = vadd.f32 %v1663, %v1694
      %v1709 = vadd.f32 %v1664, %v1694
      %v1710 = vadd.f32 %v1665, %v1694
      %v1711 = vadd.f32 %v1666, %v1694
      %v1712 = vadd.f32 %v1667, %v1694
      %v1713 = vadd.f32 %v1668, %v1694
      %v1714 = vadd.f32 %v1669, %v1694
      %v1715 = vadd.f32 %v1670, %v1694
      %v1716 = vadd.f32 %v1671, %v1694
      %v1717 = vadd.f32 %v1672, %v1694
      %v1718 = vadd.f32 %v1673, %v1694
      %v1719 = vadd.f32 %v1674, %v1694
      %v1720 = vadd.f32 %v1675, %v1694
      %v1721 = vadd.f32 %v1676, %v1694
      %v1722 = vadd.f32 %v1677, %v1694
      %v1723 = vadd.f32 %v1678, %v1694
      %v1724 = vadd.f32 %v1679, %v1694
      %v1725 = vadd.f32 %v1680, %v1694
      %v1726 = vadd.f32 %v1681, %v1694
      %v1727 = vadd.f32 %v1682, %v1694
      %v1728 = vadd.f32 %v1683, %v1694
      %v1729 = vadd.f32 %v1684, %v1694
      %v1730 = vadd.f32 %v1685, %v1694
      %v1731 = vadd.f32 %v1686, %v1694
      %v1732 = vadd.f32 %v1687, %v1694
      %v1733 = vadd.f32 %v1688, %v1694
      %v1734 = vadd.f32 %v1689, %v1694
      %v1735 = vadd.f32 %v1690, %v1694
      %v1736 = vadd.f32 %v1691, %v1694
      %v1737 = vmax.f32 %v1696, 0.0
      %v1738 = vmax.f32 %v1697, 0.0
      %v1739 = vmax.f32 %v1698, 0.0
      %v1740 = vmax.f32 %v1699, 0.0
      %v1741 = vmax.f32 %v1700, 0.0
      %v1742 = vmax.f32 %v1701, 0.0
      %v1743 = vmax.f32 %v1702, 0.0
      %v1744 = vmax.f32 %v1703, 0.0
      %v1745 = vmax.f32 %v1704, 0.0
      %v1746 = vmax.f32 %v1705, 0.0
      %v1747 = vmax.f32 %v1706, 0.0
      %v1748 = vmax.f32 %v1707, 0.0
      %v1749 = vmax.f32 %v1708, 0.0
      %v1750 = vmax.f32 %v1709, 0.0
      %v1751 = vmax.f32 %v1710, 0.0
      %v1752 = vmax.f32 %v1711, 0.0
      %v1753 = vmax.f32 %v1712, 0.0
      %v1754 = vmax.f32 %v1713, 0.0
      %v1755 = vmax.f32 %v1714, 0.0
      %v1756 = vmax.f32 %v1715, 0.0
      %v1757 = vmax.f32 %v1716, 0.0
      %v1758 = vmax.f32 %v1717, 0.0
      %v1759 = vmax.f32 %v1718, 0.0
      %v1760 = vmax.f32 %v1719, 0.0
      %v1761 = vmax.f32 %v1720, 0.0
      %v1762 = vmax.f32 %v1721, 0.0
      %v1763 = vmax.f32 %v1722, 0.0
      %v1764 = vmax.f32 %v1723, 0.0
      %v1765 = vmax.f32 %v1724, 0.0
      %v1766 = vmax.f32 %v1725, 0.0
      %v1767 = vmax.f32 %v1726, 0.0
      %v1768 = vmax.f32 %v1727, 0.0
      %v1769 = vmax.f32 %v1728, 0.0
      %v1770 = vmax.f32 %v1729, 0.0
      %v1771 = vmax.f32 %v1730, 0.0
      %v1772 = vmax.f32 %v1731, 0.0
      %v1773 = vmax.f32 %v1732, 0.0
      %v1774 = vmax.f32 %v1733, 0.0
      %v1775 = vmax.f32 %v1734, 0.0
      %v1776 = vmax.f32 %v1735, 0.0
      %v1777 = vmax.f32 %v1736, 0.0
      %v1778 = vpack.c.bf16 %v1737, %v1737
      %v1779 = vpack.c.bf16 %v1738, %v1738
      %v1780 = vpack.c.bf16 %v1739, %v1739
      %v1781 = vpack.c.bf16 %v1740, %v1740
      %v1782 = vpack.c.bf16 %v1741, %v1741
      %v1783 = vpack.c.bf16 %v1742, %v1742
      %v1784 = vpack.c.bf16 %v1743, %v1743
      %v1785 = vpack.c.bf16 %v1744, %v1744
      %v1786 = vpack.c.bf16 %v1745, %v1745
      %v1787 = vpack.c.bf16 %v1746, %v1746
      %v1788 = vpack.c.bf16 %v1747, %v1747
      %v1789 = vpack.c.bf16 %v1748, %v1748
      %v1790 = vpack.c.bf16 %v1749, %v1749
      %v1791 = vpack.c.bf16 %v1750, %v1750
      %v1792 = vpack.c.bf16 %v1751, %v1751
      %v1793 = vpack.c.bf16 %v1752, %v1752
      %v1794 = vpack.c.bf16 %v1753, %v1753
      %v1795 = vpack.c.bf16 %v1754, %v1754
      %v1796 = vpack.c.bf16 %v1755, %v1755
      %v1797 = vpack.c.bf16 %v1756, %v1756
      %v1798 = vpack.c.bf16 %v1757, %v1757
      %v1799 = vpack.c.bf16 %v1758, %v1758
      %v1800 = vpack.c.bf16 %v1759, %v1759
      %v1801 = vpack.c.bf16 %v1760, %v1760
      %v1802 = vpack.c.bf16 %v1761, %v1761
      %v1803 = vpack.c.bf16 %v1762, %v1762
      %v1804 = vpack.c.bf16 %v1763, %v1763
      %v1805 = vpack.c.bf16 %v1764, %v1764
      %v1806 = vpack.c.bf16 %v1765, %v1765
      %v1807 = vpack.c.bf16 %v1766, %v1766
      %v1808 = vpack.c.bf16 %v1767, %v1767
      %v1809 = vpack.c.bf16 %v1768, %v1768
      %v1810 = vpack.c.bf16 %v1769, %v1769
      %v1811 = vpack.c.bf16 %v1770, %v1770
      %v1812 = vpack.c.bf16 %v1771, %v1771
      %v1813 = vpack.c.bf16 %v1772, %v1772
      %v1814 = vpack.c.bf16 %v1773, %v1773
      %v1815 = vpack.c.bf16 %v1774, %v1774
      %v1816 = vpack.c.bf16 %v1775, %v1775
      %v1817 = vpack.c.bf16 %v1776, %v1776
      %v1818 = vpack.c.bf16 %v1777, %v1777
      %vm1819 = vcmask 257024
      %1820 = vst.msk [vmem:[%s206] sm:$0xf] %vm1819, %v1778
      %1821 = vst.msk [vmem:[%s206 + $0x4] sm:$0xf] %vm1819, %v1779
      %1822 = vst.msk [vmem:[%s206 + $0x8] sm:$0xf] %vm1819, %v1780
      %1823 = vst.msk [vmem:[%s206 + $0xc] sm:$0xf] %vm1819, %v1781
      %1824 = vst.msk [vmem:[%s206 + $0x10] sm:$0xf] %vm1819, %v1782
      %1825 = vst.msk [vmem:[%s206 + $0x14] sm:$0xf] %vm1819, %v1783
      %1826 = vst.msk [vmem:[%s206 + $0x18] sm:$0xf] %vm1819, %v1784
      %1827 = vst.msk [vmem:[%s206 + $0x1c] sm:$0xf] %vm1819, %v1785
      %1828 = vst.msk [vmem:[%s206 + $0x20] sm:$0xf] %vm1819, %v1786
      %1829 = vst.msk [vmem:[%s206 + $0x24] sm:$0xf] %vm1819, %v1787
      %1830 = vst.msk [vmem:[%s206 + $0x28] sm:$0xf] %vm1819, %v1788
      %1831 = vst.msk [vmem:[%s206 + $0x2c] sm:$0xf] %vm1819, %v1789
      %1832 = vst.msk [vmem:[%s206 + $0x30] sm:$0xf] %vm1819, %v1790
      %1833 = vst.msk [vmem:[%s206 + $0x34] sm:$0xf] %vm1819, %v1791
      %1834 = vst.msk [vmem:[%s206 + $0x38] sm:$0xf] %vm1819, %v1792
      %1835 = vst.msk [vmem:[%s206 + $0x3c] sm:$0xf] %vm1819, %v1793
      %1836 = vst.msk [vmem:[%s206 + $0x40] sm:$0xf] %vm1819, %v1794
      %1837 = vst.msk [vmem:[%s206 + $0x44] sm:$0xf] %vm1819, %v1795
      %1838 = vst.msk [vmem:[%s206 + $0x48] sm:$0xf] %vm1819, %v1796
      %1839 = vst.msk [vmem:[%s206 + $0x4c] sm:$0xf] %vm1819, %v1797
      %1840 = vst.msk [vmem:[%s206 + $0x50] sm:$0xf] %vm1819, %v1798
      %1841 = vst.msk [vmem:[%s206 + $0x54] sm:$0xf] %vm1819, %v1799
      %1842 = vst.msk [vmem:[%s206 + $0x58] sm:$0xf] %vm1819, %v1800
      %1843 = vst.msk [vmem:[%s206 + $0x5c] sm:$0xf] %vm1819, %v1801
      %1844 = vst.msk [vmem:[%s206 + $0x60] sm:$0xf] %vm1819, %v1802
      %1845 = vst.msk [vmem:[%s206 + $0x64] sm:$0xf] %vm1819, %v1803
      %1846 = vst.msk [vmem:[%s206 + $0x68] sm:$0xf] %vm1819, %v1804
      %1847 = vst.msk [vmem:[%s206 + $0x6c] sm:$0xf] %vm1819, %v1805
      %1848 = vst.msk [vmem:[%s206 + $0x70] sm:$0xf] %vm1819, %v1806
      %1849 = vst.msk [vmem:[%s206 + $0x74] sm:$0xf] %vm1819, %v1807
      %1850 = vst.msk [vmem:[%s206 + $0x78] sm:$0xf] %vm1819, %v1808
      %1851 = vst.msk [vmem:[%s206 + $0x7c] sm:$0xf] %vm1819, %v1809
      %1852 = vst.msk [vmem:[%s206 + $0x80] sm:$0xf] %vm1819, %v1810
      %1853 = vst.msk [vmem:[%s206 + $0x84] sm:$0xf] %vm1819, %v1811
      %1854 = vst.msk [vmem:[%s206 + $0x88] sm:$0xf] %vm1819, %v1812
      %1855 = vst.msk [vmem:[%s206 + $0x8c] sm:$0xf] %vm1819, %v1813
      %1856 = vst.msk [vmem:[%s206 + $0x90] sm:$0xf] %vm1819, %v1814
      %1857 = vst.msk [vmem:[%s206 + $0x94] sm:$0xf] %vm1819, %v1815
      %1858 = vst.msk [vmem:[%s206 + $0x98] sm:$0xf] %vm1819, %v1816
      %1859 = vst.msk [vmem:[%s206 + $0x9c] sm:$0xf] %vm1819, %v1817
      %vm1860 = vcmask 254976
      %1861 = vst.msk [vmem:[%s206 + $0xa0] sm:$0x3] %vm1860, %v1818
      %p1862 = scmp.lt.s32.totalorder %s18, 1
      %s1863 = scalar_select %p1862, %s18, 1
      %p1864 = scmp.lt.s32.totalorder %s19, 0
      %s1865 = scalar_select %p1864, %s19, 0
      %s1866 = smul.addr %s1865, 41
      %s1867 = smul.addr %s1863, 41
      %s1868 = sadd.s32 %s1866, %s1867
      %s1869 = smul.addr %s1868, 4
      %s1870 = scalar_lea.vmem %s3, %s1869
      // Predicated region
      $region33: #{conv_space_time_forward.3} parent=31 // pred_check
        %p1871 = pneg %p116
      $region34: #{conv_space_time_forward.3} parent=31 // pred_check_branch
        %1873 = sbr.rel (%p1871) target = $region36
      $region35: #{conv_space_time_forward.3} parent=31 // pred_region
        _
      $region36: #{conv_space_time_forward.3} parent=31 // pred_fallthru
        _
    $region32: #{conv_space_time_forward.3} parent=5 // pred_fallthru
      _
    %p1874 = scmp.le.s32.totalorder 2, %s9
    // Predicated region
    $region37: #{conv_space_time_forward.3} parent=5 // pred_check
      %p1875 = pneg %p1874
    $region38: #{conv_space_time_forward.3} parent=5 // pred_check_branch
      %1877 = sbr.rel (%p1875) target = $region40
    $region39: #{conv_space_time_forward.3} parent=5 // pred_region
      %s1878 = ssub.s32 %s9, 2
      // Predicated region
      $region41: #{conv_space_time_forward.3} parent=39 // pred_check
        %p1879 = pneg %p122
      $region42: #{conv_space_time_forward.3} parent=39 // pred_check_branch
        %1881 = sbr.rel (%p1879) target = $region44
      $region43: #{conv_space_time_forward.3} parent=39 // pred_region
        %p1882 = scmp.lt.s32.totalorder %s20, 1
        %s1883 = scalar_select %p1882, %s20, 1
        %p1884 = scmp.lt.s32.totalorder %s21, 0
        %s1885 = scalar_select %p1884, %s21, 0
        %s1886 = smul.addr %s1885, 41
        %s1887 = smul.addr %s1883, 41
        %s1888 = sadd.s32 %s1886, %s1887
        %s1889 = smul.addr %s1888, 4
        %s1890 = scalar_lea.vmem %s3, %s1889
      $region44: #{conv_space_time_forward.3} parent=39 // pred_fallthru
        _
    $region40: #{conv_space_time_forward.3} parent=5 // pred_fallthru
      _
  $region6: #{conv_space_time_forward.3} parent=0 // loop_footer
    %s13 = sadd.s32 1, %s9
  $region7: #{conv_space_time_forward.3} parent=0 // loop_footer_branch
    %8 = sbr.rel target = $region3
  $region8: #{conv_space_time_forward.3} parent=0 // loop_exit
    _

// kernel: conv_space_time_forward.4
$region0: #{conv_space_time_forward.4}
  #allocation0 [shape = 'u32[]', space=smem, size = 0x4, offset = 0x4, fixed_abs, tag = 'smem constant byte address 0x4 - core index']
  #allocation1 [shape = 'u32[72,128]{1,0:T(1,128)}', space=vmem, size = 0x9000, scoped, tag = 'internal scratch']
  %s0 = inlined_call_operand.vmem [shape: bf16[2,1,112,128], index: 0, kind: input, shape index: {}]
  %s1 = inlined_call_operand.vmem [shape: bf16[4,128,32], index: 1, kind: input, shape index: {}]
  %s2 = inlined_call_operand.vmem [shape: f32[1,32], index: 2, kind: input, shape index: {}]
  %s3 = inlined_call_operand.vmem [shape: bf16[2,1,100,32], index: 3, kind: output, shape index: {}]
  %s4 = sld [smem:[#allocation0]]
  $region45: #{conv_space_time_forward.4} parent=0
    _
  %s6 = ssub.s32 1, %s4
  %s7 = scalar_select 0, %s6, %s4
  loop: start=0, step=1, limit=4
  $region2: #{conv_space_time_forward.4} parent=0 // loop_pre_header
    _
  $region3: #{conv_space_time_forward.4} parent=0 // loop_header
    %s9 = sphi 0, %s13
    %p10 = scmp.ge.s32.totalorder %s9, 4
    %s16 = sphi 0, %s28
    %s17 = sphi 0, %s24
    %s18 = sphi 0, %s16
    %s19 = sphi 0, %s17
    %s20 = sphi 0, %s18
    %s21 = sphi 0, %s19
    %s33 = sphi 0, %s35
    %s36 = sphi 0, %s33
    %s37 = sphi 0, %s36
    %s53 = sphi 0, %s37
    %s57 = sphi 0, %s57
    %s59 = sphi 0, %s57
    %s60 = sphi 0, %s59
    %s74 = sphi 0, %s60
    %s78 = sphi 0, %s78
    %s80 = sphi 0, %s78
    %s81 = sphi 0, %s80
    %s95 = sphi 0, %s81
    %s103 = sphi 0, %s105
    %s106 = sphi 0, %s103
    %s107 = sphi 0, %s106
    %s123 = sphi 0, %s107
  $region4: #{conv_space_time_forward.4} parent=0 // loop_header_branch
    %12 = sbr.rel (%p10) target = $region8
  $region5: #{conv_space_time_forward.4} parent=0 // loop_body
    %s14 = ssub.s32 %s9, 1
    %s15 = ssub.s32 %s9, 2
    %s22 = sadd.s32 1, %s17
    %p23 = scmp.ge.s32.totalorder %s22, 1
    %s24 = scalar_select %p23, 0, %s22
    %s25 = sadd.s32 1, %s16
    %s26 = scalar_select %p23, %s25, %s16
    %p27 = scmp.ge.s32.totalorder %s26, 2
    %s28 = scalar_select %p27, 0, %s26
    %s29 = ssub.s32 %s16, %s28
    %s30 = ssub.s32 %s17, %s24
    %s31 = sor.u32 %s29, %s30
    %p32 = scmp.eq.s32.totalorder %s31, 0
    %s34 = sadd.s32 %s33, 1
    %s35 = scalar_select %p32, %s33, %s34
    %p38 = pneg %p32
    %p39 = scmp.eq.s32.totalorder %s9, 1
    %p40 = por %p38, %p39
    %p41 = scmp.ne.s32.totalorder %s33, %s36
    %p42 = scmp.eq.s32.totalorder %s9, 0
    %p43 = por %p41, %p42
    %p44 = scmp.ne.s32.totalorder %s33, %s36
    %p45 = scmp.eq.s32.totalorder %s14, 1
    %p46 = por %p44, %p45
    %p47 = scmp.ne.s32.totalorder %s36, %s37
    %p48 = scmp.eq.s32.totalorder %s14, 0
    %p49 = por %p47, %p48
    %p50 = scmp.ne.s32.totalorder %s36, %s37
    %p51 = scmp.eq.s32.totalorder %s15, 1
    %p52 = por %p50, %p51
    %p54 = scmp.ne.s32.totalorder %s37, %s53
    %p55 = scmp.eq.s32.totalorder %s15, 0
    %p56 = por %p54, %p55
    %s58 = sadd.s32 %s57, 1
    %p61 = scmp.eq.s32.totalorder %s9, 1
    %p62 = scmp.ne.s32.totalorder %s57, %s59
    %p63 = scmp.eq.s32.totalorder %s9, 0
    %p64 = por %p62, %p63
    %p65 = scmp.ne.s32.totalorder %s57, %s59
    %p66 = scmp.eq.s32.totalorder %s14, 1
    %p67 = por %p65, %p66
    %p68 = scmp.ne.s32.totalorder %s59, %s60
    %p69 = scmp.eq.s32.totalorder %s14, 0
    %p70 = por %p68, %p69
    %p71 = scmp.ne.s32.totalorder %s59, %s60
    %p72 = scmp.eq.s32.totalorder %s15, 1
    %p73 = por %p71, %p72
    %p75 = scmp.ne.s32.totalorder %s60, %s74
    %p76 = scmp.eq.s32.totalorder %s15, 0
    %p77 = por %p75, %p76
    %s79 = sadd.s32 %s78, 1
    %p82 = scmp.eq.s32.totalorder %s9, 1
    %p83 = scmp.ne.s32.totalorder %s78, %s80
    %p84 = scmp.eq.s32.totalorder %s9, 0
    %p85 = por %p83, %p84
    %p86 = scmp.ne.s32.totalorder %s78, %s80
    %p87 = scmp.eq.s32.totalorder %s14, 1
    %p88 = por %p86, %p87
    %p89 = scmp.ne.s32.totalorder %s80, %s81
    %p90 = scmp.eq.s32.totalorder %s14, 0
    %p91 = por %p89, %p90
    %p92 = scmp.ne.s32.totalorder %s80, %s81
    %p93 = scmp.eq.s32.totalorder %s15, 1
    %p94 = por %p92, %p93
    %p96 = scmp.ne.s32.totalorder %s81, %s95
    %p97 = scmp.eq.s32.totalorder %s15, 0
    %p98 = por %p96, %p97
    %s99 = ssub.s32 %s16, %s28
    %s100 = ssub.s32 %s17, %s24
    %s101 = sor.u32 %s99, %s100
    %p102 = scmp.eq.s32.totalorder %s101, 0
    %s104 = sadd.s32 %s103, 1
    %s105 = scalar_select %p102, %s103, %s104
    %p108 = pneg %p102
    %p109 = scmp.eq.s32.totalorder %s9, 1
    %p110 = por %p108, %p109
    %p111 = scmp.ne.s32.totalorder %s103, %s106
    %p112 = scmp.eq.s32.totalorder %s9, 0
    %p113 = por %p111, %p112
    %p114 = scmp.ne.s32.totalorder %s103, %s106
    %p115 = scmp.eq.s32.totalorder %s14, 1
    %p116 = por %p114, %p115
    %p117 = scmp.ne.s32.totalorder %s106, %s107
    %p118 = scmp.eq.s32.totalorder %s14, 0
    %p119 = por %p117, %p118
    %p120 = scmp.ne.s32.totalorder %s106, %s107
    %p121 = scmp.eq.s32.totalorder %s15, 1
    %p122 = por %p120, %p121
    %p124 = scmp.ne.s32.totalorder %s107, %s123
    %p125 = scmp.eq.s32.totalorder %s15, 0
    %p126 = por %p124, %p125
    %p127 = scmp.le.s32.totalorder 1, %s9
    %p128 = scmp.lt.s32.totalorder %s9, 3
    %p129 = pnand %p127, %p128
    %p130 = pneg %p129
    // Predicated region
    $region9: #{conv_space_time_forward.4} parent=5 // pred_check
      _
    $region10: #{conv_space_time_forward.4} parent=5 // pred_check_branch
      %132 = sbr.rel (%p129) target = $region12
    $region11: #{conv_space_time_forward.4} parent=5 // pred_region
      %s133 = ssub.s32 %s9, 1
      // Predicated region
      $region13: #{conv_space_time_forward.4} parent=11 // pred_check
        %p134 = pneg %p70
      $region14: #{conv_space_time_forward.4} parent=11 // pred_check_branch
        %136 = sbr.rel (%p134) target = $region16
      $region15: #{conv_space_time_forward.4} parent=11 // pred_region
        _
      $region16: #{conv_space_time_forward.4} parent=11 // pred_fallthru
        _
      // Predicated region
      $region17: #{conv_space_time_forward.4} parent=11 // pred_check
        %p137 = pneg %p91
      $region18: #{conv_space_time_forward.4} parent=11 // pred_check_branch
        %139 = sbr.rel (%p137) target = $region20
      $region19: #{conv_space_time_forward.4} parent=11 // pred_region
        _
      $region20: #{conv_space_time_forward.4} parent=11 // pred_fallthru
        _
    $region12: #{conv_space_time_forward.4} parent=5 // pred_fallthru
      _
    %p140 = scmp.lt.s32.totalorder %s9, 2
    // Predicated region
    $region21: #{conv_space_time_forward.4} parent=5 // pred_check
      %p141 = pneg %p140
    $region22: #{conv_space_time_forward.4} parent=5 // pred_check_branch
      %143 = sbr.rel (%p141) target = $region24
    $region23: #{conv_space_time_forward.4} parent=5 // pred_region
      // Predicated region
      $region25: #{conv_space_time_forward.4} parent=23 // pred_check
        %p144 = pneg %p43
      $region26: #{conv_space_time_forward.4} parent=23 // pred_check_branch
        %146 = sbr.rel (%p144) target = $region28
      $region27: #{conv_space_time_forward.4} parent=23 // pred_region
        %p147 = scmp.lt.s32.totalorder %s16, 1
        %s148 = scalar_select %p147, %s16, 1
        %p149 = scmp.lt.s32.totalorder %s17, 0
        %s150 = scalar_select %p149, %s17, 0
        %s151 = smul.addr %s150, 14
        %s152 = smul.addr %s148, 14
        %s153 = sadd.s32 %s151, %s152
        %s154 = smul.addr %s153, 4
        %s155 = scalar_lea.vmem %s0, %s154
      $region28: #{conv_space_time_forward.4} parent=23 // pred_fallthru
        _
    $region24: #{conv_space_time_forward.4} parent=5 // pred_fallthru
      _
    %p156 = scmp.le.s32.totalorder 1, %s9
    %p157 = scmp.lt.s32.totalorder %s9, 3
    %p158 = pnand %p156, %p157
    %p159 = pneg %p158
    // Predicated region
    $region29: #{conv_space_time_forward.4} parent=5 // pred_check
      _
    $region30: #{conv_space_time_forward.4} parent=5 // pred_check_branch
      %161 = sbr.rel (%p158) target = $region32
    $region31: #{conv_space_time_forward.4} parent=5 // pred_region
      %s162 = ssub.s32 %s9, 1
      %p163 = scmp.lt.s32.totalorder %s18, 1
      %s164 = scalar_select %p163, %s18, 1
      %p165 = scmp.lt.s32.totalorder %s19, 0
      %s166 = scalar_select %p165, %s19, 0
      %s167 = smul.addr %s166, 14
      %s168 = smul.addr %s164, 14
      %s169 = sadd.s32 %s167, %s168
      %s170 = smul.addr %s169, 4
      %s171 = scalar_lea.vmem %s0, %s170
      %p172 = pneg %p49
      %p173 = pneg %p46
      %p174 = pneg %p70
      %p175 = pneg %p67
      %p176 = pneg %p91
      %p177 = pneg %p88
      %p178 = pneg %p119
      %p179 = pneg %p116
      %p180 = scmp.lt.s32.totalorder %s18, 1
      %s181 = scalar_select %p180, %s18, 1
      %p182 = scmp.lt.s32.totalorder %s19, 0
      %s183 = scalar_select %p182, %s19, 0
      %s184 = smul.addr %s183, 13
      %s185 = smul.addr %s181, 13
      %s186 = sadd.s32 %s184, %s185
      %s187 = smul.addr %s186, 4
      %s188 = scalar_lea.vmem %s3, %s187
      %p189 = scmp.lt.s32.totalorder %s18, 1
      %s190 = scalar_select %p189, %s18, 1
      %p191 = scmp.lt.s32.totalorder %s19, 0
      %s192 = scalar_select %p191, %s19, 0
      %s193 = smul.addr %s192, 14
      %s194 = smul.addr %s190, 14
      %s195 = sadd.s32 %s193, %s194
      %s196 = smul.addr %s195, 4
      %s197 = scalar_lea.vmem %s0, %s196
      %p198 = scmp.lt.s32.totalorder %s18, 1
      %s199 = scalar_select %p198, %s18, 1
      %p200 = scmp.lt.s32.totalorder %s19, 0
      %s201 = scalar_select %p200, %s19, 0
      %s202 = smul.addr %s201, 13
      %s203 = smul.addr %s199, 13
      %s204 = sadd.s32 %s202, %s203
      %s205 = smul.addr %s204, 4
      %s206 = scalar_lea.vmem %s3, %s205
      %v207 = vld [vmem:[%s197] sm:$0xf]
      %v208 = vld [vmem:[%s197 + $0x4] sm:$0xf]
      %v209 = vld [vmem:[%s197 + $0x8] sm:$0xf]
      %v210 = vld [vmem:[%s197 + $0xc] sm:$0xf]
      %v211 = vld [vmem:[%s197 + $0x10] sm:$0xf]
      %v212 = vld [vmem:[%s197 + $0x14] sm:$0xf]
      %v213 = vld [vmem:[%s197 + $0x18] sm:$0xf]
      %v214 = vld [vmem:[%s197 + $0x1c] sm:$0xf]
      %v215 = vld [vmem:[%s197 + $0x20] sm:$0xf]
      %v216 = vld [vmem:[%s197 + $0x24] sm:$0xf]
      %v217 = vld [vmem:[%s197 + $0x28] sm:$0xf]
      %v218 = vld [vmem:[%s197 + $0x2c] sm:$0xf]
      %v219 = vld [vmem:[%s197 + $0x30] sm:$0x3]
      %v220 = vld [vmem:[%s1] sm:$0xf]
      %v221 = vld [vmem:[%s1 + $0x4] sm:$0xf]
      %v222 = vld [vmem:[%s1 + $0x8] sm:$0xf]
      %v223 = vld [vmem:[%s1 + $0xc] sm:$0xf]
      %v224 = vld [vmem:[%s1 + $0x10] sm:$0xf]
      %v225 = vld [vmem:[%s1 + $0x14] sm:$0xf]
      %v226 = vld [vmem:[%s1 + $0x18] sm:$0xf]
      %v227 = vld [vmem:[%s1 + $0x1c] sm:$0xf]
      %v228 = vld [vmem:[%s1 + $0x20] sm:$0xf]
      %v229 = vld [vmem:[%s1 + $0x24] sm:$0xf]
      %v230 = vld [vmem:[%s1 + $0x28] sm:$0xf]
      %v231 = vld [vmem:[%s1 + $0x2c] sm:$0xf]
      %v232 = vld [vmem:[%s1 + $0x30] sm:$0xf]
      %v233 = vld [vmem:[%s1 + $0x34] sm:$0xf]
      %v234 = vld [vmem:[%s1 + $0x38] sm:$0xf]
      %v235 = vld [vmem:[%s1 + $0x3c] sm:$0xf]
      %v236 = vld [vmem:[%s197 + $0x30] sm:$0x7]
      %s237 = scalar_lea.vmem %s1, 64
      %v238 = vld [vmem:[%s237] sm:$0xf]
      %v239 = vld [vmem:[%s237 + $0x4] sm:$0xf]
      %v240 = vld [vmem:[%s237 + $0x8] sm:$0xf]
      %v241 = vld [vmem:[%s237 + $0xc] sm:$0xf]
      %v242 = vld [vmem:[%s237 + $0x10] sm:$0xf]
      %v243 = vld [vmem:[%s237 + $0x14] sm:$0xf]
      %v244 = vld [vmem:[%s237 + $0x18] sm:$0xf]
      %v245 = vld [vmem:[%s237 + $0x1c] sm:$0xf]
      %v246 = vld [vmem:[%s237 + $0x20] sm:$0xf]
      %v247 = vld [vmem:[%s237 + $0x24] sm:$0xf]
      %v248 = vld [vmem:[%s237 + $0x28] sm:$0xf]
      %v249 = vld [vmem:[%s237 + $0x2c] sm:$0xf]
      %v250 = vld [vmem:[%s237 + $0x30] sm:$0xf]
      %v251 = vld [vmem:[%s237 + $0x34] sm:$0xf]
      %v252 = vld [vmem:[%s237 + $0x38] sm:$0xf]
      %v253 = vld [vmem:[%s237 + $0x3c] sm:$0xf]
      %v267 = vunpack.c.l.b16 %v207
      %v268 = vunpack.c.l.b16 %v208
      %v269 = vunpack.c.l.b16 %v209
      %v270 = vunpack.c.l.b16 %v210
      %v271 = vunpack.c.l.b16 %v211
      %v272 = vunpack.c.l.b16 %v212
      %v273 = vunpack.c.l.b16 %v213
      %v274 = vunpack.c.l.b16 %v214
      %v275 = vunpack.c.l.b16 %v215
      %v276 = vunpack.c.l.b16 %v216
      %v277 = vunpack.c.l.b16 %v217
      %v278 = vunpack.c.l.b16 %v218
      %v279 = vunpack.c.l.b16 %v236
      %v280 = vpack.c.b16 %v268, %v267
      %v281 = vpack.c.b16 %v270, %v269
      %v282 = vpack.c.b16 %v272, %v271
      %v283 = vpack.c.b16 %v274, %v273
      %v284 = vpack.c.b16 %v276, %v275
      %v285 = vpack.c.b16 %v278, %v277
      %v286 = vpack.c.b16 %v279, %v279
      %vm287 = vsmask.f32 7424
      %v289 = vshrl.u32 %v280, 16
      %v291 = vshll.u32 %v280, 16
      %v293 = vrot.slane %v291, 1
      %v294 = vor.u32 %v289, %v293
      %v296 = vshll.u32 %v281, 16
      %v298 = vrot.slane %v296, 1
      %v299 = vsel %vm287, %v294, %v298
      %v300 = vshrl.u32 %v281, 16
      %v302 = vor.u32 %v300, %v298
      %v304 = vshll.u32 %v282, 16
      %v306 = vrot.slane %v304, 1
      %v307 = vsel %vm287, %v302, %v306
      %v308 = vshrl.u32 %v282, 16
      %v310 = vor.u32 %v308, %v306
      %v312 = vshll.u32 %v283, 16
      %v314 = vrot.slane %v312, 1
      %v315 = vsel %vm287, %v310, %v314
      %v316 = vshrl.u32 %v283, 16
      %v318 = vor.u32 %v316, %v314
      %v320 = vshll.u32 %v284, 16
      %v322 = vrot.slane %v320, 1
      %v323 = vsel %vm287, %v318, %v322
      %v324 = vshrl.u32 %v284, 16
      %v326 = vor.u32 %v324, %v322
      %v328 = vshll.u32 %v285, 16
      %v330 = vrot.slane %v328, 1
      %v331 = vsel %vm287, %v326, %v330
      %v332 = vshrl.u32 %v285, 16
      %v334 = vor.u32 %v332, %v330
      %v336 = vshll.u32 %v286, 16
      %v338 = vrot.slane %v336, 1
      %v339 = vsel %vm287, %v334, %v338
      %v340 = vshrl.u32 %v286, 16
      %v342 = vor.u32 %v340, %v338
      %v366 = vunpack.c.l.b16 %v238
      %v367 = vunpack.c.l.b16 %v239
      %v368 = vunpack.c.l.b16 %v240
      %v369 = vunpack.c.l.b16 %v241
      %v370 = vunpack.c.l.b16 %v242
      %v371 = vunpack.c.l.b16 %v243
      %v372 = vunpack.c.l.b16 %v244
      %v373 = vunpack.c.l.b16 %v245
      %v374 = vunpack.c.l.b16 %v246
      %v375 = vunpack.c.l.b16 %v247
      %v376 = vunpack.c.l.b16 %v248
      %v377 = vunpack.c.l.b16 %v249
      %v378 = vunpack.c.l.b16 %v250
      %v379 = vunpack.c.l.b16 %v251
      %v380 = vunpack.c.l.b16 %v252
      %v381 = vunpack.c.l.b16 %v253
      %v382 = vpack.c.b16 %v367, %v366
      %v383 = vpack.c.b16 %v369, %v368
      %v384 = vpack.c.b16 %v371, %v370
      %v385 = vpack.c.b16 %v373, %v372
      %v386 = vpack.c.b16 %v375, %v374
      %v387 = vpack.c.b16 %v377, %v376
      %v388 = vpack.c.b16 %v379, %v378
      %v389 = vpack.c.b16 %v381, %v380
      %398 = vmatpush.bf16.msra.mxu0 %v389
      %399 = vmatpush.bf16.msra.mxu0 %v388
      %400 = vmatpush.bf16.msra.mxu0 %v387
      %401 = vmatpush.bf16.msra.mxu0 %v386
      %402 = vmatpush.bf16.msra.mxu0 %v385
      %403 = vmatpush.bf16.msra.mxu0 %v384
      %404 = vmatpush.bf16.msra.mxu0 %v383
      %405 = vmatpush.bf16.msra.mxu0 %v382
      %406 = vmatmul.bf16.gmra.mxu0 %v299
      %v407 = vpop.f32.mrf.mxu0
      %v408 = vadd.f32 0.0, %v407
      %v409 = vpop.f32.mrf.mxu0
      %v410 = vadd.f32 0.0, %v409
      %411 = vmatmul.bf16.gmra.mxu0 %v307
      %v412 = vpop.f32.mrf.mxu0
      %v413 = vadd.f32 0.0, %v412
      %v414 = vpop.f32.mrf.mxu0
      %v415 = vadd.f32 0.0, %v414
      %416 = vmatmul.bf16.gmra.mxu0 %v315
      %v417 = vpop.f32.mrf.mxu0
      %v418 = vadd.f32 0.0, %v417
      %v419 = vpop.f32.mrf.mxu0
      %v420 = vadd.f32 0.0, %v419
      %421 = vmatmul.bf16.gmra.mxu0 %v323
      %v422 = vpop.f32.mrf.mxu0
      %v423 = vadd.f32 0.0, %v422
      %v424 = vpop.f32.mrf.mxu0
      %v425 = vadd.f32 0.0, %v424
      %426 = vmatmul.bf16.gmra.mxu0 %v331
      %v427 = vpop.f32.mrf.mxu0
      %v428 = vadd.f32 0.0, %v427
      %v429 = vpop.f32.mrf.mxu0
      %v430 = vadd.f32 0.0, %v429
      %431 = vmatmul.bf16.gmra.mxu0 %v339
      %v432 = vpop.f32.mrf.mxu0
      %v433 = vadd.f32 0.0, %v432
      %v434 = vpop.f32.mrf.mxu0
      %v435 = vadd.f32 0.0, %v434
      %436 = vmatmul.bf16.gmra.mxu0 %v342
      %v437 = vpop.f32.mrf.mxu0
      %v438 = vadd.f32 0.0, %v437
      %v439 = vpop.f32.mrf.mxu0
      %440 = vdwg.mxu0
      %v442 = vunpack.c.l.b16 %v219
      %v443 = vpack.c.b16 %v442, %v442
      %v467 = vunpack.c.l.b16 %v220
      %v468 = vunpack.c.l.b16 %v221
      %v469 = vunpack.c.l.b16 %v222
      %v470 = vunpack.c.l.b16 %v223
      %v471 = vunpack.c.l.b16 %v224
      %v472 = vunpack.c.l.b16 %v225
      %v473 = vunpack.c.l.b16 %v226
      %v474 = vunpack.c.l.b16 %v227
      %v475 = vunpack.c.l.b16 %v228
      %v476 = vunpack.c.l.b16 %v229
      %v477 = vunpack.c.l.b16 %v230
      %v478 = vunpack.c.l.b16 %v231
      %v479 = vunpack.c.l.b16 %v232
      %v480 = vunpack.c.l.b16 %v233
      %v481 = vunpack.c.l.b16 %v234
      %v482 = vunpack.c.l.b16 %v235
      %v483 = vpack.c.b16 %v468, %v467
      %v484 = vpack.c.b16 %v470, %v469
      %v485 = vpack.c.b16 %v472, %v471
      %v486 = vpack.c.b16 %v474, %v473
      %v487 = vpack.c.b16 %v476, %v475
      %v488 = vpack.c.b16 %v478, %v477
      %v489 = vpack.c.b16 %v480, %v479
      %v490 = vpack.c.b16 %v482, %v481
      %499 = vmatpush.bf16.msra.mxu0 %v490
      %500 = vmatpush.bf16.msra.mxu0 %v489
      %501 = vmatpush.bf16.msra.mxu0 %v488
      %502 = vmatpush.bf16.msra.mxu0 %v487
      %503 = vmatpush.bf16.msra.mxu0 %v486
      %504 = vmatpush.bf16.msra.mxu0 %v485
      %505 = vmatpush.bf16.msra.mxu0 %v484
      %506 = vmatpush.bf16.msra.mxu0 %v483
      %507 = vmatmul.bf16.gmra.mxu0 %v280
      %v508 = vpop.f32.mrf.mxu0
      %v509 = vadd.f32 %v408, %v508
      %v510 = vpop.f32.mrf.mxu0
      %v511 = vadd.f32 %v410, %v510
      %512 = vmatmul.bf16.gmra.mxu0 %v281
      %v513 = vpop.f32.mrf.mxu0
      %v514 = vadd.f32 %v413, %v513
      %v515 = vpop.f32.mrf.mxu0
      %v516 = vadd.f32 %v415, %v515
      %517 = vmatmul.bf16.gmra.mxu0 %v282
      %v518 = vpop.f32.mrf.mxu0
      %v519 = vadd.f32 %v418, %v518
      %v520 = vpop.f32.mrf.mxu0
      %v521 = vadd.f32 %v420, %v520
      %522 = vmatmul.bf16.gmra.mxu0 %v283
      %v523 = vpop.f32.mrf.mxu0
      %v524 = vadd.f32 %v423, %v523
      %v525 = vpop.f32.mrf.mxu0
      %v526 = vadd.f32 %v425, %v525
      %527 = vmatmul.bf16.gmra.mxu0 %v284
      %v528 = vpop.f32.mrf.mxu0
      %v529 = vadd.f32 %v428, %v528
      %v530 = vpop.f32.mrf.mxu0
      %v531 = vadd.f32 %v430, %v530
      %532 = vmatmul.bf16.gmra.mxu0 %v285
      %v533 = vpop.f32.mrf.mxu0
      %v534 = vadd.f32 %v433, %v533
      %v535 = vpop.f32.mrf.mxu0
      %v536 = vadd.f32 %v435, %v535
      %537 = vmatmul.bf16.gmra.mxu0 %v443
      %v538 = vpop.f32.mrf.mxu0
      %v539 = vadd.f32 %v438, %v538
      %v540 = vpop.f32.mrf.mxu0
      %541 = vdwg.mxu0
      %v542 = vld [vmem:[%s197] sm:$0xc]
      %v543 = vld [vmem:[%s197 + $0x4] sm:$0xf]
      %v544 = vld [vmem:[%s197 + $0x8] sm:$0xf]
      %v545 = vld [vmem:[%s197 + $0xc] sm:$0xf]
      %v546 = vld [vmem:[%s197 + $0x10] sm:$0xf]
      %v547 = vld [vmem:[%s197 + $0x14] sm:$0xf]
      %v548 = vld [vmem:[%s197 + $0x18] sm:$0xf]
      %v549 = vld [vmem:[%s197 + $0x1c] sm:$0xf]
      %v550 = vld [vmem:[%s197 + $0x20] sm:$0xf]
      %v551 = vld [vmem:[%s197 + $0x24] sm:$0xf]
      %v552 = vld [vmem:[%s197 + $0x28] sm:$0xf]
      %v553 = vld [vmem:[%s197 + $0x2c] sm:$0xf]
      %v554 = vld [vmem:[%s197 + $0x30] sm:$0xf]
      %v555 = vld [vmem:[%s197 + $0x34] sm:$0x1]
      %s556 = scalar_lea.vmem %s1, 128
      %v557 = vld [vmem:[%s556] sm:$0xf]
      %v558 = vld [vmem:[%s556 + $0x4] sm:$0xf]
      %v559 = vld [vmem:[%s556 + $0x8] sm:$0xf]
      %v560 = vld [vmem:[%s556 + $0xc] sm:$0xf]
      %v561 = vld [vmem:[%s556 + $0x10] sm:$0xf]
      %v562 = vld [vmem:[%s556 + $0x14] sm:$0xf]
      %v563 = vld [vmem:[%s556 + $0x18] sm:$0xf]
      %v564 = vld [vmem:[%s556 + $0x1c] sm:$0xf]
      %v565 = vld [vmem:[%s556 + $0x20] sm:$0xf]
      %v566 = vld [vmem:[%s556 + $0x24] sm:$0xf]
      %v567 = vld [vmem:[%s556 + $0x28] sm:$0xf]
      %v568 = vld [vmem:[%s556 + $0x2c] sm:$0xf]
      %v569 = vld [vmem:[%s556 + $0x30] sm:$0xf]
      %v570 = vld [vmem:[%s556 + $0x34] sm:$0xf]
      %v571 = vld [vmem:[%s556 + $0x38] sm:$0xf]
      %v572 = vld [vmem:[%s556 + $0x3c] sm:$0xf]
      %v587 = vunpack.c.l.b16 %v542
      %v588 = vunpack.c.l.b16 %v543
      %v589 = vunpack.c.l.b16 %v544
      %v590 = vunpack.c.l.b16 %v545
      %v591 = vunpack.c.l.b16 %v546
      %v592 = vunpack.c.l.b16 %v547
      %v593 = vunpack.c.l.b16 %v548
      %v594 = vunpack.c.l.b16 %v549
      %v595 = vunpack.c.l.b16 %v550
      %v596 = vunpack.c.l.b16 %v551
      %v597 = vunpack.c.l.b16 %v552
      %v598 = vunpack.c.l.b16 %v553
      %v599 = vunpack.c.l.b16 %v554
      %v600 = vunpack.c.l.b16 %v555
      %v601 = vpack.c.b16 %v588, %v587
      %v602 = vpack.c.b16 %v590, %v589
      %v603 = vpack.c.b16 %v592, %v591
      %v604 = vpack.c.b16 %v594, %v593
      %v605 = vpack.c.b16 %v596, %v595
      %v606 = vpack.c.b16 %v598, %v597
      %v607 = vpack.c.b16 %v600, %v599
      %vm608 = vsmask.f32 5376
      %v610 = vshrl.u32 %v601, 16
      %v612 = vrot.slane %v610, 2
      %v613 = vshll.u32 %v601, 16
      %v615 = vrot.slane %v613, 3
      %v616 = vor.u32 %v612, %v615
      %v618 = vshrl.u32 %v602, 16
      %v620 = vrot.slane %v618, 2
      %v621 = vshll.u32 %v602, 16
      %v623 = vrot.slane %v621, 3
      %v624 = vor.u32 %v620, %v623
      %v625 = vsel %vm608, %v616, %v624
      %v627 = vshrl.u32 %v603, 16
      %v629 = vrot.slane %v627, 2
      %v630 = vshll.u32 %v603, 16
      %v632 = vrot.slane %v630, 3
      %v633 = vor.u32 %v629, %v632
      %v634 = vsel %vm608, %v624, %v633
      %v636 = vshrl.u32 %v604, 16
      %v638 = vrot.slane %v636, 2
      %v639 = vshll.u32 %v604, 16
      %v641 = vrot.slane %v639, 3
      %v642 = vor.u32 %v638, %v641
      %v643 = vsel %vm608, %v633, %v642
      %v645 = vshrl.u32 %v605, 16
      %v647 = vrot.slane %v645, 2
      %v648 = vshll.u32 %v605, 16
      %v650 = vrot.slane %v648, 3
      %v651 = vor.u32 %v647, %v650
      %v652 = vsel %vm608, %v642, %v651
      %v654 = vshrl.u32 %v606, 16
      %v656 = vrot.slane %v654, 2
      %v657 = vshll.u32 %v606, 16
      %v659 = vrot.slane %v657, 3
      %v660 = vor.u32 %v656, %v659
      %v661 = vsel %vm608, %v651, %v660
      %v663 = vshrl.u32 %v607, 16
      %v665 = vrot.slane %v663, 2
      %v666 = vshll.u32 %v607, 16
      %v668 = vrot.slane %v666, 3
      %v669 = vor.u32 %v665, %v668
      %v670 = vsel %vm608, %v660, %v669
      %v694 = vunpack.c.l.b16 %v557
      %v695 = vunpack.c.l.b16 %v558
      %v696 = vunpack.c.l.b16 %v559
      %v697 = vunpack.c.l.b16 %v560
      %v698 = vunpack.c.l.b16 %v561
      %v699 = vunpack.c.l.b16 %v562
      %v700 = vunpack.c.l.b16 %v563
      %v701 = vunpack.c.l.b16 %v564
      %v702 = vunpack.c.l.b16 %v565
      %v703 = vunpack.c.l.b16 %v566
      %v704 = vunpack.c.l.b16 %v567
      %v705 = vunpack.c.l.b16 %v568
      %v706 = vunpack.c.l.b16 %v569
      %v707 = vunpack.c.l.b16 %v570
      %v708 = vunpack.c.l.b16 %v571
      %v709 = vunpack.c.l.b16 %v572
      %v710 = vpack.c.b16 %v695, %v694
      %v711 = vpack.c.b16 %v697, %v696
      %v712 = vpack.c.b16 %v699, %v698
      %v713 = vpack.c.b16 %v701, %v700
      %v714 = vpack.c.b16 %v703, %v702
      %v715 = vpack.c.b16 %v705, %v704
      %v716 = vpack.c.b16 %v707, %v706
      %v717 = vpack.c.b16 %v709, %v708
      %726 = vmatpush.bf16.msra.mxu0 %v717
      %727 = vmatpush.bf16.msra.mxu0 %v716
      %728 = vmatpush.bf16.msra.mxu0 %v715
      %729 = vmatpush.bf16.msra.mxu0 %v714
      %730 = vmatpush.bf16.msra.mxu0 %v713
      %731 = vmatpush.bf16.msra.mxu0 %v712
      %732 = vmatpush.bf16.msra.mxu0 %v711
      %733 = vmatpush.bf16.msra.mxu0 %v710
      %734 = vmatmul.bf16.gmra.mxu0 %v625
      %v735 = vpop.f32.mrf.mxu0
      %v736 = vadd.f32 0.0, %v735
      %v737 = vpop.f32.mrf.mxu0
      %v738 = vadd.f32 0.0, %v737
      %739 = vmatmul.bf16.gmra.mxu0 %v634
      %v740 = vpop.f32.mrf.mxu0
      %v741 = vadd.f32 0.0, %v740
      %v742 = vpop.f32.mrf.mxu0
      %v743 = vadd.f32 0.0, %v742
      %744 = vmatmul.bf16.gmra.mxu0 %v643
      %v745 = vpop.f32.mrf.mxu0
      %v746 = vadd.f32 0.0, %v745
      %v747 = vpop.f32.mrf.mxu0
      %v748 = vadd.f32 0.0, %v747
      %749 = vmatmul.bf16.gmra.mxu0 %v652
      %v750 = vpop.f32.mrf.mxu0
      %v751 = vadd.f32 0.0, %v750
      %v752 = vpop.f32.mrf.mxu0
      %v753 = vadd.f32 0.0, %v752
      %754 = vmatmul.bf16.gmra.mxu0 %v661
      %v755 = vpop.f32.mrf.mxu0
      %v756 = vadd.f32 0.0, %v755
      %v757 = vpop.f32.mrf.mxu0
      %v758 = vadd.f32 0.0, %v757
      %759 = vmatmul.bf16.gmra.mxu0 %v670
      %v760 = vpop.f32.mrf.mxu0
      %v761 = vadd.f32 0.0, %v760
      %v762 = vpop.f32.mrf.mxu0
      %v763 = vadd.f32 0.0, %v762
      %764 = vmatmul.bf16.gmra.mxu0 %v669
      %v765 = vpop.f32.mrf.mxu0
      %v766 = vadd.f32 0.0, %v765
      %v767 = vpop.f32.mrf.mxu0
      %768 = vdwg.mxu0
      %v769 = vadd.f32 %v509, %v736
      %v770 = vadd.f32 %v511, %v738
      %v771 = vadd.f32 %v514, %v741
      %v772 = vadd.f32 %v516, %v743
      %v773 = vadd.f32 %v519, %v746
      %v774 = vadd.f32 %v521, %v748
      %v775 = vadd.f32 %v524, %v751
      %v776 = vadd.f32 %v526, %v753
      %v777 = vadd.f32 %v529, %v756
      %v778 = vadd.f32 %v531, %v758
      %v779 = vadd.f32 %v534, %v761
      %v780 = vadd.f32 %v536, %v763
      %v781 = vadd.f32 %v539, %v766
      %v782 = vld [vmem:[%s197] sm:$0x8]
      %s783 = scalar_lea.vmem %s1, 192
      %v784 = vld [vmem:[%s783] sm:$0xf]
      %v785 = vld [vmem:[%s783 + $0x4] sm:$0xf]
      %v786 = vld [vmem:[%s783 + $0x8] sm:$0xf]
      %v787 = vld [vmem:[%s783 + $0xc] sm:$0xf]
      %v788 = vld [vmem:[%s783 + $0x10] sm:$0xf]
      %v789 = vld [vmem:[%s783 + $0x14] sm:$0xf]
      %v790 = vld [vmem:[%s783 + $0x18] sm:$0xf]
      %v791 = vld [vmem:[%s783 + $0x1c] sm:$0xf]
      %v792 = vld [vmem:[%s783 + $0x20] sm:$0xf]
      %v793 = vld [vmem:[%s783 + $0x24] sm:$0xf]
      %v794 = vld [vmem:[%s783 + $0x28] sm:$0xf]
      %v795 = vld [vmem:[%s783 + $0x2c] sm:$0xf]
      %v796 = vld [vmem:[%s783 + $0x30] sm:$0xf]
      %v797 = vld [vmem:[%s783 + $0x34] sm:$0xf]
      %v798 = vld [vmem:[%s783 + $0x38] sm:$0xf]
      %v799 = vld [vmem:[%s783 + $0x3c] sm:$0xf]
      %v801 = vunpack.c.l.b16 %v782
      %v802 = vpack.c.b16 %v588, %v801
      %vm803 = vcmask 1044480
      %v804 = vrot.slane %v802, 3
      %v805 = vrot.slane %v602, 3
      %v806 = vsel %vm803, %v804, %v805
      %v807 = vrot.slane %v603, 3
      %v808 = vsel %vm803, %v805, %v807
      %v809 = vrot.slane %v604, 3
      %v810 = vsel %vm803, %v807, %v809
      %v811 = vrot.slane %v605, 3
      %v812 = vsel %vm803, %v809, %v811
      %v813 = vrot.slane %v606, 3
      %v814 = vsel %vm803, %v811, %v813
      %v815 = vrot.slane %v607, 3
      %v816 = vsel %vm803, %v813, %v815
      %v840 = vunpack.c.l.b16 %v784
      %v841 = vunpack.c.l.b16 %v785
      %v842 = vunpack.c.l.b16 %v786
      %v843 = vunpack.c.l.b16 %v787
      %v844 = vunpack.c.l.b16 %v788
      %v845 = vunpack.c.l.b16 %v789
      %v846 = vunpack.c.l.b16 %v790
      %v847 = vunpack.c.l.b16 %v791
      %v848 = vunpack.c.l.b16 %v792
      %v849 = vunpack.c.l.b16 %v793
      %v850 = vunpack.c.l.b16 %v794
      %v851 = vunpack.c.l.b16 %v795
      %v852 = vunpack.c.l.b16 %v796
      %v853 = vunpack.c.l.b16 %v797
      %v854 = vunpack.c.l.b16 %v798
      %v855 = vunpack.c.l.b16 %v799
      %v856 = vpack.c.b16 %v841, %v840
      %v857 = vpack.c.b16 %v843, %v842
      %v858 = vpack.c.b16 %v845, %v844
      %v859 = vpack.c.b16 %v847, %v846
      %v860 = vpack.c.b16 %v849, %v848
      %v861 = vpack.c.b16 %v851, %v850
      %v862 = vpack.c.b16 %v853, %v852
      %v863 = vpack.c.b16 %v855, %v854
      %872 = vmatpush.bf16.msra.mxu0 %v863
      %873 = vmatpush.bf16.msra.mxu0 %v862
      %874 = vmatpush.bf16.msra.mxu0 %v861
      %875 = vmatpush.bf16.msra.mxu0 %v860
      %876 = vmatpush.bf16.msra.mxu0 %v859
      %877 = vmatpush.bf16.msra.mxu0 %v858
      %878 = vmatpush.bf16.msra.mxu0 %v857
      %879 = vmatpush.bf16.msra.mxu0 %v856
      %880 = vmatmul.bf16.gmra.mxu0 %v806
      %v881 = vpop.f32.mrf.mxu0
      %v882 = vadd.f32 0.0, %v881
      %v883 = vpop.f32.mrf.mxu0
      %v884 = vadd.f32 0.0, %v883
      %885 = vmatmul.bf16.gmra.mxu0 %v808
      %v886 = vpop.f32.mrf.mxu0
      %v887 = vadd.f32 0.0, %v886
      %v888 = vpop.f32.mrf.mxu0
      %v889 = vadd.f32 0.0, %v888
      %890 = vmatmul.bf16.gmra.mxu0 %v810
      %v891 = vpop.f32.mrf.mxu0
      %v892 = vadd.f32 0.0, %v891
      %v893 = vpop.f32.mrf.mxu0
      %v894 = vadd.f32 0.0, %v893
      %895 = vmatmul.bf16.gmra.mxu0 %v812
      %v896 = vpop.f32.mrf.mxu0
      %v897 = vadd.f32 0.0, %v896
      %v898 = vpop.f32.mrf.mxu0
      %v899 = vadd.f32 0.0, %v898
      %900 = vmatmul.bf16.gmra.mxu0 %v814
      %v901 = vpop.f32.mrf.mxu0
      %v902 = vadd.f32 0.0, %v901
      %v903 = vpop.f32.mrf.mxu0
      %v904 = vadd.f32 0.0, %v903
      %905 = vmatmul.bf16.gmra.mxu0 %v816
      %v906 = vpop.f32.mrf.mxu0
      %v907 = vadd.f32 0.0, %v906
      %v908 = vpop.f32.mrf.mxu0
      %v909 = vadd.f32 0.0, %v908
      %910 = vmatmul.bf16.gmra.mxu0 %v815
      %v911 = vpop.f32.mrf.mxu0
      %v912 = vadd.f32 0.0, %v911
      %v913 = vpop.f32.mrf.mxu0
      %914 = vdwg.mxu0
      %v915 = vadd.f32 %v769, %v882
      %v916 = vadd.f32 %v770, %v884
      %v917 = vadd.f32 %v771, %v887
      %v918 = vadd.f32 %v772, %v889
      %v919 = vadd.f32 %v773, %v892
      %v920 = vadd.f32 %v774, %v894
      %v921 = vadd.f32 %v775, %v897
      %v922 = vadd.f32 %v776, %v899
      %v923 = vadd.f32 %v777, %v902
      %v924 = vadd.f32 %v778, %v904
      %v925 = vadd.f32 %v779, %v907
      %v926 = vadd.f32 %v780, %v909
      %v927 = vadd.f32 %v781, %v912
      %v928 = vld [vmem:[%s2] sm:$0x1]
      %v930 = vperm.slane %v928, 0
      %v932 = vadd.f32 %v915, %v930
      %v933 = vadd.f32 %v916, %v930
      %v934 = vadd.f32 %v917, %v930
      %v935 = vadd.f32 %v918, %v930
      %v936 = vadd.f32 %v919, %v930
      %v937 = vadd.f32 %v920, %v930
      %v938 = vadd.f32 %v921, %v930
      %v939 = vadd.f32 %v922, %v930
      %v940 = vadd.f32 %v923, %v930
      %v941 = vadd.f32 %v924, %v930
      %v942 = vadd.f32 %v925, %v930
      %v943 = vadd.f32 %v926, %v930
      %v944 = vadd.f32 %v927, %v930
      %v945 = vmax.f32 %v932, 0.0
      %v946 = vmax.f32 %v933, 0.0
      %v947 = vmax.f32 %v934, 0.0
      %v948 = vmax.f32 %v935, 0.0
      %v949 = vmax.f32 %v936, 0.0
      %v950 = vmax.f32 %v937, 0.0
      %v951 = vmax.f32 %v938, 0.0
      %v952 = vmax.f32 %v939, 0.0
      %v953 = vmax.f32 %v940, 0.0
      %v954 = vmax.f32 %v941, 0.0
      %v955 = vmax.f32 %v942, 0.0
      %v956 = vmax.f32 %v943, 0.0
      %v957 = vmax.f32 %v944, 0.0
      %v958 = vpack.c.bf16 %v945, %v945
      %v959 = vpack.c.bf16 %v946, %v946
      %v960 = vpack.c.bf16 %v947, %v947
      %v961 = vpack.c.bf16 %v948, %v948
      %v962 = vpack.c.bf16 %v949, %v949
      %v963 = vpack.c.bf16 %v950, %v950
      %v964 = vpack.c.bf16 %v951, %v951
      %v965 = vpack.c.bf16 %v952, %v952
      %v966 = vpack.c.bf16 %v953, %v953
      %v967 = vpack.c.bf16 %v954, %v954
      %v968 = vpack.c.bf16 %v955, %v955
      %v969 = vpack.c.bf16 %v956, %v956
      %v970 = vpack.c.bf16 %v957, %v957
      %vm971 = vcmask 257024
      %972 = vst.msk [vmem:[%s206] sm:$0xf] %vm971, %v958
      %973 = vst.msk [vmem:[%s206 + $0x4] sm:$0xf] %vm971, %v959
      %974 = vst.msk [vmem:[%s206 + $0x8] sm:$0xf] %vm971, %v960
      %975 = vst.msk [vmem:[%s206 + $0xc] sm:$0xf] %vm971, %v961
      %976 = vst.msk [vmem:[%s206 + $0x10] sm:$0xf] %vm971, %v962
      %977 = vst.msk [vmem:[%s206 + $0x14] sm:$0xf] %vm971, %v963
      %978 = vst.msk [vmem:[%s206 + $0x18] sm:$0xf] %vm971, %v964
      %979 = vst.msk [vmem:[%s206 + $0x1c] sm:$0xf] %vm971, %v965
      %980 = vst.msk [vmem:[%s206 + $0x20] sm:$0xf] %vm971, %v966
      %981 = vst.msk [vmem:[%s206 + $0x24] sm:$0xf] %vm971, %v967
      %982 = vst.msk [vmem:[%s206 + $0x28] sm:$0xf] %vm971, %v968
      %983 = vst.msk [vmem:[%s206 + $0x2c] sm:$0xf] %vm971, %v969
      %vm984 = vcmask 254976
      %985 = vst.msk [vmem:[%s206 + $0x30] sm:$0x3] %vm984, %v970
      %p986 = scmp.lt.s32.totalorder %s18, 1
      %s987 = scalar_select %p986, %s18, 1
      %p988 = scmp.lt.s32.totalorder %s19, 0
      %s989 = scalar_select %p988, %s19, 0
      %s990 = smul.addr %s989, 13
      %s991 = smul.addr %s987, 13
      %s992 = sadd.s32 %s990, %s991
      %s993 = smul.addr %s992, 4
      %s994 = scalar_lea.vmem %s3, %s993
      // Predicated region
      $region33: #{conv_space_time_forward.4} parent=31 // pred_check
        %p995 = pneg %p116
      $region34: #{conv_space_time_forward.4} parent=31 // pred_check_branch
        %997 = sbr.rel (%p995) target = $region36
      $region35: #{conv_space_time_forward.4} parent=31 // pred_region
        _
      $region36: #{conv_space_time_forward.4} parent=31 // pred_fallthru
        _
    $region32: #{conv_space_time_forward.4} parent=5 // pred_fallthru
      _
    %p998 = scmp.le.s32.totalorder 2, %s9
    // Predicated region
    $region37: #{conv_space_time_forward.4} parent=5 // pred_check
      %p999 = pneg %p998
    $region38: #{conv_space_time_forward.4} parent=5 // pred_check_branch
      %1001 = sbr.rel (%p999) target = $region40
    $region39: #{conv_space_time_forward.4} parent=5 // pred_region
      %s1002 = ssub.s32 %s9, 2
      // Predicated region
      $region41: #{conv_space_time_forward.4} parent=39 // pred_check
        %p1003 = pneg %p122
      $region42: #{conv_space_time_forward.4} parent=39 // pred_check_branch
        %1005 = sbr.rel (%p1003) target = $region44
      $region43: #{conv_space_time_forward.4} parent=39 // pred_region
        %p1006 = scmp.lt.s32.totalorder %s20, 1
        %s1007 = scalar_select %p1006, %s20, 1
        %p1008 = scmp.lt.s32.totalorder %s21, 0
        %s1009 = scalar_select %p1008, %s21, 0
        %s1010 = smul.addr %s1009, 13
        %s1011 = smul.addr %s1007, 13
        %s1012 = sadd.s32 %s1010, %s1011
        %s1013 = smul.addr %s1012, 4
        %s1014 = scalar_lea.vmem %s3, %s1013
      $region44: #{conv_space_time_forward.4} parent=39 // pred_fallthru
        _
    $region40: #{conv_space_time_forward.4} parent=5 // pred_fallthru
      _
  $region6: #{conv_space_time_forward.4} parent=0 // loop_footer
    %s13 = sadd.s32 1, %s9
  $region7: #{conv_space_time_forward.4} parent=0 // loop_footer_branch
    %8 = sbr.rel target = $region3
  $region8: #{conv_space_time_forward.4} parent=0 // loop_exit
    _

// kernel: conv_space_time_forward.5
$region0: #{conv_space_time_forward.5}
  #allocation0 [shape = 'u32[]', space=smem, size = 0x4, offset = 0x4, fixed_abs, tag = 'smem constant byte address 0x4 - core index']
  #allocation1 [shape = 'u32[72,128]{1,0:T(1,128)}', space=vmem, size = 0x9000, scoped, tag = 'internal scratch']
  %s0 = inlined_call_operand.vmem [shape: bf16[2,40,128], index: 0, kind: input, shape index: {}]
  %s1 = inlined_call_operand.vmem [shape: bf16[4,128,32], index: 1, kind: input, shape index: {}]
  %s2 = inlined_call_operand.vmem [shape: f32[1,32], index: 2, kind: input, shape index: {}]
  %s3 = inlined_call_operand.vmem [shape: f32[1,36], index: 3, kind: input, shape index: {}]
  %s4 = inlined_call_operand.vmem [shape: f32[32,10], index: 4, kind: input, shape index: {}]
  %s5 = inlined_call_operand.vmem [shape: f32[1,10], index: 5, kind: input, shape index: {}]
  %s6 = inlined_call_operand.hbm [shape: f32[2,1,10], index: 6, kind: output, shape index: {}]
  %s7 = sld [smem:[#allocation0]]
  $region57: #{conv_space_time_forward.5} parent=0
    _
  %s9 = ssub.s32 1, %s7
  %s10 = scalar_select 0, %s9, %s7
  $region1: #{conv_space_time_forward.5} parent=0
    #allocation2 [shape = 'u8[1024]{0}', space=vmem, size = 0x400, scoped, tag = 'output window, operand 0']
    #allocation3 [shape = 's32[2]{0}', space=sflag, size = 0x8, scoped, tag = 'scoped memory for conv_space_time_forward.5']
    %11 = vsyncpa [#allocation3], 0
    %s12 = scalar_lea.sflag [#allocation3], 1
    %13 = vsyncpa %s12, 0
    loop: start=0, step=1, limit=4
    $region2: #{conv_space_time_forward.5} parent=1 // loop_pre_header
      _
    $region3: #{conv_space_time_forward.5} parent=1 // loop_header
      %s15 = sphi 0, %s19
      %p16 = scmp.ge.s32.totalorder %s15, 4
      %s25 = sphi 0, %s27
      %s28 = sphi 0, %s25
      %s29 = sphi 0, %s28
      %s45 = sphi 0, %s29
      %s49 = sphi 0, %s49
      %s51 = sphi 0, %s49
      %s52 = sphi 0, %s51
      %s66 = sphi 0, %s52
      %s70 = sphi 0, %s70
      %s72 = sphi 0, %s70
      %s73 = sphi 0, %s72
      %s87 = sphi 0, %s73
      %s91 = sphi 0, %s91
      %s93 = sphi 0, %s91
      %s94 = sphi 0, %s93
      %s108 = sphi 0, %s94
      %s112 = sphi 0, %s112
      %s114 = sphi 0, %s112
      %s115 = sphi 0, %s114
      %s129 = sphi 0, %s115
      %s133 = sphi 0, %s133
      %s135 = sphi 0, %s133
      %s136 = sphi 0, %s135
      %s150 = sphi 0, %s136
      %s156 = sphi 0, %s158
      %s159 = sphi 0, %s156
      %s160 = sphi 0, %s159
      %s176 = sphi 0, %s160
    $region4: #{conv_space_time_forward.5} parent=1 // loop_header_branch
      %18 = sbr.rel (%p16) target = $region8
    $region5: #{conv_space_time_forward.5} parent=1 // loop_body
      %s20 = ssub.s32 %s15, 1
      %s21 = ssub.s32 %s15, 2
      %s22 = sadd.s32 %s15, 1
      %s23 = ssub.s32 %s15, %s22
      %p24 = scmp.eq.s32.totalorder %s23, 0
      %s26 = sadd.s32 %s25, 1
      %s27 = scalar_select %p24, %s25, %s26
      %p30 = pneg %p24
      %p31 = scmp.eq.s32.totalorder %s15, 1
      %p32 = por %p30, %p31
      %p33 = scmp.ne.s32.totalorder %s25, %s28
      %p34 = scmp.eq.s32.totalorder %s15, 0
      %p35 = por %p33, %p34
      %p36 = scmp.ne.s32.totalorder %s25, %s28
      %p37 = scmp.eq.s32.totalorder %s20, 1
      %p38 = por %p36, %p37
      %p39 = scmp.ne.s32.totalorder %s28, %s29
      %p40 = scmp.eq.s32.totalorder %s20, 0
      %p41 = por %p39, %p40
      %p42 = scmp.ne.s32.totalorder %s28, %s29
      %p43 = scmp.eq.s32.totalorder %s21, 1
      %p44 = por %p42, %p43
      %p46 = scmp.ne.s32.totalorder %s29, %s45
      %p47 = scmp.eq.s32.totalorder %s21, 0
      %p48 = por %p46, %p47
      %s50 = sadd.s32 %s49, 1
      %p53 = scmp.eq.s32.totalorder %s15, 1
      %p54 = scmp.ne.s32.totalorder %s49, %s51
      %p55 = scmp.eq.s32.totalorder %s15, 0
      %p56 = por %p54, %p55
      %p57 = scmp.ne.s32.totalorder %s49, %s51
      %p58 = scmp.eq.s32.totalorder %s20, 1
      %p59 = por %p57, %p58
      %p60 = scmp.ne.s32.totalorder %s51, %s52
      %p61 = scmp.eq.s32.totalorder %s20, 0
      %p62 = por %p60, %p61
      %p63 = scmp.ne.s32.totalorder %s51, %s52
      %p64 = scmp.eq.s32.totalorder %s21, 1
      %p65 = por %p63, %p64
      %p67 = scmp.ne.s32.totalorder %s52, %s66
      %p68 = scmp.eq.s32.totalorder %s21, 0
      %p69 = por %p67, %p68
      %s71 = sadd.s32 %s70, 1
      %p74 = scmp.eq.s32.totalorder %s15, 1
      %p75 = scmp.ne.s32.totalorder %s70, %s72
      %p76 = scmp.eq.s32.totalorder %s15, 0
      %p77 = por %p75, %p76
      %p78 = scmp.ne.s32.totalorder %s70, %s72
      %p79 = scmp.eq.s32.totalorder %s20, 1
      %p80 = por %p78, %p79
      %p81 = scmp.ne.s32.totalorder %s72, %s73
      %p82 = scmp.eq.s32.totalorder %s20, 0
      %p83 = por %p81, %p82
      %p84 = scmp.ne.s32.totalorder %s72, %s73
      %p85 = scmp.eq.s32.totalorder %s21, 1
      %p86 = por %p84, %p85
      %p88 = scmp.ne.s32.totalorder %s73, %s87
      %p89 = scmp.eq.s32.totalorder %s21, 0
      %p90 = por %p88, %p89
      %s92 = sadd.s32 %s91, 1
      %p95 = scmp.eq.s32.totalorder %s15, 1
      %p96 = scmp.ne.s32.totalorder %s91, %s93
      %p97 = scmp.eq.s32.totalorder %s15, 0
      %p98 = por %p96, %p97
      %p99 = scmp.ne.s32.totalorder %s91, %s93
      %p100 = scmp.eq.s32.totalorder %s20, 1
      %p101 = por %p99, %p100
      %p102 = scmp.ne.s32.totalorder %s93, %s94
      %p103 = scmp.eq.s32.totalorder %s20, 0
      %p104 = por %p102, %p103
      %p105 = scmp.ne.s32.totalorder %s93, %s94
      %p106 = scmp.eq.s32.totalorder %s21, 1
      %p107 = por %p105, %p106
      %p109 = scmp.ne.s32.totalorder %s94, %s108
      %p110 = scmp.eq.s32.totalorder %s21, 0
      %p111 = por %p109, %p110
      %s113 = sadd.s32 %s112, 1
      %p116 = scmp.eq.s32.totalorder %s15, 1
      %p117 = scmp.ne.s32.totalorder %s112, %s114
      %p118 = scmp.eq.s32.totalorder %s15, 0
      %p119 = por %p117, %p118
      %p120 = scmp.ne.s32.totalorder %s112, %s114
      %p121 = scmp.eq.s32.totalorder %s20, 1
      %p122 = por %p120, %p121
      %p123 = scmp.ne.s32.totalorder %s114, %s115
      %p124 = scmp.eq.s32.totalorder %s20, 0
      %p125 = por %p123, %p124
      %p126 = scmp.ne.s32.totalorder %s114, %s115
      %p127 = scmp.eq.s32.totalorder %s21, 1
      %p128 = por %p126, %p127
      %p130 = scmp.ne.s32.totalorder %s115, %s129
      %p131 = scmp.eq.s32.totalorder %s21, 0
      %p132 = por %p130, %p131
      %s134 = sadd.s32 %s133, 1
      %p137 = scmp.eq.s32.totalorder %s15, 1
      %p138 = scmp.ne.s32.totalorder %s133, %s135
      %p139 = scmp.eq.s32.totalorder %s15, 0
      %p140 = por %p138, %p139
      %p141 = scmp.ne.s32.totalorder %s133, %s135
      %p142 = scmp.eq.s32.totalorder %s20, 1
      %p143 = por %p141, %p142
      %p144 = scmp.ne.s32.totalorder %s135, %s136
      %p145 = scmp.eq.s32.totalorder %s20, 0
      %p146 = por %p144, %p145
      %p147 = scmp.ne.s32.totalorder %s135, %s136
      %p148 = scmp.eq.s32.totalorder %s21, 1
      %p149 = por %p147, %p148
      %p151 = scmp.ne.s32.totalorder %s136, %s150
      %p152 = scmp.eq.s32.totalorder %s21, 0
      %p153 = por %p151, %p152
      %s154 = ssub.s32 %s15, %s22
      %p155 = scmp.eq.s32.totalorder %s154, 0
      %s157 = sadd.s32 %s156, 1
      %s158 = scalar_select %p155, %s156, %s157
      %p161 = pneg %p155
      %p162 = scmp.eq.s32.totalorder %s15, 1
      %p163 = por %p161, %p162
      %p164 = scmp.ne.s32.totalorder %s156, %s159
      %p165 = scmp.eq.s32.totalorder %s15, 0
      %p166 = por %p164, %p165
      %p167 = scmp.ne.s32.totalorder %s156, %s159
      %p168 = scmp.eq.s32.totalorder %s20, 1
      %p169 = por %p167, %p168
      %p170 = scmp.ne.s32.totalorder %s159, %s160
      %p171 = scmp.eq.s32.totalorder %s20, 0
      %p172 = por %p170, %p171
      %p173 = scmp.ne.s32.totalorder %s159, %s160
      %p174 = scmp.eq.s32.totalorder %s21, 1
      %p175 = por %p173, %p174
      %p177 = scmp.ne.s32.totalorder %s160, %s176
      %p178 = scmp.eq.s32.totalorder %s21, 0
      %p179 = por %p177, %p178
      %p180 = scmp.le.s32.totalorder 1, %s15
      %p181 = scmp.lt.s32.totalorder %s15, 3
      %p182 = pnand %p180, %p181
      %p183 = pneg %p182
      // Predicated region
      $region9: #{conv_space_time_forward.5} parent=5 // pred_check
        _
      $region10: #{conv_space_time_forward.5} parent=5 // pred_check_branch
        %185 = sbr.rel (%p182) target = $region12
      $region11: #{conv_space_time_forward.5} parent=5 // pred_region
        %s186 = ssub.s32 %s15, 1
        // Predicated region
        $region13: #{conv_space_time_forward.5} parent=11 // pred_check
          %p187 = pneg %p62
        $region14: #{conv_space_time_forward.5} parent=11 // pred_check_branch
          %189 = sbr.rel (%p187) target = $region16
        $region15: #{conv_space_time_forward.5} parent=11 // pred_region
          _
        $region16: #{conv_space_time_forward.5} parent=11 // pred_fallthru
          _
        // Predicated region
        $region17: #{conv_space_time_forward.5} parent=11 // pred_check
          %p190 = pneg %p83
        $region18: #{conv_space_time_forward.5} parent=11 // pred_check_branch
          %192 = sbr.rel (%p190) target = $region20
        $region19: #{conv_space_time_forward.5} parent=11 // pred_region
          _
        $region20: #{conv_space_time_forward.5} parent=11 // pred_fallthru
          _
        // Predicated region
        $region21: #{conv_space_time_forward.5} parent=11 // pred_check
          %p193 = pneg %p104
        $region22: #{conv_space_time_forward.5} parent=11 // pred_check_branch
          %195 = sbr.rel (%p193) target = $region24
        $region23: #{conv_space_time_forward.5} parent=11 // pred_region
          _
        $region24: #{conv_space_time_forward.5} parent=11 // pred_fallthru
          _
        // Predicated region
        $region25: #{conv_space_time_forward.5} parent=11 // pred_check
          %p196 = pneg %p125
        $region26: #{conv_space_time_forward.5} parent=11 // pred_check_branch
          %198 = sbr.rel (%p196) target = $region28
        $region27: #{conv_space_time_forward.5} parent=11 // pred_region
          _
        $region28: #{conv_space_time_forward.5} parent=11 // pred_fallthru
          _
        // Predicated region
        $region29: #{conv_space_time_forward.5} parent=11 // pred_check
          %p199 = pneg %p146
        $region30: #{conv_space_time_forward.5} parent=11 // pred_check_branch
          %201 = sbr.rel (%p199) target = $region32
        $region31: #{conv_space_time_forward.5} parent=11 // pred_region
          _
        $region32: #{conv_space_time_forward.5} parent=11 // pred_fallthru
          _
      $region12: #{conv_space_time_forward.5} parent=5 // pred_fallthru
        _
      %p202 = scmp.lt.s32.totalorder %s15, 2
      // Predicated region
      $region33: #{conv_space_time_forward.5} parent=5 // pred_check
        %p203 = pneg %p202
      $region34: #{conv_space_time_forward.5} parent=5 // pred_check_branch
        %205 = sbr.rel (%p203) target = $region36
      $region35: #{conv_space_time_forward.5} parent=5 // pred_region
        // Predicated region
        $region37: #{conv_space_time_forward.5} parent=35 // pred_check
          %p206 = pneg %p35
        $region38: #{conv_space_time_forward.5} parent=35 // pred_check_branch
          %208 = sbr.rel (%p206) target = $region40
        $region39: #{conv_space_time_forward.5} parent=35 // pred_region
          %p209 = scmp.lt.s32.totalorder %s15, 1
          %s210 = scalar_select %p209, %s15, 1
          %s211 = smul.addr %s210, 5
          %s212 = smul.addr %s211, 4
          %s213 = scalar_lea.vmem %s0, %s212
        $region40: #{conv_space_time_forward.5} parent=35 // pred_fallthru
          _
      $region36: #{conv_space_time_forward.5} parent=5 // pred_fallthru
        _
      %p214 = scmp.le.s32.totalorder 1, %s15
      %p215 = scmp.lt.s32.totalorder %s15, 3
      %p216 = pnand %p214, %p215
      %p217 = pneg %p216
      // Predicated region
      $region41: #{conv_space_time_forward.5} parent=5 // pred_check
        _
      $region42: #{conv_space_time_forward.5} parent=5 // pred_check_branch
        %219 = sbr.rel (%p216) target = $region44
      $region43: #{conv_space_time_forward.5} parent=5 // pred_region
        %s220 = ssub.s32 %s15, 1
        %p221 = scmp.lt.s32.totalorder %s20, 1
        %s222 = scalar_select %p221, %s20, 1
        %s223 = smul.addr %s222, 5
        %s224 = smul.addr %s223, 4
        %s225 = scalar_lea.vmem %s0, %s224
        %p226 = pneg %p41
        %p227 = pneg %p38
        %p228 = pneg %p62
        %p229 = pneg %p59
        %p230 = pneg %p83
        %p231 = pneg %p80
        %p232 = pneg %p104
        %p233 = pneg %p101
        %p234 = pneg %p125
        %p235 = pneg %p122
        %p236 = pneg %p146
        %p237 = pneg %p143
        %p238 = pneg %p172
        %p239 = pneg %p169
        %s240 = sand.u32 %s159, 1
        %s241 = scalar_lea.sflag [#allocation3], %s240
        %s242 = sand.u32 %s159, 1
        %s243 = scalar_lea.vmem [#allocation2], %s242
        %p244 = scmp.lt.s32.totalorder %s20, 1
        %s245 = scalar_select %p244, %s20, 1
        %s246 = smul.addr %s245, 5
        %s247 = smul.addr %s246, 4
        %s248 = scalar_lea.vmem %s0, %s247
        %v249 = vld [vmem:[%s248] sm:$0xf]
        %v250 = vld [vmem:[%s248 + $0x4] sm:$0xf]
        %v251 = vld [vmem:[%s248 + $0x8] sm:$0xf]
        %v252 = vld [vmem:[%s248 + $0xc] sm:$0xf]
        %v253 = vld [vmem:[%s248 + $0x10] sm:$0x3]
        %v254 = vld [vmem:[%s1] sm:$0xf]
        %v255 = vld [vmem:[%s1 + $0x4] sm:$0xf]
        %v256 = vld [vmem:[%s1 + $0x8] sm:$0xf]
        %v257 = vld [vmem:[%s1 + $0xc] sm:$0xf]
        %v258 = vld [vmem:[%s1 + $0x10] sm:$0xf]
        %v259 = vld [vmem:[%s1 + $0x14] sm:$0xf]
        %v260 = vld [vmem:[%s1 + $0x18] sm:$0xf]
        %v261 = vld [vmem:[%s1 + $0x1c] sm:$0xf]
        %v262 = vld [vmem:[%s1 + $0x20] sm:$0xf]
        %v263 = vld [vmem:[%s1 + $0x24] sm:$0xf]
        %v264 = vld [vmem:[%s1 + $0x28] sm:$0xf]
        %v265 = vld [vmem:[%s1 + $0x2c] sm:$0xf]
        %v266 = vld [vmem:[%s1 + $0x30] sm:$0xf]
        %v267 = vld [vmem:[%s1 + $0x34] sm:$0xf]
        %v268 = vld [vmem:[%s1 + $0x38] sm:$0xf]
        %v269 = vld [vmem:[%s1 + $0x3c] sm:$0xf]
        %v270 = vld [vmem:[%s248 + $0x10] sm:$0x7]
        %s271 = scalar_lea.vmem %s1, 64
        %v272 = vld [vmem:[%s271] sm:$0xf]
        %v273 = vld [vmem:[%s271 + $0x4] sm:$0xf]
        %v274 = vld [vmem:[%s271 + $0x8] sm:$0xf]
        %v275 = vld [vmem:[%s271 + $0xc] sm:$0xf]
        %v276 = vld [vmem:[%s271 + $0x10] sm:$0xf]
        %v277 = vld [vmem:[%s271 + $0x14] sm:$0xf]
        %v278 = vld [vmem:[%s271 + $0x18] sm:$0xf]
        %v279 = vld [vmem:[%s271 + $0x1c] sm:$0xf]
        %v280 = vld [vmem:[%s271 + $0x20] sm:$0xf]
        %v281 = vld [vmem:[%s271 + $0x24] sm:$0xf]
        %v282 = vld [vmem:[%s271 + $0x28] sm:$0xf]
        %v283 = vld [vmem:[%s271 + $0x2c] sm:$0xf]
        %v284 = vld [vmem:[%s271 + $0x30] sm:$0xf]
        %v285 = vld [vmem:[%s271 + $0x34] sm:$0xf]
        %v286 = vld [vmem:[%s271 + $0x38] sm:$0xf]
        %v287 = vld [vmem:[%s271 + $0x3c] sm:$0xf]
        %v293 = vunpack.c.l.b16 %v249
        %v294 = vunpack.c.l.b16 %v250
        %v295 = vunpack.c.l.b16 %v251
        %v296 = vunpack.c.l.b16 %v252
        %v297 = vunpack.c.l.b16 %v270
        %v298 = vpack.c.b16 %v294, %v293
        %v299 = vpack.c.b16 %v296, %v295
        %v300 = vpack.c.b16 %v297, %v297
        %vm301 = vsmask.f32 7424
        %v303 = vshrl.u32 %v298, 16
        %v305 = vshll.u32 %v298, 16
        %v307 = vrot.slane %v305, 1
        %v308 = vor.u32 %v303, %v307
        %v310 = vshll.u32 %v299, 16
        %v312 = vrot.slane %v310, 1
        %v313 = vsel %vm301, %v308, %v312
        %v314 = vshrl.u32 %v299, 16
        %v316 = vor.u32 %v314, %v312
        %v318 = vshll.u32 %v300, 16
        %v320 = vrot.slane %v318, 1
        %v321 = vsel %vm301, %v316, %v320
        %v322 = vshrl.u32 %v300, 16
        %v324 = vor.u32 %v322, %v320
        %v344 = vunpack.c.l.b16 %v272
        %v345 = vunpack.c.l.b16 %v273
        %v346 = vunpack.c.l.b16 %v274
        %v347 = vunpack.c.l.b16 %v275
        %v348 = vunpack.c.l.b16 %v276
        %v349 = vunpack.c.l.b16 %v277
        %v350 = vunpack.c.l.b16 %v278
        %v351 = vunpack.c.l.b16 %v279
        %v352 = vunpack.c.l.b16 %v280
        %v353 = vunpack.c.l.b16 %v281
        %v354 = vunpack.c.l.b16 %v282
        %v355 = vunpack.c.l.b16 %v283
        %v356 = vunpack.c.l.b16 %v284
        %v357 = vunpack.c.l.b16 %v285
        %v358 = vunpack.c.l.b16 %v286
        %v359 = vunpack.c.l.b16 %v287
        %v360 = vpack.c.b16 %v345, %v344
        %v361 = vpack.c.b16 %v347, %v346
        %v362 = vpack.c.b16 %v349, %v348
        %v363 = vpack.c.b16 %v351, %v350
        %v364 = vpack.c.b16 %v353, %v352
        %v365 = vpack.c.b16 %v355, %v354
        %v366 = vpack.c.b16 %v357, %v356
        %v367 = vpack.c.b16 %v359, %v358
        %376 = vmatpush.bf16.msra.mxu0 %v367
        %377 = vmatpush.bf16.msra.mxu0 %v366
        %378 = vmatpush.bf16.msra.mxu0 %v365
        %379 = vmatpush.bf16.msra.mxu0 %v364
        %380 = vmatpush.bf16.msra.mxu0 %v363
        %381 = vmatpush.bf16.msra.mxu0 %v362
        %382 = vmatpush.bf16.msra.mxu0 %v361
        %383 = vmatpush.bf16.msra.mxu0 %v360
        %384 = vmatmul.bf16.gmra.mxu0 %v313
        %v385 = vpop.f32.mrf.mxu0
        %v386 = vadd.f32 0.0, %v385
        %v387 = vpop.f32.mrf.mxu0
        %v388 = vadd.f32 0.0, %v387
        %389 = vmatmul.bf16.gmra.mxu0 %v321
        %v390 = vpop.f32.mrf.mxu0
        %v391 = vadd.f32 0.0, %v390
        %v392 = vpop.f32.mrf.mxu0
        %v393 = vadd.f32 0.0, %v392
        %394 = vmatmul.bf16.gmra.mxu0 %v324
        %v395 = vpop.f32.mrf.mxu0
        %v396 = vadd.f32 0.0, %v395
        %v397 = vpop.f32.mrf.mxu0
        %398 = vdwg.mxu0
        %v400 = vunpack.c.l.b16 %v253
        %v401 = vpack.c.b16 %v400, %v400
        %v421 = vunpack.c.l.b16 %v254
        %v422 = vunpack.c.l.b16 %v255
        %v423 = vunpack.c.l.b16 %v256
        %v424 = vunpack.c.l.b16 %v257
        %v425 = vunpack.c.l.b16 %v258
        %v426 = vunpack.c.l.b16 %v259
        %v427 = vunpack.c.l.b16 %v260
        %v428 = vunpack.c.l.b16 %v261
        %v429 = vunpack.c.l.b16 %v262
        %v430 = vunpack.c.l.b16 %v263
        %v431 = vunpack.c.l.b16 %v264
        %v432 = vunpack.c.l.b16 %v265
        %v433 = vunpack.c.l.b16 %v266
        %v434 = vunpack.c.l.b16 %v267
        %v435 = vunpack.c.l.b16 %v268
        %v436 = vunpack.c.l.b16 %v269
        %v437 = vpack.c.b16 %v422, %v421
        %v438 = vpack.c.b16 %v424, %v423
        %v439 = vpack.c.b16 %v426, %v425
        %v440 = vpack.c.b16 %v428, %v427
        %v441 = vpack.c.b16 %v430, %v429
        %v442 = vpack.c.b16 %v432, %v431
        %v443 = vpack.c.b16 %v434, %v433
        %v444 = vpack.c.b16 %v436, %v435
        %453 = vmatpush.bf16.msra.mxu0 %v444
        %454 = vmatpush.bf16.msra.mxu0 %v443
        %455 = vmatpush.bf16.msra.mxu0 %v442
        %456 = vmatpush.bf16.msra.mxu0 %v441
        %457 = vmatpush.bf16.msra.mxu0 %v440
        %458 = vmatpush.bf16.msra.mxu0 %v439
        %459 = vmatpush.bf16.msra.mxu0 %v438
        %460 = vmatpush.bf16.msra.mxu0 %v437
        %461 = vmatmul.bf16.gmra.mxu0 %v298
        %v462 = vpop.f32.mrf.mxu0
        %v463 = vadd.f32 %v386, %v462
        %v464 = vpop.f32.mrf.mxu0
        %v465 = vadd.f32 %v388, %v464
        %466 = vmatmul.bf16.gmra.mxu0 %v299
        %v467 = vpop.f32.mrf.mxu0
        %v468 = vadd.f32 %v391, %v467
        %v469 = vpop.f32.mrf.mxu0
        %v470 = vadd.f32 %v393, %v469
        %471 = vmatmul.bf16.gmra.mxu0 %v401
        %v472 = vpop.f32.mrf.mxu0
        %v473 = vadd.f32 %v396, %v472
        %v474 = vpop.f32.mrf.mxu0
        %475 = vdwg.mxu0
        %v476 = vld [vmem:[%s248] sm:$0xe]
        %v477 = vld [vmem:[%s248 + $0x10] sm:$0xf]
        %s478 = scalar_lea.vmem %s1, 128
        %v479 = vld [vmem:[%s478] sm:$0xf]
        %v480 = vld [vmem:[%s478 + $0x4] sm:$0xf]
        %v481 = vld [vmem:[%s478 + $0x8] sm:$0xf]
        %v482 = vld [vmem:[%s478 + $0xc] sm:$0xf]
        %v483 = vld [vmem:[%s478 + $0x10] sm:$0xf]
        %v484 = vld [vmem:[%s478 + $0x14] sm:$0xf]
        %v485 = vld [vmem:[%s478 + $0x18] sm:$0xf]
        %v486 = vld [vmem:[%s478 + $0x1c] sm:$0xf]
        %v487 = vld [vmem:[%s478 + $0x20] sm:$0xf]
        %v488 = vld [vmem:[%s478 + $0x24] sm:$0xf]
        %v489 = vld [vmem:[%s478 + $0x28] sm:$0xf]
        %v490 = vld [vmem:[%s478 + $0x2c] sm:$0xf]
        %v491 = vld [vmem:[%s478 + $0x30] sm:$0xf]
        %v492 = vld [vmem:[%s478 + $0x34] sm:$0xf]
        %v493 = vld [vmem:[%s478 + $0x38] sm:$0xf]
        %v494 = vld [vmem:[%s478 + $0x3c] sm:$0xf]
        %v497 = vunpack.c.l.b16 %v476
        %v498 = vunpack.c.l.b16 %v477
        %v499 = vpack.c.b16 %v294, %v497
        %v500 = vpack.c.b16 %v498, %v498
        %vm501 = vsmask.f32 6400
        %v503 = vshrl.u32 %v499, 16
        %v505 = vrot.slane %v503, 1
        %v506 = vshll.u32 %v499, 16
        %v508 = vrot.slane %v506, 2
        %v509 = vor.u32 %v505, %v508
        %v510 = vrot.slane %v314, 1
        %v511 = vrot.slane %v310, 2
        %v512 = vor.u32 %v510, %v511
        %v513 = vsel %vm501, %v509, %v512
        %v515 = vshrl.u32 %v500, 16
        %v517 = vrot.slane %v515, 1
        %v518 = vshll.u32 %v500, 16
        %v520 = vrot.slane %v518, 2
        %v521 = vor.u32 %v517, %v520
        %v522 = vsel %vm501, %v512, %v521
        %v542 = vunpack.c.l.b16 %v479
        %v543 = vunpack.c.l.b16 %v480
        %v544 = vunpack.c.l.b16 %v481
        %v545 = vunpack.c.l.b16 %v482
        %v546 = vunpack.c.l.b16 %v483
        %v547 = vunpack.c.l.b16 %v484
        %v548 = vunpack.c.l.b16 %v485
        %v549 = vunpack.c.l.b16 %v486
        %v550 = vunpack.c.l.b16 %v487
        %v551 = vunpack.c.l.b16 %v488
        %v552 = vunpack.c.l.b16 %v489
        %v553 = vunpack.c.l.b16 %v490
        %v554 = vunpack.c.l.b16 %v491
        %v555 = vunpack.c.l.b16 %v492
        %v556 = vunpack.c.l.b16 %v493
        %v557 = vunpack.c.l.b16 %v494
        %v558 = vpack.c.b16 %v543, %v542
        %v559 = vpack.c.b16 %v545, %v544
        %v560 = vpack.c.b16 %v547, %v546
        %v561 = vpack.c.b16 %v549, %v548
        %v562 = vpack.c.b16 %v551, %v550
        %v563 = vpack.c.b16 %v553, %v552
        %v564 = vpack.c.b16 %v555, %v554
        %v565 = vpack.c.b16 %v557, %v556
        %574 = vmatpush.bf16.msra.mxu0 %v565
        %575 = vmatpush.bf16.msra.mxu0 %v564
        %576 = vmatpush.bf16.msra.mxu0 %v563
        %577 = vmatpush.bf16.msra.mxu0 %v562
        %578 = vmatpush.bf16.msra.mxu0 %v561
        %579 = vmatpush.bf16.msra.mxu0 %v560
        %580 = vmatpush.bf16.msra.mxu0 %v559
        %581 = vmatpush.bf16.msra.mxu0 %v558
        %582 = vmatmul.bf16.gmra.mxu0 %v513
        %v583 = vpop.f32.mrf.mxu0
        %v584 = vadd.f32 0.0, %v583
        %v585 = vpop.f32.mrf.mxu0
        %v586 = vadd.f32 0.0, %v585
        %587 = vmatmul.bf16.gmra.mxu0 %v522
        %v588 = vpop.f32.mrf.mxu0
        %v589 = vadd.f32 0.0, %v588
        %v590 = vpop.f32.mrf.mxu0
        %v591 = vadd.f32 0.0, %v590
        %592 = vmatmul.bf16.gmra.mxu0 %v521
        %v593 = vpop.f32.mrf.mxu0
        %v594 = vadd.f32 0.0, %v593
        %v595 = vpop.f32.mrf.mxu0
        %596 = vdwg.mxu0
        %v597 = vadd.f32 %v463, %v584
        %v598 = vadd.f32 %v465, %v586
        %v599 = vadd.f32 %v468, %v589
        %v600 = vadd.f32 %v470, %v591
        %v601 = vadd.f32 %v473, %v594
        %v602 = vld [vmem:[%s248] sm:$0xc]
        %s603 = scalar_lea.vmem %s1, 192
        %v604 = vld [vmem:[%s603] sm:$0xf]
        %v605 = vld [vmem:[%s603 + $0x4] sm:$0xf]
        %v606 = vld [vmem:[%s603 + $0x8] sm:$0xf]
        %v607 = vld [vmem:[%s603 + $0xc] sm:$0xf]
        %v608 = vld [vmem:[%s603 + $0x10] sm:$0xf]
        %v609 = vld [vmem:[%s603 + $0x14] sm:$0xf]
        %v610 = vld [vmem:[%s603 + $0x18] sm:$0xf]
        %v611 = vld [vmem:[%s603 + $0x1c] sm:$0xf]
        %v612 = vld [vmem:[%s603 + $0x20] sm:$0xf]
        %v613 = vld [vmem:[%s603 + $0x24] sm:$0xf]
        %v614 = vld [vmem:[%s603 + $0x28] sm:$0xf]
        %v615 = vld [vmem:[%s603 + $0x2c] sm:$0xf]
        %v616 = vld [vmem:[%s603 + $0x30] sm:$0xf]
        %v617 = vld [vmem:[%s603 + $0x34] sm:$0xf]
        %v618 = vld [vmem:[%s603 + $0x38] sm:$0xf]
        %v619 = vld [vmem:[%s603 + $0x3c] sm:$0xf]
        %v621 = vunpack.c.l.b16 %v602
        %v622 = vpack.c.b16 %v294, %v621
        %vm623 = vcmask 1045504
        %v624 = vrot.slane %v622, 2
        %v625 = vrot.slane %v299, 2
        %v626 = vsel %vm623, %v624, %v625
        %v627 = vrot.slane %v500, 2
        %v628 = vsel %vm623, %v625, %v627
        %v648 = vunpack.c.l.b16 %v604
        %v649 = vunpack.c.l.b16 %v605
        %v650 = vunpack.c.l.b16 %v606
        %v651 = vunpack.c.l.b16 %v607
        %v652 = vunpack.c.l.b16 %v608
        %v653 = vunpack.c.l.b16 %v609
        %v654 = vunpack.c.l.b16 %v610
        %v655 = vunpack.c.l.b16 %v611
        %v656 = vunpack.c.l.b16 %v612
        %v657 = vunpack.c.l.b16 %v613
        %v658 = vunpack.c.l.b16 %v614
        %v659 = vunpack.c.l.b16 %v615
        %v660 = vunpack.c.l.b16 %v616
        %v661 = vunpack.c.l.b16 %v617
        %v662 = vunpack.c.l.b16 %v618
        %v663 = vunpack.c.l.b16 %v619
        %v664 = vpack.c.b16 %v649, %v648
        %v665 = vpack.c.b16 %v651, %v650
        %v666 = vpack.c.b16 %v653, %v652
        %v667 = vpack.c.b16 %v655, %v654
        %v668 = vpack.c.b16 %v657, %v656
        %v669 = vpack.c.b16 %v659, %v658
        %v670 = vpack.c.b16 %v661, %v660
        %v671 = vpack.c.b16 %v663, %v662
        %680 = vmatpush.bf16.msra.mxu0 %v671
        %681 = vmatpush.bf16.msra.mxu0 %v670
        %682 = vmatpush.bf16.msra.mxu0 %v669
        %683 = vmatpush.bf16.msra.mxu0 %v668
        %684 = vmatpush.bf16.msra.mxu0 %v667
        %685 = vmatpush.bf16.msra.mxu0 %v666
        %686 = vmatpush.bf16.msra.mxu0 %v665
        %687 = vmatpush.bf16.msra.mxu0 %v664
        %688 = vmatmul.bf16.gmra.mxu0 %v626
        %v689 = vpop.f32.mrf.mxu0
        %v690 = vadd.f32 0.0, %v689
        %v691 = vpop.f32.mrf.mxu0
        %v692 = vadd.f32 0.0, %v691
        %693 = vmatmul.bf16.gmra.mxu0 %v628
        %v694 = vpop.f32.mrf.mxu0
        %v695 = vadd.f32 0.0, %v694
        %v696 = vpop.f32.mrf.mxu0
        %v697 = vadd.f32 0.0, %v696
        %698 = vmatmul.bf16.gmra.mxu0 %v627
        %v699 = vpop.f32.mrf.mxu0
        %v700 = vadd.f32 0.0, %v699
        %v701 = vpop.f32.mrf.mxu0
        %702 = vdwg.mxu0
        %v703 = vadd.f32 %v597, %v690
        %v704 = vadd.f32 %v598, %v692
        %v705 = vadd.f32 %v599, %v695
        %v706 = vadd.f32 %v600, %v697
        %v707 = vadd.f32 %v601, %v700
        %v708 = vld [vmem:[%s2] sm:$0x1]
        %v710 = vperm.slane %v708, 0
        %v712 = vadd.f32 %v703, %v710
        %v713 = vadd.f32 %v704, %v710
        %v714 = vadd.f32 %v705, %v710
        %v715 = vadd.f32 %v706, %v710
        %v716 = vadd.f32 %v707, %v710
        %v717 = vmax.f32 %v712, 0.0
        %v718 = vmax.f32 %v713, 0.0
        %v719 = vmax.f32 %v714, 0.0
        %v720 = vmax.f32 %v715, 0.0
        %v721 = vmax.f32 %v716, 0.0
        %v722 = vld [vmem:[%s3] sm:$0x1]
        %vm723 = vcmask 293888
        %v725 = vsel %vm723, %v722, 0
        %vm727 = vcmask 1043456
        %v729 = vsel %vm727, %v721, 0
        %731 = vmatpush.msra.mxu0 0.0
        %732 = vmatpush.msra.mxu0 0.0
        %733 = vmatpush.msra.mxu0 0.0
        %734 = vmatpush.msra.mxu0 0.0
        %735 = vmatpush.msra.mxu0 0.0
        %736 = vmatpush.msra.mxu0 0.0
        %737 = vmatpush.msra.mxu0 0.0
        %738 = vmatpush.msra.mxu0 0.0
        %739 = vmatpush.msra.mxu0 0.0
        %740 = vmatpush.msra.mxu0 0.0
        %741 = vmatpush.msra.mxu0 0.0
        %742 = vmatpush.msra.mxu0 %v729
        %743 = vmatpush.msra.mxu0 %v720
        %744 = vmatpush.msra.mxu0 %v719
        %745 = vmatpush.msra.mxu0 %v718
        %746 = vmatpush.msra.mxu0 %v717
        %747 = vmatmul.f32.gmra.mxu0 %v725
        %v748 = vpop.f32.mrf.mxu0
        %v749 = vadd.f32 0.0, %v748
        %750 = vdwg.mxu0
        %v751 = vld [vmem:[%s4] sm:$0xff]
        %v752 = vld [vmem:[%s4 + $0x8] sm:$0xff]
        %v753 = vld [vmem:[%s4 + $0x10] sm:$0xff]
        %v754 = vld [vmem:[%s4 + $0x18] sm:$0xff]
        %v755 = vld [vmem:[%s5] sm:$0x1]
        %vm756 = vcmask 261120
        %v758 = vsel %vm756, %v749, 0
        %760 = vmatpush.msra.mxu0 0.0
        %761 = vmatpush.msra.mxu0 0.0
        %762 = vmatpush.msra.mxu0 0.0
        %763 = vmatpush.msra.mxu0 0.0
        %764 = vmatpush.msra.mxu0 0.0
        %765 = vmatpush.msra.mxu0 0.0
        %766 = vmatpush.msra.mxu0 0.0
        %767 = vmatpush.msra.mxu0 0.0
        %768 = vmatpush.msra.mxu0 0.0
        %769 = vmatpush.msra.mxu0 0.0
        %770 = vmatpush.msra.mxu0 0.0
        %771 = vmatpush.msra.mxu0 0.0
        %772 = vmatpush.msra.mxu0 %v754
        %773 = vmatpush.msra.mxu0 %v753
        %774 = vmatpush.msra.mxu0 %v752
        %775 = vmatpush.msra.mxu0 %v751
        %776 = vmatmul.f32.gmra.mxu0 %v758
        %v777 = vpop.f32.mrf.mxu0
        %v778 = vadd.f32 %v755, %v777
        %779 = vdwg.mxu0
        %vm780 = vcmask 73728
        %781 = vst.msk [vmem:[%s243] sm:$0x1] %vm780, %v778
        %s782 = sand.u32 %s159, 1
        %s783 = scalar_lea.sflag [#allocation3], %s782
        %s784 = sand.u32 %s159, 1
        %s785 = scalar_lea.vmem [#allocation2], %s784
        // Predicated region
        $region45: #{conv_space_time_forward.5} parent=43 // pred_check
          %p786 = pneg %p169
        $region46: #{conv_space_time_forward.5} parent=43 // pred_check_branch
          %788 = sbr.rel (%p786) target = $region48
        $region47: #{conv_space_time_forward.5} parent=43 // pred_region
          %790 = vsyncadd %s783, 0
          %s791 = scalar_lea.hbm %s6, %s20
          %s793 = sshll.u32 %s785, 4
          %s794 = int_to_ptr.vmem [resolvable:$true] %s793
          %s795 = sshll.u32 %s791, 4
          %s796 = int_to_ptr.hbm [resolvable:$true] %s795
          %798 = dma.vmem_to_hbm [thread:$0]  %s794, 16, %s796, %s783
        $region48: #{conv_space_time_forward.5} parent=43 // pred_fallthru
          _
      $region44: #{conv_space_time_forward.5} parent=5 // pred_fallthru
        _
      %p799 = scmp.le.s32.totalorder 2, %s15
      // Predicated region
      $region49: #{conv_space_time_forward.5} parent=5 // pred_check
        %p800 = pneg %p799
      $region50: #{conv_space_time_forward.5} parent=5 // pred_check_branch
        %802 = sbr.rel (%p800) target = $region52
      $region51: #{conv_space_time_forward.5} parent=5 // pred_region
        %s803 = ssub.s32 %s15, 2
        // Predicated region
        $region53: #{conv_space_time_forward.5} parent=51 // pred_check
          %p804 = pneg %p175
        $region54: #{conv_space_time_forward.5} parent=51 // pred_check_branch
          %806 = sbr.rel (%p804) target = $region56
        $region55: #{conv_space_time_forward.5} parent=51 // pred_region
          %s807 = sand.u32 %s160, 1
          %s808 = scalar_lea.sflag [#allocation3], %s807
          %s809 = sand.u32 %s160, 1
          %s810 = scalar_lea.vmem [#allocation2], %s809
          %812 = dma.done %s808, 16
        $region56: #{conv_space_time_forward.5} parent=51 // pred_fallthru
          _
      $region52: #{conv_space_time_forward.5} parent=5 // pred_fallthru
        _
    $region6: #{conv_space_time_forward.5} parent=1 // loop_footer
      %s19 = sadd.s32 1, %s15
    $region7: #{conv_space_time_forward.5} parent=1 // loop_footer_branch
      %14 = sbr.rel target = $region3
    $region8: #{conv_space_time_forward.5} parent=1 // loop_exit
      _
    %813 = vsyncpa [#allocation3], 1
    %s814 = scalar_lea.sflag [#allocation3], 1
    %815 = vsyncpa %s814, 1

</llo_original>
